<compile_context>
chip_gen: v6e
topology: v6e:2x2x1
jax: 0.10.0
libtpu: 0.0.40
codegen_flags: <defaults>
</compile_context>

<pallas_src>
import math
import functools

import jax
import jax.numpy as jnp
from jax.experimental import pallas as pl
from jax.experimental.pallas import tpu as pltpu


# ----------------------------------------------------------------------------
# In-kernel helpers (elementwise, VPU/EUP only)
# ----------------------------------------------------------------------------

def _erf_approx(x):
    # Abramowitz & Stegun 7.1.26 (max abs error ~1.5e-7); exact divide kept so
    # the 2e-4 tolerance vs. the erf reference holds (tanh-GELU would not).
    a1, a2, a3, a4, a5 = (0.254829592, -0.284496736, 1.421413741,
                          -1.453152027, 1.061405429)
    p = 0.3275911
    s = jnp.where(x >= 0.0, 1.0, -1.0)
    ax = jnp.abs(x)
    t = 1.0 / (1.0 + p * ax)
    poly = ((((a5 * t + a4) * t + a3) * t + a2) * t + a1) * t
    return s * (1.0 - poly * jnp.exp(-ax * ax))


def _gelu_exact(x):
    # nn.GELU default: 0.5 * x * (1 + erf(x / sqrt(2)))
    return 0.5 * x * (1.0 + _erf_approx(x * 0.7071067811865475))


def _layernorm_f32(x, g, b):
    mu = jnp.mean(x, axis=-1, keepdims=True)
    var = jnp.mean((x - mu) * (x - mu), axis=-1, keepdims=True)
    return (x - mu) * jax.lax.rsqrt(var + 1e-5) * g + b


_MiB = 1024 * 1024


# ----------------------------------------------------------------------------
# One-time parameter preparation (hoisted out of the forward pass)
# ----------------------------------------------------------------------------

def prepare_params(p, n_heads, dtype=jnp.float32):
    """Concat QKV weights, reshape biases/LN params, build seg/blockmask once."""
    E = p["wq"].shape[0]
    assert E % n_heads == 0
    Dh = E // n_heads
    f32 = jnp.float32
    head_of = jnp.arange(E, dtype=jnp.int32) // Dh
    seg = (head_of[:, None] ==
           jnp.arange(n_heads, dtype=jnp.int32)[None, :]).astype(f32)   # (E, H)
    blockmask = (head_of[:, None] == head_of[None, :]).astype(f32)       # (E, E)
    return {
        "wqkv": jnp.concatenate([p["wq"], p["wk"], p["wv"]], axis=1).astype(dtype),
        "bqkv": jnp.concatenate([p["bq"], p["bk"], p["bv"]]).reshape(1, 3 * E).astype(f32),
        "wo": p["wo"].astype(dtype),
        "bo": p["bo"].reshape(1, E).astype(f32),
        "ln1_g": p["ln1_g"].reshape(1, E).astype(f32),
        "ln1_b": p["ln1_b"].reshape(1, E).astype(f32),
        "ln2_g": p["ln2_g"].reshape(1, E).astype(f32),
        "ln2_b": p["ln2_b"].reshape(1, E).astype(f32),
        "w1": p["w1"].astype(dtype),
        "b1": p["b1"].reshape(1, -1).astype(f32),
        "w2": p["w2"].astype(dtype),
        "b2": p["b2"].reshape(1, E).astype(f32),
        "seg": seg,
        "blockmask": blockmask,
    }


# ----------------------------------------------------------------------------
# Fused attention kernel:  out = x + Wo(flow_attn(sigmoid(QKV(LN1(x)))))
# ----------------------------------------------------------------------------

def _attn_kernel(x_ref, wqkv_ref, bqkv_ref, wo_ref, bo_ref, g_ref, b_ref,
                 seg_ref, mask_ref, o_ref, *, n_heads, bb, L, eps):
    E = x_ref.shape[2]
    M = bb * L          # folded matmul rows
    S = L               # self-attention
    H = n_heads
    f32 = jnp.float32
    mm_dtype = wqkv_ref.dtype

    x2 = x_ref[...].astype(f32).reshape(M, E)                # (M, E)

    # ---- fused LayerNorm (norm1) ----
    h = _layernorm_f32(x2, g_ref[...].astype(f32), b_ref[...].astype(f32))

    # ---- fused QKV projection: one (M,E) x (E,3E) MXU matmul ----
    qkv = jnp.dot(h.astype(mm_dtype), wqkv_ref[...],
                  preferred_element_type=f32)
    qkv = qkv + bqkv_ref[...].astype(f32)                    # (M, 3E)
    q = jax.nn.sigmoid(qkv[:, 0:E])                          # (M, E)
    k = jax.nn.sigmoid(qkv[:, E:2 * E])                      # (M, E)
    v = qkv[:, 2 * E:3 * E]                                  # (M, E)

    seg = seg_ref[...]                                        # (E, H) f32

    def head_sum(a):     # (rows, E) -> (rows, H): per-head lane-segment reduce
        return jnp.dot(a, seg, preferred_element_type=f32)

    def head_bcast(a):   # (rows, H) -> (rows, E): per-head scalar to its lanes
        return jax.lax.dot_general(a, seg, (((1,), (1,)), ((), ())),
                                   preferred_element_type=f32)

    # ---- flow statistics (per-batch reductions on the (bb, L, .) view) ----
    q3 = q.reshape(bb, L, E)
    k3 = k.reshape(bb, L, E)
    qe3 = q3 + eps
    ke3 = k3 + eps
    ksum3 = jnp.sum(k3, axis=1, keepdims=True) + eps          # (bb, 1, E)
    qsum3 = jnp.sum(q3, axis=1, keepdims=True) + eps          # (bb, 1, E)

    # stacked head_sum #1: sink_incoming / source_outgoing in ONE matmul
    stack_a = jnp.concatenate([(qe3 * ksum3).reshape(M, E),
                               (ke3 * qsum3).reshape(M, E)], axis=0)   # (2M, E)
    hs_a = head_sum(stack_a)                                           # (2M, H)
    sink_incoming = 1.0 / hs_a[:M]                                     # (M, H)
    source_outgoing = 1.0 / hs_a[M:]                                   # (M, H)

    # stacked head_bcast #1
    stack_b = jnp.concatenate([sink_incoming, source_outgoing], axis=0)  # (2M,H)
    bc_b = head_bcast(stack_b)                                           # (2M,E)
    si_b3 = bc_b[:M].reshape(bb, L, E)
    so_b3 = bc_b[M:].reshape(bb, L, E)

    kso3 = jnp.sum(k3 * so_b3, axis=1, keepdims=True) + eps   # (bb, 1, E)
    qsi3 = jnp.sum(q3 * si_b3, axis=1, keepdims=True) + eps   # (bb, 1, E)

    # stacked head_sum #2: conserved_sink / conserved_source in ONE matmul
    stack_c = jnp.concatenate([(qe3 * kso3).reshape(M, E),
                               (ke3 * qsi3).reshape(M, E)], axis=0)    # (2M, E)
    hs_c = head_sum(stack_c)                                           # (2M, H)
    conserved_sink = hs_c[:M]                                          # (M, H)
    conserved_source = jnp.clip(hs_c[M:], -1.0, 1.0)                   # (M, H)

    sink_allocation = jax.nn.sigmoid(conserved_sink * (float(L) / float(S)))

    # softmax over the sequence axis, per batch / per head
    cs3 = conserved_source.reshape(bb, L, H)
    mmax = jnp.max(cs3, axis=1, keepdims=True)
    ecs = jnp.exp(cs3 - mmax)
    source_competition = (ecs / jnp.sum(ecs, axis=1, keepdims=True)
                          * float(S)).reshape(M, H)

    # stacked head_bcast #2: q-side scale (sink_incoming*sink_allocation folded,
    # exact because kv is block-diagonal) and the v-side competition scale.
    stack_d = jnp.concatenate([sink_incoming * sink_allocation,
                               source_competition], axis=0)            # (2M, H)
    bc_d = head_bcast(stack_d)                                         # (2M, E)
    q_scale = bc_d[:M]
    comp_b = bc_d[M:]

    qs3 = (q * q_scale).astype(mm_dtype).reshape(bb, L, E)
    vc3 = (v * comp_b).astype(mm_dtype).reshape(bb, L, E)
    k3m = k3.astype(mm_dtype)

    # per-batch kv / qkv2 as lane-dense, block-diagonal E-wide batched matmuls
    kv3 = jax.lax.dot_general(k3m, vc3, (((1,), (1,)), ((0,), (0,))),
                              preferred_element_type=f32)    # (bb, E, E)
    kv3 = kv3 * mask_ref[...]                                # keep same-head blocks
    attn3 = jax.lax.dot_general(qs3, kv3.astype(mm_dtype),
                                (((2,), (1,)), ((0,), (0,))),
                                preferred_element_type=f32)  # (bb, L, E)

    # ---- output projection + residual add (epilogue, folded rows) ----
    out = jnp.dot(attn3.reshape(M, E).astype(mm_dtype), wo_ref[...],
                  preferred_element_type=f32)
    out = out + bo_ref[...].astype(f32)
    o_ref[...] = (x2 + out).astype(o_ref.dtype).reshape(bb, L, E)


def _pick_batch_fold(B, L, E, row_target=256):
    """Largest divisor bb of B folding bb*L rows into the matmul M dimension."""
    if L % 8 != 0:            # folded reshapes would need a relayout
        return 1
    max_rows = 1024                                        # f32 intermediates cap
    max_bb_kv = max(1, (8 * _MiB) // (4 * E * E))          # (bb,E,E) kv scratch cap
    best = 1
    for d in range(1, B + 1):
        if B % d:
            continue
        if d * L > max_rows or d > max_bb_kv:
            break
        best = d
        if d * L >= row_target:
            break
    # keep >=2 grid steps (v7x dual-TC) if the MXU rows stay reasonably full
    if B // best < 2 and best % 2 == 0 and (best // 2) * L >= 128:
        best //= 2
    return best


def attention_block(x, p, n_heads, eps=1e-6):
    """x: [B, L, E]  ->  x + SelfAttn(LN1(x)), fused, bb batch rows per step."""
    B, L, E = x.shape
    assert E % n_heads == 0
    bb = _pick_batch_fold(B, L, E)
    w_it = jnp.dtype(p["wqkv"].dtype).itemsize
    x_it = jnp.dtype(x.dtype).itemsize

    flops = int(2 * B * L * E * 3 * E + 3 * 2 * B * L * E * E
                + 16 * B * L * E * n_heads)
    transcendentals = int(2 * B * L * E + 3 * B * L * n_heads)
    bytes_accessed = int(2 * B * L * E * x_it
                         + (4 * E * E + E * n_heads) * w_it + 4 * E * E)

    est_vmem = int(4 * bb * L * E * x_it
                   + 2 * (4 * E * E + E * n_heads) * w_it + 2 * 4 * E * E
                   + 26 * bb * L * E * 4 + 2 * bb * E * E * 4)
    vmem_limit = int(min(96 * _MiB, max(32 * _MiB, 2 * est_vmem)))

    kernel = functools.partial(_attn_kernel, n_heads=n_heads, bb=bb, L=L, eps=eps)
    return pl.pallas_call(
        kernel,
        out_shape=jax.ShapeDtypeStruct((B, L, E), x.dtype),
        grid=(B // bb,),
        in_specs=[
            pl.BlockSpec((bb, L, E), lambda i: (i, 0, 0)),
            pl.BlockSpec((E, 3 * E), lambda i: (0, 0)),
            pl.BlockSpec((1, 3 * E), lambda i: (0, 0)),
            pl.BlockSpec((E, E), lambda i: (0, 0)),
            pl.BlockSpec((1, E), lambda i: (0, 0)),
            pl.BlockSpec((1, E), lambda i: (0, 0)),
            pl.BlockSpec((1, E), lambda i: (0, 0)),
            pl.BlockSpec((E, n_heads), lambda i: (0, 0)),
            pl.BlockSpec((E, E), lambda i: (0, 0)),
        ],
        out_specs=pl.BlockSpec((bb, L, E), lambda i: (i, 0, 0)),
        compiler_params=pltpu.CompilerParams(
            dimension_semantics=("parallel",),
            vmem_limit_bytes=vmem_limit),
        cost_estimate=pl.CostEstimate(flops=flops,
                                      transcendentals=transcendentals,
                                      bytes_accessed=bytes_accessed),
    )(x, p["wqkv"], p["bqkv"], p["wo"], p["bo"], p["ln1_g"], p["ln1_b"],
      p["seg"], p["blockmask"])


# ----------------------------------------------------------------------------
# Fused FFN kernel:  out = y + W2(gelu(W1(LN2(y))))
# ----------------------------------------------------------------------------

def _ffn_kernel(y_ref, g_ref, b_ref, w1_ref, b1_ref, w2_ref, b2_ref, o_ref):
    f32 = jnp.float32
    yf = y_ref[...].astype(f32)                              # (tl, E)
    h = _layernorm_f32(yf, g_ref[...].astype(f32), b_ref[...].astype(f32))

    mm_dtype = w1_ref.dtype
    f = jnp.dot(h.astype(mm_dtype), w1_ref[...], preferred_element_type=f32)
    f = f + b1_ref[...].astype(f32)                          # (tl, 2E)
    f = _gelu_exact(f)
    out = jnp.dot(f.astype(mm_dtype), w2_ref[...], preferred_element_type=f32)
    out = out + b2_ref[...].astype(f32)
    o_ref[...] = (yf + out).astype(o_ref.dtype)


def ffn_block(y, p):
    """y: [B, L, E]  ->  y + FFN(LN2(y)); rows flattened, fixed 256-row tile."""
    B, L, E = y.shape
    F = p["w1"].shape[1]                                     # 2E
    N = B * L
    tl = N if N <= 256 else 256
    y2 = y.reshape(N, E)

    w_it = jnp.dtype(p["w1"].dtype).itemsize
    y_it = jnp.dtype(y.dtype).itemsize
    flops = int(2 * N * E * F + 2 * N * F * E)
    transcendentals = int(N * F)
    bytes_accessed = int(2 * N * E * y_it + 2 * E * F * w_it)

    est_vmem = int(4 * tl * E * y_it + 2 * 2 * E * F * w_it + 10 * tl * F * 4)
    vmem_limit = int(min(96 * _MiB, max(32 * _MiB, 2 * est_vmem)))

    out2 = pl.pallas_call(
        _ffn_kernel,
        out_shape=jax.ShapeDtypeStruct((N, E), y.dtype),
        grid=(pl.cdiv(N, tl),),
        in_specs=[
            pl.BlockSpec((tl, E), lambda i: (i, 0)),
            pl.BlockSpec((1, E), lambda i: (0, 0)),
            pl.BlockSpec((1, E), lambda i: (0, 0)),
            pl.BlockSpec((E, F), lambda i: (0, 0)),
            pl.BlockSpec((1, F), lambda i: (0, 0)),
            pl.BlockSpec((F, E), lambda i: (0, 0)),
            pl.BlockSpec((1, E), lambda i: (0, 0)),
        ],
        out_specs=pl.BlockSpec((tl, E), lambda i: (i, 0)),
        compiler_params=pltpu.CompilerParams(
            dimension_semantics=("parallel",),
            vmem_limit_bytes=vmem_limit),
        cost_estimate=pl.CostEstimate(flops=flops,
                                      transcendentals=transcendentals,
                                      bytes_accessed=bytes_accessed),
    )(y2, p["ln2_g"], p["ln2_b"], p["w1"], p["b1"], p["w2"], p["b2"])
    return out2.reshape(B, L, E)


# ----------------------------------------------------------------------------
# Layer (norm_first=True): only kernel calls, no activation-sized JAX glue
# ----------------------------------------------------------------------------

def flowformer_layer(x, prep, n_heads):
    """prep = prepare_params(raw_params, n_heads, dtype) done once, outside."""
    x = attention_block(x, prep, n_heads)     # x + SA(LN1(x))
    x = ffn_block(x, prep)                    # x + FFN(LN2(x))
    return x, None


# ----------------------------------------------------------------------------
# Pure-JAX reference (mirrors the PyTorch module, eval mode)
# ----------------------------------------------------------------------------

_P_HI = jax.lax.Precision.HIGHEST


def _ref_layernorm(x, g, b):
    mu = jnp.mean(x, axis=-1, keepdims=True)
    var = jnp.mean((x - mu) ** 2, axis=-1, keepdims=True)
    return (x - mu) / jnp.sqrt(var + 1e-5) * g + b


def _ref_flow_attention(x, p, n_heads):
    eps = 1e-6
    B, L, E = x.shape
    Dh = E // n_heads

    def proj(w, b):
        y = jnp.dot(x, w, precision=_P_HI) + b
        return y.reshape(B, L, n_heads, Dh).transpose(0, 2, 1, 3)

    q = jax.nn.sigmoid(proj(p["wq"], p["bq"]))
    k = jax.nn.sigmoid(proj(p["wk"], p["bk"]))
    v = proj(p["wv"], p["bv"])
    sink_incoming = 1.0 / jnp.einsum("nhld,nhd->nhl", q + eps, k.sum(axis=2) + eps,
                                     precision=_P_HI)
    source_outgoing = 1.0 / jnp.einsum("nhld,nhd->nhl", k + eps, q.sum(axis=2) + eps,
                                       precision=_P_HI)
    conserved_sink = jnp.einsum("nhld,nhd->nhl", q + eps,
                                (k * source_outgoing[..., None]).sum(axis=2) + eps,
                                precision=_P_HI)
    conserved_source = jnp.einsum("nhld,nhd->nhl", k + eps,
                                  (q * sink_incoming[..., None]).sum(axis=2) + eps,
                                  precision=_P_HI)
    conserved_source = jnp.clip(conserved_source, -1.0, 1.0)
    sink_allocation = jax.nn.sigmoid(conserved_sink * (float(L) / float(L)))
    source_competition = jax.nn.softmax(conserved_source, axis=-1) * float(L)
    kv = jnp.einsum("nhld,nhlm->nhdm", k, v * source_competition[..., None],
                    precision=_P_HI)
    qkv = jnp.einsum("nhld,nhdm->nhlm", q * sink_incoming[..., None], kv,
                     precision=_P_HI)
    out = (qkv * sink_allocation[..., None]).transpose(0, 2, 1, 3).reshape(B, L, E)
    return jnp.dot(out, p["wo"], precision=_P_HI) + p["bo"]


def _ref_layer(x, p, n_heads):
    h = _ref_layernorm(x, p["ln1_g"], p["ln1_b"])
    x = x + _ref_flow_attention(h, p, n_heads)
    h = _ref_layernorm(x, p["ln2_g"], p["ln2_b"])
    ff = jnp.dot(h, p["w1"], precision=_P_HI) + p["b1"]
    ff = 0.5 * ff * (1.0 + jax.lax.erf(ff / jnp.sqrt(2.0)))
    ff = jnp.dot(ff, p["w2"], precision=_P_HI) + p["b2"]
    return x + ff


# ----------------------------------------------------------------------------
# Deterministic parameter init (PyTorch nn.Linear-style uniform bounds)
# ----------------------------------------------------------------------------

def init_params(key, embed_dim):
    def lin(k, din, dout):
        k1, k2 = jax.random.split(k)
        bound = 1.0 / math.sqrt(din)
        w = jax.random.uniform(k1, (din, dout), jnp.float32, -bound, bound)
        b = jax.random.uniform(k2, (dout,), jnp.float32, -bound, bound)
        return w, b

    ks = jax.random.split(key, 6)
    wq, bq = lin(ks[0], embed_dim, embed_dim)
    wk, bk = lin(ks[1], embed_dim, embed_dim)
    wv, bv = lin(ks[2], embed_dim, embed_dim)
    wo, bo = lin(ks[3], embed_dim, embed_dim)
    w1, b1 = lin(ks[4], embed_dim, embed_dim * 2)
    w2, b2 = lin(ks[5], embed_dim * 2, embed_dim)
    return {
        "wq": wq, "bq": bq, "wk": wk, "bk": bk, "wv": wv, "bv": bv,
        "wo": wo, "bo": bo, "w1": w1, "b1": b1, "w2": w2, "b2": b2,
        "ln1_g": jnp.ones((embed_dim,), jnp.float32),
        "ln1_b": jnp.zeros((embed_dim,), jnp.float32),
        "ln2_g": jnp.ones((embed_dim,), jnp.float32),
        "ln2_b": jnp.zeros((embed_dim,), jnp.float32),
    }


if __name__ == "__main__":
    # embed_dim multiple of 128 keeps the fused q/k/v lane slices vreg-aligned.
    B, L, E, H = 2, 16, 128, 4
    key = jax.random.PRNGKey(0)
    kx, kp = jax.random.split(key)
    x = jax.random.normal(kx, (B, L, E), jnp.float32)
    params = init_params(kp, E)

    # f32 path: exactness check against the HIGHEST-precision reference.
    prep32 = prepare_params(params, H, dtype=jnp.float32)
    fwd = jax.jit(functools.partial(flowformer_layer, n_heads=H))
    out, attn = fwd(x, prep32)
    out = jax.block_until_ready(out)

    ref = _ref_layer(x, params, H)
    assert out.shape == (B, L, E)
    assert attn is None
    max_diff = float(jnp.max(jnp.abs(out - ref)))
    assert jnp.allclose(out, ref, atol=2e-4, rtol=2e-4), (
        f"max abs diff = {max_diff}")

    # bf16 fast path (full-rate MXU; statistics still f32) — smoke test only.
    prep16 = prepare_params(params, H, dtype=jnp.bfloat16)
    out16, _ = fwd(x.astype(jnp.bfloat16), prep16)
    out16 = jax.block_until_ready(out16)
    assert out16.shape == (B, L, E)
    assert bool(jnp.all(jnp.isfinite(out16.astype(jnp.float32))))

    print("KERNEL_OK")
</pallas_src>

<mosaic_0001>
module attributes {stable_mosaic.version = 11 : i64} {
  func.func @_ffn_kernel(%arg0: i32, %arg1: memref<32x128xf32, #tpu.memory_space<vmem>>, %arg2: memref<1x128xf32, #tpu.memory_space<vmem>>, %arg3: memref<1x128xf32, #tpu.memory_space<vmem>>, %arg4: memref<128x256xf32, #tpu.memory_space<vmem>>, %arg5: memref<1x256xf32, #tpu.memory_space<vmem>>, %arg6: memref<256x128xf32, #tpu.memory_space<vmem>>, %arg7: memref<1x128xf32, #tpu.memory_space<vmem>>, %arg8: memref<32x128xf32, #tpu.memory_space<vmem>>) attributes {dimension_semantics = [#tpu.dimension_semantics<parallel>], iteration_bounds = array<i64: 1>, scalar_prefetch = 0 : i64, scratch_operands = 0 : i64, tpu.core_type = #tpu.core_type<tc>, window_params = [{transform_indices = @transform_0, window_bounds = array<i64: 32, 128>}, {pipeline_mode = #tpu.pipeline_mode<synchronous>, transform_indices = @transform_1, window_bounds = array<i64: 1, 128>}, {pipeline_mode = #tpu.pipeline_mode<synchronous>, transform_indices = @transform_2, window_bounds = array<i64: 1, 128>}, {pipeline_mode = #tpu.pipeline_mode<synchronous>, transform_indices = @transform_3, window_bounds = array<i64: 128, 256>}, {pipeline_mode = #tpu.pipeline_mode<synchronous>, transform_indices = @transform_4, window_bounds = array<i64: 1, 256>}, {pipeline_mode = #tpu.pipeline_mode<synchronous>, transform_indices = @transform_5, window_bounds = array<i64: 256, 128>}, {pipeline_mode = #tpu.pipeline_mode<synchronous>, transform_indices = @transform_6, window_bounds = array<i64: 1, 128>}, {transform_indices = @transform_7, window_bounds = array<i64: 32, 128>}]} {
    %c0 = arith.constant 0 : index
    %c0_0 = arith.constant 0 : index
    %0 = vector.load %arg1[%c0, %c0_0] : memref<32x128xf32, #tpu.memory_space<vmem>>, vector<32x128xf32>
    %c0_1 = arith.constant 0 : index
    %c0_2 = arith.constant 0 : index
    %1 = vector.load %arg2[%c0_1, %c0_2] : memref<1x128xf32, #tpu.memory_space<vmem>>, vector<1x128xf32>
    %c0_3 = arith.constant 0 : index
    %c0_4 = arith.constant 0 : index
    %2 = vector.load %arg3[%c0_3, %c0_4] : memref<1x128xf32, #tpu.memory_space<vmem>>, vector<1x128xf32>
    %cst = arith.constant dense<0.000000e+00> : vector<32xf32>
    %3 = vector.multi_reduction <add>, %0, %cst [1] : vector<32x128xf32> to vector<32xf32>
    %4 = vector.shape_cast %3 : vector<32xf32> to vector<32x1xf32>
    %cst_5 = arith.constant 1.280000e+02 : f32
    %5 = vector.broadcast %cst_5 : f32 to vector<32x1xf32>
    %6 = arith.divf %4, %5 : vector<32x1xf32>
    %7 = vector.broadcast %6 : vector<32x1xf32> to vector<32x128xf32>
    %8 = arith.subf %0, %7 : vector<32x128xf32>
    %9 = vector.broadcast %6 : vector<32x1xf32> to vector<32x128xf32>
    %10 = arith.subf %0, %9 : vector<32x128xf32>
    %11 = arith.mulf %8, %10 : vector<32x128xf32>
    %cst_6 = arith.constant dense<0.000000e+00> : vector<32xf32>
    %12 = vector.multi_reduction <add>, %11, %cst_6 [1] : vector<32x128xf32> to vector<32xf32>
    %13 = vector.shape_cast %12 : vector<32xf32> to vector<32x1xf32>
    %cst_7 = arith.constant 1.280000e+02 : f32
    %14 = vector.broadcast %cst_7 : f32 to vector<32x1xf32>
    %15 = arith.divf %13, %14 : vector<32x1xf32>
    %16 = vector.broadcast %6 : vector<32x1xf32> to vector<32x128xf32>
    %17 = arith.subf %0, %16 : vector<32x128xf32>
    %cst_8 = arith.constant 9.99999974E-6 : f32
    %18 = vector.broadcast %cst_8 : f32 to vector<32x1xf32>
    %19 = arith.addf %15, %18 : vector<32x1xf32>
    %20 = math.rsqrt %19 : vector<32x1xf32>
    %21 = vector.broadcast %20 : vector<32x1xf32> to vector<32x128xf32>
    %22 = arith.mulf %17, %21 : vector<32x128xf32>
    %23 = vector.broadcast %1 : vector<1x128xf32> to vector<32x128xf32>
    %24 = arith.mulf %22, %23 : vector<32x128xf32>
    %25 = vector.broadcast %2 : vector<1x128xf32> to vector<32x128xf32>
    %26 = arith.addf %24, %25 : vector<32x128xf32>
    %c0_9 = arith.constant 0 : index
    %c0_10 = arith.constant 0 : index
    %27 = vector.load %arg4[%c0_9, %c0_10] : memref<128x256xf32, #tpu.memory_space<vmem>>, vector<128x256xf32>
    %cst_11 = arith.constant dense<0.000000e+00> : vector<32x256xf32>
    %28 = tpu.matmul %26, %27, %cst_11 {dimension_numbers = #tpu.dot_dimension_numbers<[1], [0], [0], [1], [0, 0, 1, 1], [], []>} : vector<32x128xf32>, vector<128x256xf32>, vector<32x256xf32> -> vector<32x256xf32>
    %c0_12 = arith.constant 0 : index
    %c0_13 = arith.constant 0 : index
    %29 = vector.load %arg5[%c0_12, %c0_13] : memref<1x256xf32, #tpu.memory_space<vmem>>, vector<1x256xf32>
    %30 = vector.broadcast %29 : vector<1x256xf32> to vector<32x256xf32>
    %31 = arith.addf %28, %30 : vector<32x256xf32>
    %cst_14 = arith.constant 5.000000e-01 : f32
    %32 = vector.broadcast %cst_14 : f32 to vector<32x256xf32>
    %33 = arith.mulf %32, %31 : vector<32x256xf32>
    %cst_15 = arith.constant 0.707106769 : f32
    %34 = vector.broadcast %cst_15 : f32 to vector<32x256xf32>
    %35 = arith.mulf %31, %34 : vector<32x256xf32>
    %cst_16 = arith.constant 0.000000e+00 : f32
    %36 = vector.broadcast %cst_16 : f32 to vector<32x256xf32>
    %37 = arith.cmpf oge, %35, %36 : vector<32x256xf32>
    %cst_17 = arith.constant 1.000000e+00 : f32
    %cst_18 = arith.constant -1.000000e+00 : f32
    %38 = vector.broadcast %cst_17 : f32 to vector<32x256xf32>
    %39 = vector.broadcast %cst_18 : f32 to vector<32x256xf32>
    %40 = arith.select %37, %38, %39 : vector<32x256xi1>, vector<32x256xf32>
    %41 = math.absf %35 : vector<32x256xf32>
    %cst_19 = arith.constant 0.327591091 : f32
    %42 = vector.broadcast %cst_19 : f32 to vector<32x256xf32>
    %43 = arith.mulf %42, %41 : vector<32x256xf32>
    %cst_20 = arith.constant 1.000000e+00 : f32
    %44 = vector.broadcast %cst_20 : f32 to vector<32x256xf32>
    %45 = arith.addf %44, %43 : vector<32x256xf32>
    %cst_21 = arith.constant 1.000000e+00 : f32
    %46 = vector.broadcast %cst_21 : f32 to vector<32x256xf32>
    %47 = arith.divf %46, %45 : vector<32x256xf32>
    %cst_22 = arith.constant 1.06140542 : f32
    %48 = vector.broadcast %cst_22 : f32 to vector<32x256xf32>
    %49 = arith.mulf %48, %47 : vector<32x256xf32>
    %cst_23 = arith.constant -1.45315206 : f32
    %50 = vector.broadcast %cst_23 : f32 to vector<32x256xf32>
    %51 = arith.addf %49, %50 : vector<32x256xf32>
    %52 = arith.mulf %51, %47 : vector<32x256xf32>
    %cst_24 = arith.constant 1.42141378 : f32
    %53 = vector.broadcast %cst_24 : f32 to vector<32x256xf32>
    %54 = arith.addf %52, %53 : vector<32x256xf32>
    %55 = arith.mulf %54, %47 : vector<32x256xf32>
    %cst_25 = arith.constant -0.284496725 : f32
    %56 = vector.broadcast %cst_25 : f32 to vector<32x256xf32>
    %57 = arith.addf %55, %56 : vector<32x256xf32>
    %58 = arith.mulf %57, %47 : vector<32x256xf32>
    %cst_26 = arith.constant 0.254829586 : f32
    %59 = vector.broadcast %cst_26 : f32 to vector<32x256xf32>
    %60 = arith.addf %58, %59 : vector<32x256xf32>
    %61 = arith.mulf %60, %47 : vector<32x256xf32>
    %cst_27 = arith.constant 0.000000e+00 : f32
    %62 = vector.broadcast %cst_27 : f32 to vector<32x256xf32>
    %63 = arith.subf %62, %41 : vector<32x256xf32>
    %64 = arith.mulf %63, %41 : vector<32x256xf32>
    %65 = math.exp %64 : vector<32x256xf32>
    %66 = arith.mulf %61, %65 : vector<32x256xf32>
    %cst_28 = arith.constant 1.000000e+00 : f32
    %67 = vector.broadcast %cst_28 : f32 to vector<32x256xf32>
    %68 = arith.subf %67, %66 : vector<32x256xf32>
    %69 = arith.mulf %40, %68 : vector<32x256xf32>
    %cst_29 = arith.constant 1.000000e+00 : f32
    %70 = vector.broadcast %cst_29 : f32 to vector<32x256xf32>
    %71 = arith.addf %70, %69 : vector<32x256xf32>
    %72 = arith.mulf %33, %71 : vector<32x256xf32>
    %c0_30 = arith.constant 0 : index
    %c0_31 = arith.constant 0 : index
    %73 = vector.load %arg6[%c0_30, %c0_31] : memref<256x128xf32, #tpu.memory_space<vmem>>, vector<256x128xf32>
    %cst_32 = arith.constant dense<0.000000e+00> : vector<32x128xf32>
    %74 = tpu.matmul %72, %73, %cst_32 {dimension_numbers = #tpu.dot_dimension_numbers<[1], [0], [0], [1], [0, 0, 1, 1], [], []>} : vector<32x256xf32>, vector<256x128xf32>, vector<32x128xf32> -> vector<32x128xf32>
    %c0_33 = arith.constant 0 : index
    %c0_34 = arith.constant 0 : index
    %75 = vector.load %arg7[%c0_33, %c0_34] : memref<1x128xf32, #tpu.memory_space<vmem>>, vector<1x128xf32>
    %76 = vector.broadcast %75 : vector<1x128xf32> to vector<32x128xf32>
    %77 = arith.addf %74, %76 : vector<32x128xf32>
    %78 = arith.addf %0, %77 : vector<32x128xf32>
    %c0_35 = arith.constant 0 : index
    %c0_36 = arith.constant 0 : index
    %79 = vector.load %arg8[%c0_35, %c0_36] : memref<32x128xf32, #tpu.memory_space<vmem>>, vector<32x128xf32>
    tpu.vector_store %arg8[%c0_35, %c0_36], %78 {strides = array<i32>} : memref<32x128xf32, #tpu.memory_space<vmem>>, vector<32x128xf32>,
    return
  }
  func.func @transform_0(%arg0: i32) -> (i32, i32) {
    %c0_i32 = arith.constant 0 : i32
    %c0_i32_0 = arith.constant 0 : i32
    return %arg0, %c0_i32 : i32, i32
  }
  func.func @transform_1(%arg0: i32) -> (i32, i32) {
    %c0_i32 = arith.constant 0 : i32
    %c0_i32_0 = arith.constant 0 : i32
    %c0_i32_1 = arith.constant 0 : i32
    return %c0_i32, %c0_i32_0 : i32, i32
  }
  func.func @transform_2(%arg0: i32) -> (i32, i32) {
    %c0_i32 = arith.constant 0 : i32
    %c0_i32_0 = arith.constant 0 : i32
    %c0_i32_1 = arith.constant 0 : i32
    return %c0_i32, %c0_i32_0 : i32, i32
  }
  func.func @transform_3(%arg0: i32) -> (i32, i32) {
    %c0_i32 = arith.constant 0 : i32
    %c0_i32_0 = arith.constant 0 : i32
    %c0_i32_1 = arith.constant 0 : i32
    return %c0_i32, %c0_i32_0 : i32, i32
  }
  func.func @transform_4(%arg0: i32) -> (i32, i32) {
    %c0_i32 = arith.constant 0 : i32
    %c0_i32_0 = arith.constant 0 : i32
    %c0_i32_1 = arith.constant 0 : i32
    return %c0_i32, %c0_i32_0 : i32, i32
  }
  func.func @transform_5(%arg0: i32) -> (i32, i32) {
    %c0_i32 = arith.constant 0 : i32
    %c0_i32_0 = arith.constant 0 : i32
    %c0_i32_1 = arith.constant 0 : i32
    return %c0_i32, %c0_i32_0 : i32, i32
  }
  func.func @transform_6(%arg0: i32) -> (i32, i32) {
    %c0_i32 = arith.constant 0 : i32
    %c0_i32_0 = arith.constant 0 : i32
    %c0_i32_1 = arith.constant 0 : i32
    return %c0_i32, %c0_i32_0 : i32, i32
  }
  func.func @transform_7(%arg0: i32) -> (i32, i32) {
    %c0_i32 = arith.constant 0 : i32
    %c0_i32_0 = arith.constant 0 : i32
    return %arg0, %c0_i32 : i32, i32
  }
}

module attributes {stable_mosaic.version = 11 : i64} {
  func.func @_attn_kernel(%arg0: i32, %arg1: memref<2x16x128xf32, #tpu.memory_space<vmem>>, %arg2: memref<128x384xf32, #tpu.memory_space<vmem>>, %arg3: memref<1x384xf32, #tpu.memory_space<vmem>>, %arg4: memref<128x128xf32, #tpu.memory_space<vmem>>, %arg5: memref<1x128xf32, #tpu.memory_space<vmem>>, %arg6: memref<1x128xf32, #tpu.memory_space<vmem>>, %arg7: memref<1x128xf32, #tpu.memory_space<vmem>>, %arg8: memref<128x4xf32, #tpu.memory_space<vmem>>, %arg9: memref<128x128xf32, #tpu.memory_space<vmem>>, %arg10: memref<2x16x128xf32, #tpu.memory_space<vmem>>) attributes {dimension_semantics = [#tpu.dimension_semantics<parallel>], iteration_bounds = array<i64: 1>, scalar_prefetch = 0 : i64, scratch_operands = 0 : i64, tpu.core_type = #tpu.core_type<tc>, window_params = [{transform_indices = @transform_0, window_bounds = array<i64: 2, 16, 128>}, {pipeline_mode = #tpu.pipeline_mode<synchronous>, transform_indices = @transform_1, window_bounds = array<i64: 128, 384>}, {pipeline_mode = #tpu.pipeline_mode<synchronous>, transform_indices = @transform_2, window_bounds = array<i64: 1, 384>}, {pipeline_mode = #tpu.pipeline_mode<synchronous>, transform_indices = @transform_3, window_bounds = array<i64: 128, 128>}, {pipeline_mode = #tpu.pipeline_mode<synchronous>, transform_indices = @transform_4, window_bounds = array<i64: 1, 128>}, {pipeline_mode = #tpu.pipeline_mode<synchronous>, transform_indices = @transform_5, window_bounds = array<i64: 1, 128>}, {pipeline_mode = #tpu.pipeline_mode<synchronous>, transform_indices = @transform_6, window_bounds = array<i64: 1, 128>}, {pipeline_mode = #tpu.pipeline_mode<synchronous>, transform_indices = @transform_7, window_bounds = array<i64: 128, 4>}, {pipeline_mode = #tpu.pipeline_mode<synchronous>, transform_indices = @transform_8, window_bounds = array<i64: 128, 128>}, {transform_indices = @transform_9, window_bounds = array<i64: 2, 16, 128>}]} {
    %c0 = arith.constant 0 : index
    %c0_0 = arith.constant 0 : index
    %c0_1 = arith.constant 0 : index
    %0 = vector.load %arg1[%c0, %c0_0, %c0_1] : memref<2x16x128xf32, #tpu.memory_space<vmem>>, vector<2x16x128xf32>
    %1 = vector.shape_cast %0 : vector<2x16x128xf32> to vector<32x128xf32>
    %c0_2 = arith.constant 0 : index
    %c0_3 = arith.constant 0 : index
    %2 = vector.load %arg6[%c0_2, %c0_3] : memref<1x128xf32, #tpu.memory_space<vmem>>, vector<1x128xf32>
    %c0_4 = arith.constant 0 : index
    %c0_5 = arith.constant 0 : index
    %3 = vector.load %arg7[%c0_4, %c0_5] : memref<1x128xf32, #tpu.memory_space<vmem>>, vector<1x128xf32>
    %cst = arith.constant dense<0.000000e+00> : vector<32xf32>
    %4 = vector.multi_reduction <add>, %1, %cst [1] : vector<32x128xf32> to vector<32xf32>
    %5 = vector.shape_cast %4 : vector<32xf32> to vector<32x1xf32>
    %cst_6 = arith.constant 1.280000e+02 : f32
    %6 = vector.broadcast %cst_6 : f32 to vector<32x1xf32>
    %7 = arith.divf %5, %6 : vector<32x1xf32>
    %8 = vector.broadcast %7 : vector<32x1xf32> to vector<32x128xf32>
    %9 = arith.subf %1, %8 : vector<32x128xf32>
    %10 = vector.broadcast %7 : vector<32x1xf32> to vector<32x128xf32>
    %11 = arith.subf %1, %10 : vector<32x128xf32>
    %12 = arith.mulf %9, %11 : vector<32x128xf32>
    %cst_7 = arith.constant dense<0.000000e+00> : vector<32xf32>
    %13 = vector.multi_reduction <add>, %12, %cst_7 [1] : vector<32x128xf32> to vector<32xf32>
    %14 = vector.shape_cast %13 : vector<32xf32> to vector<32x1xf32>
    %cst_8 = arith.constant 1.280000e+02 : f32
    %15 = vector.broadcast %cst_8 : f32 to vector<32x1xf32>
    %16 = arith.divf %14, %15 : vector<32x1xf32>
    %17 = vector.broadcast %7 : vector<32x1xf32> to vector<32x128xf32>
    %18 = arith.subf %1, %17 : vector<32x128xf32>
    %cst_9 = arith.constant 9.99999974E-6 : f32
    %19 = vector.broadcast %cst_9 : f32 to vector<32x1xf32>
    %20 = arith.addf %16, %19 : vector<32x1xf32>
    %21 = math.rsqrt %20 : vector<32x1xf32>
    %22 = vector.broadcast %21 : vector<32x1xf32> to vector<32x128xf32>
    %23 = arith.mulf %18, %22 : vector<32x128xf32>
    %24 = vector.broadcast %2 : vector<1x128xf32> to vector<32x128xf32>
    %25 = arith.mulf %23, %24 : vector<32x128xf32>
    %26 = vector.broadcast %3 : vector<1x128xf32> to vector<32x128xf32>
    %27 = arith.addf %25, %26 : vector<32x128xf32>
    %c0_10 = arith.constant 0 : index
    %c0_11 = arith.constant 0 : index
    %28 = vector.load %arg2[%c0_10, %c0_11] : memref<128x384xf32, #tpu.memory_space<vmem>>, vector<128x384xf32>
    %cst_12 = arith.constant dense<0.000000e+00> : vector<32x384xf32>
    %29 = tpu.matmul %27, %28, %cst_12 {dimension_numbers = #tpu.dot_dimension_numbers<[1], [0], [0], [1], [0, 0, 1, 1], [], []>} : vector<32x128xf32>, vector<128x384xf32>, vector<32x384xf32> -> vector<32x384xf32>
    %c0_13 = arith.constant 0 : index
    %c0_14 = arith.constant 0 : index
    %30 = vector.load %arg3[%c0_13, %c0_14] : memref<1x384xf32, #tpu.memory_space<vmem>>, vector<1x384xf32>
    %31 = vector.broadcast %30 : vector<1x384xf32> to vector<32x384xf32>
    %32 = arith.addf %29, %31 : vector<32x384xf32>
    %33 = vector.extract_strided_slice %32 {offsets = [0, 0], sizes = [32, 128], strides = [1, 1]} : vector<32x384xf32> to vector<32x128xf32>
    %34 = arith.negf %33 : vector<32x128xf32>
    %35 = math.exp %34 : vector<32x128xf32>
    %cst_15 = arith.constant 1.000000e+00 : f32
    %36 = vector.broadcast %cst_15 : f32 to vector<32x128xf32>
    %37 = arith.addf %36, %35 : vector<32x128xf32>
    %38 = arith.divf %36, %37 : vector<32x128xf32>
    %39 = vector.extract_strided_slice %32 {offsets = [0, 128], sizes = [32, 128], strides = [1, 1]} : vector<32x384xf32> to vector<32x128xf32>
    %40 = arith.negf %39 : vector<32x128xf32>
    %41 = math.exp %40 : vector<32x128xf32>
    %cst_16 = arith.constant 1.000000e+00 : f32
    %42 = vector.broadcast %cst_16 : f32 to vector<32x128xf32>
    %43 = arith.addf %42, %41 : vector<32x128xf32>
    %44 = arith.divf %42, %43 : vector<32x128xf32>
    %45 = vector.extract_strided_slice %32 {offsets = [0, 256], sizes = [32, 128], strides = [1, 1]} : vector<32x384xf32> to vector<32x128xf32>
    %c0_17 = arith.constant 0 : index
    %c0_18 = arith.constant 0 : index
    %46 = vector.load %arg8[%c0_17, %c0_18] : memref<128x4xf32, #tpu.memory_space<vmem>>, vector<128x4xf32>
    %47 = vector.shape_cast %38 : vector<32x128xf32> to vector<2x16x128xf32>
    %48 = vector.shape_cast %44 : vector<32x128xf32> to vector<2x16x128xf32>
    %cst_19 = arith.constant 9.99999997E-7 : f32
    %49 = vector.broadcast %cst_19 : f32 to vector<2x16x128xf32>
    %50 = arith.addf %47, %49 : vector<2x16x128xf32>
    %cst_20 = arith.constant 9.99999997E-7 : f32
    %51 = vector.broadcast %cst_20 : f32 to vector<2x16x128xf32>
    %52 = arith.addf %48, %51 : vector<2x16x128xf32>
    %cst_21 = arith.constant dense<0.000000e+00> : vector<2x128xf32>
    %53 = vector.multi_reduction <add>, %48, %cst_21 [1] : vector<2x16x128xf32> to vector<2x128xf32>
    %54 = vector.shape_cast %53 : vector<2x128xf32> to vector<2x1x128xf32>
    %cst_22 = arith.constant 9.99999997E-7 : f32
    %55 = vector.broadcast %cst_22 : f32 to vector<2x1x128xf32>
    %56 = arith.addf %54, %55 : vector<2x1x128xf32>
    %cst_23 = arith.constant dense<0.000000e+00> : vector<2x128xf32>
    %57 = vector.multi_reduction <add>, %47, %cst_23 [1] : vector<2x16x128xf32> to vector<2x128xf32>
    %58 = vector.shape_cast %57 : vector<2x128xf32> to vector<2x1x128xf32>
    %cst_24 = arith.constant 9.99999997E-7 : f32
    %59 = vector.broadcast %cst_24 : f32 to vector<2x1x128xf32>
    %60 = arith.addf %58, %59 : vector<2x1x128xf32>
    %61 = vector.broadcast %56 : vector<2x1x128xf32> to vector<2x16x128xf32>
    %62 = arith.mulf %50, %61 : vector<2x16x128xf32>
    %63 = vector.shape_cast %62 : vector<2x16x128xf32> to vector<32x128xf32>
    %64 = vector.broadcast %60 : vector<2x1x128xf32> to vector<2x16x128xf32>
    %65 = arith.mulf %52, %64 : vector<2x16x128xf32>
    %66 = vector.shape_cast %65 : vector<2x16x128xf32> to vector<32x128xf32>
    %67 = tpu.concatenate %63, %66 in 0 : vector<32x128xf32>, vector<32x128xf32> -> vector<64x128xf32>
    %cst_25 = arith.constant dense<0.000000e+00> : vector<64x4xf32>
    %68 = tpu.matmul %67, %46, %cst_25 {dimension_numbers = #tpu.dot_dimension_numbers<[1], [0], [0], [1], [0, 0, 1, 1], [], []>} : vector<64x128xf32>, vector<128x4xf32>, vector<64x4xf32> -> vector<64x4xf32>
    %69 = vector.extract_strided_slice %68 {offsets = [0, 0], sizes = [32, 4], strides = [1, 1]} : vector<64x4xf32> to vector<32x4xf32>
    %cst_26 = arith.constant 1.000000e+00 : f32
    %70 = vector.broadcast %cst_26 : f32 to vector<32x4xf32>
    %71 = arith.divf %70, %69 : vector<32x4xf32>
    %72 = vector.extract_strided_slice %68 {offsets = [32, 0], sizes = [32, 4], strides = [1, 1]} : vector<64x4xf32> to vector<32x4xf32>
    %cst_27 = arith.constant 1.000000e+00 : f32
    %73 = vector.broadcast %cst_27 : f32 to vector<32x4xf32>
    %74 = arith.divf %73, %72 : vector<32x4xf32>
    %75 = tpu.concatenate %71, %74 in 0 : vector<32x4xf32>, vector<32x4xf32> -> vector<64x4xf32>
    %cst_28 = arith.constant dense<0.000000e+00> : vector<64x128xf32>
    %76 = tpu.matmul %75, %46, %cst_28 {dimension_numbers = #tpu.dot_dimension_numbers<[1], [1], [0], [0], [0, 0, 1, 0], [], []>} : vector<64x4xf32>, vector<128x4xf32>, vector<64x128xf32> -> vector<64x128xf32>
    %77 = vector.extract_strided_slice %76 {offsets = [0, 0], sizes = [32, 128], strides = [1, 1]} : vector<64x128xf32> to vector<32x128xf32>
    %78 = vector.shape_cast %77 : vector<32x128xf32> to vector<2x16x128xf32>
    %79 = vector.extract_strided_slice %76 {offsets = [32, 0], sizes = [32, 128], strides = [1, 1]} : vector<64x128xf32> to vector<32x128xf32>
    %80 = vector.shape_cast %79 : vector<32x128xf32> to vector<2x16x128xf32>
    %81 = arith.mulf %48, %80 : vector<2x16x128xf32>
    %cst_29 = arith.constant dense<0.000000e+00> : vector<2x128xf32>
    %82 = vector.multi_reduction <add>, %81, %cst_29 [1] : vector<2x16x128xf32> to vector<2x128xf32>
    %83 = vector.shape_cast %82 : vector<2x128xf32> to vector<2x1x128xf32>
    %cst_30 = arith.constant 9.99999997E-7 : f32
    %84 = vector.broadcast %cst_30 : f32 to vector<2x1x128xf32>
    %85 = arith.addf %83, %84 : vector<2x1x128xf32>
    %86 = arith.mulf %47, %78 : vector<2x16x128xf32>
    %cst_31 = arith.constant dense<0.000000e+00> : vector<2x128xf32>
    %87 = vector.multi_reduction <add>, %86, %cst_31 [1] : vector<2x16x128xf32> to vector<2x128xf32>
    %88 = vector.shape_cast %87 : vector<2x128xf32> to vector<2x1x128xf32>
    %cst_32 = arith.constant 9.99999997E-7 : f32
    %89 = vector.broadcast %cst_32 : f32 to vector<2x1x128xf32>
    %90 = arith.addf %88, %89 : vector<2x1x128xf32>
    %91 = vector.broadcast %85 : vector<2x1x128xf32> to vector<2x16x128xf32>
    %92 = arith.mulf %50, %91 : vector<2x16x128xf32>
    %93 = vector.shape_cast %92 : vector<2x16x128xf32> to vector<32x128xf32>
    %94 = vector.broadcast %90 : vector<2x1x128xf32> to vector<2x16x128xf32>
    %95 = arith.mulf %52, %94 : vector<2x16x128xf32>
    %96 = vector.shape_cast %95 : vector<2x16x128xf32> to vector<32x128xf32>
    %97 = tpu.concatenate %93, %96 in 0 : vector<32x128xf32>, vector<32x128xf32> -> vector<64x128xf32>
    %cst_33 = arith.constant dense<0.000000e+00> : vector<64x4xf32>
    %98 = tpu.matmul %97, %46, %cst_33 {dimension_numbers = #tpu.dot_dimension_numbers<[1], [0], [0], [1], [0, 0, 1, 1], [], []>} : vector<64x128xf32>, vector<128x4xf32>, vector<64x4xf32> -> vector<64x4xf32>
    %99 = vector.extract_strided_slice %98 {offsets = [0, 0], sizes = [32, 4], strides = [1, 1]} : vector<64x4xf32> to vector<32x4xf32>
    %100 = vector.extract_strided_slice %98 {offsets = [32, 0], sizes = [32, 4], strides = [1, 1]} : vector<64x4xf32> to vector<32x4xf32>
    %cst_34 = arith.constant -1.000000e+00 : f32
    %cst_35 = arith.constant 1.000000e+00 : f32
    %101 = vector.broadcast %cst_34 : f32 to vector<32x4xf32>
    %102 = arith.maximumf %101, %100 : vector<32x4xf32>
    %103 = vector.broadcast %cst_35 : f32 to vector<32x4xf32>
    %104 = arith.minimumf %103, %102 : vector<32x4xf32>
    %cst_36 = arith.constant 1.000000e+00 : f32
    %105 = vector.broadcast %cst_36 : f32 to vector<32x4xf32>
    %106 = arith.mulf %99, %105 : vector<32x4xf32>
    %107 = arith.negf %106 : vector<32x4xf32>
    %108 = math.exp %107 : vector<32x4xf32>
    %cst_37 = arith.constant 1.000000e+00 : f32
    %109 = vector.broadcast %cst_37 : f32 to vector<32x4xf32>
    %110 = arith.addf %109, %108 : vector<32x4xf32>
    %111 = arith.divf %109, %110 : vector<32x4xf32>
    %112 = vector.shape_cast %104 : vector<32x4xf32> to vector<2x16x4xf32>
    %cst_38 = arith.constant dense<0xFF800000> : vector<2x4xf32>
    %113 = vector.multi_reduction <maximumf>, %112, %cst_38 [1] : vector<2x16x4xf32> to vector<2x4xf32>
    %114 = vector.shape_cast %113 : vector<2x4xf32> to vector<2x1x4xf32>
    %115 = vector.broadcast %114 : vector<2x1x4xf32> to vector<2x16x4xf32>
    %116 = arith.subf %112, %115 : vector<2x16x4xf32>
    %117 = math.exp %116 : vector<2x16x4xf32>
    %cst_39 = arith.constant dense<0.000000e+00> : vector<2x4xf32>
    %118 = vector.multi_reduction <add>, %117, %cst_39 [1] : vector<2x16x4xf32> to vector<2x4xf32>
    %119 = vector.shape_cast %118 : vector<2x4xf32> to vector<2x1x4xf32>
    %120 = vector.broadcast %119 : vector<2x1x4xf32> to vector<2x16x4xf32>
    %121 = arith.divf %117, %120 : vector<2x16x4xf32>
    %cst_40 = arith.constant 1.600000e+01 : f32
    %122 = vector.broadcast %cst_40 : f32 to vector<2x16x4xf32>
    %123 = arith.mulf %121, %122 : vector<2x16x4xf32>
    %124 = vector.shape_cast %123 : vector<2x16x4xf32> to vector<32x4xf32>
    %125 = arith.mulf %71, %111 : vector<32x4xf32>
    %126 = tpu.concatenate %125, %124 in 0 : vector<32x4xf32>, vector<32x4xf32> -> vector<64x4xf32>
    %cst_41 = arith.constant dense<0.000000e+00> : vector<64x128xf32>
    %127 = tpu.matmul %126, %46, %cst_41 {dimension_numbers = #tpu.dot_dimension_numbers<[1], [1], [0], [0], [0, 0, 1, 0], [], []>} : vector<64x4xf32>, vector<128x4xf32>, vector<64x128xf32> -> vector<64x128xf32>
    %128 = vector.extract_strided_slice %127 {offsets = [0, 0], sizes = [32, 128], strides = [1, 1]} : vector<64x128xf32> to vector<32x128xf32>
    %129 = vector.extract_strided_slice %127 {offsets = [32, 0], sizes = [32, 128], strides = [1, 1]} : vector<64x128xf32> to vector<32x128xf32>
    %130 = arith.mulf %38, %128 : vector<32x128xf32>
    %131 = vector.shape_cast %130 : vector<32x128xf32> to vector<2x16x128xf32>
    %132 = arith.mulf %45, %129 : vector<32x128xf32>
    %133 = vector.shape_cast %132 : vector<32x128xf32> to vector<2x16x128xf32>
    %cst_42 = arith.constant dense<0.000000e+00> : vector<2x128x128xf32>
    %134 = tpu.matmul %48, %133, %cst_42 {dimension_numbers = #tpu.dot_dimension_numbers<[1], [1], [2], [2], [0, 0, 0, 2, 1, 2], [0], [0]>} : vector<2x16x128xf32>, vector<2x16x128xf32>, vector<2x128x128xf32> -> vector<2x128x128xf32>
    %c0_43 = arith.constant 0 : index
    %c0_44 = arith.constant 0 : index
    %135 = vector.load %arg9[%c0_43, %c0_44] : memref<128x128xf32, #tpu.memory_space<vmem>>, vector<128x128xf32>
    %136 = vector.shape_cast %135 : vector<128x128xf32> to vector<1x128x128xf32>
    %137 = vector.broadcast %136 : vector<1x128x128xf32> to vector<2x128x128xf32>
    %138 = arith.mulf %134, %137 : vector<2x128x128xf32>
    %cst_45 = arith.constant dense<0.000000e+00> : vector<2x16x128xf32>
    %139 = tpu.matmul %131, %138, %cst_45 {dimension_numbers = #tpu.dot_dimension_numbers<[2], [1], [1], [2], [0, 0, 0, 1, 1, 2], [0], [0]>} : vector<2x16x128xf32>, vector<2x128x128xf32>, vector<2x16x128xf32> -> vector<2x16x128xf32>
    %140 = vector.shape_cast %139 : vector<2x16x128xf32> to vector<32x128xf32>
    %c0_46 = arith.constant 0 : index
    %c0_47 = arith.constant 0 : index
    %141 = vector.load %arg4[%c0_46, %c0_47] : memref<128x128xf32, #tpu.memory_space<vmem>>, vector<128x128xf32>
    %cst_48 = arith.constant dense<0.000000e+00> : vector<32x128xf32>
    %142 = tpu.matmul %140, %141, %cst_48 {dimension_numbers = #tpu.dot_dimension_numbers<[1], [0], [0], [1], [0, 0, 1, 1], [], []>} : vector<32x128xf32>, vector<128x128xf32>, vector<32x128xf32> -> vector<32x128xf32>
    %c0_49 = arith.constant 0 : index
    %c0_50 = arith.constant 0 : index
    %143 = vector.load %arg5[%c0_49, %c0_50] : memref<1x128xf32, #tpu.memory_space<vmem>>, vector<1x128xf32>
    %144 = vector.broadcast %143 : vector<1x128xf32> to vector<32x128xf32>
    %145 = arith.addf %142, %144 : vector<32x128xf32>
    %146 = arith.addf %1, %145 : vector<32x128xf32>
    %147 = vector.shape_cast %146 : vector<32x128xf32> to vector<2x16x128xf32>
    %c0_51 = arith.constant 0 : index
    %c0_52 = arith.constant 0 : index
    %c0_53 = arith.constant 0 : index
    %148 = vector.load %arg10[%c0_51, %c0_52, %c0_53] : memref<2x16x128xf32, #tpu.memory_space<vmem>>, vector<2x16x128xf32>
    tpu.vector_store %arg10[%c0_51, %c0_52, %c0_53], %147 {strides = array<i32>} : memref<2x16x128xf32, #tpu.memory_space<vmem>>, vector<2x16x128xf32>,
    return
  }
  func.func @transform_0(%arg0: i32) -> (i32, i32, i32) {
    %c0_i32 = arith.constant 0 : i32
    %c0_i32_0 = arith.constant 0 : i32
    %c0_i32_1 = arith.constant 0 : i32
    return %arg0, %c0_i32, %c0_i32_0 : i32, i32, i32
  }
  func.func @transform_1(%arg0: i32) -> (i32, i32) {
    %c0_i32 = arith.constant 0 : i32
    %c0_i32_0 = arith.constant 0 : i32
    %c0_i32_1 = arith.constant 0 : i32
    return %c0_i32, %c0_i32_0 : i32, i32
  }
  func.func @transform_2(%arg0: i32) -> (i32, i32) {
    %c0_i32 = arith.constant 0 : i32
    %c0_i32_0 = arith.constant 0 : i32
    %c0_i32_1 = arith.constant 0 : i32
    return %c0_i32, %c0_i32_0 : i32, i32
  }
  func.func @transform_3(%arg0: i32) -> (i32, i32) {
    %c0_i32 = arith.constant 0 : i32
    %c0_i32_0 = arith.constant 0 : i32
    %c0_i32_1 = arith.constant 0 : i32
    return %c0_i32, %c0_i32_0 : i32, i32
  }
  func.func @transform_4(%arg0: i32) -> (i32, i32) {
    %c0_i32 = arith.constant 0 : i32
    %c0_i32_0 = arith.constant 0 : i32
    %c0_i32_1 = arith.constant 0 : i32
    return %c0_i32, %c0_i32_0 : i32, i32
  }
  func.func @transform_5(%arg0: i32) -> (i32, i32) {
    %c0_i32 = arith.constant 0 : i32
    %c0_i32_0 = arith.constant 0 : i32
    %c0_i32_1 = arith.constant 0 : i32
    return %c0_i32, %c0_i32_0 : i32, i32
  }
  func.func @transform_6(%arg0: i32) -> (i32, i32) {
    %c0_i32 = arith.constant 0 : i32
    %c0_i32_0 = arith.constant 0 : i32
    %c0_i32_1 = arith.constant 0 : i32
    return %c0_i32, %c0_i32_0 : i32, i32
  }
  func.func @transform_7(%arg0: i32) -> (i32, i32) {
    %c0_i32 = arith.constant 0 : i32
    %c0_i32_0 = arith.constant 0 : i32
    %c0_i32_1 = arith.constant 0 : i32
    return %c0_i32, %c0_i32_0 : i32, i32
  }
  func.func @transform_8(%arg0: i32) -> (i32, i32) {
    %c0_i32 = arith.constant 0 : i32
    %c0_i32_0 = arith.constant 0 : i32
    %c0_i32_1 = arith.constant 0 : i32
    return %c0_i32, %c0_i32_0 : i32, i32
  }
  func.func @transform_9(%arg0: i32) -> (i32, i32, i32) {
    %c0_i32 = arith.constant 0 : i32
    %c0_i32_0 = arith.constant 0 : i32
    %c0_i32_1 = arith.constant 0 : i32
    return %arg0, %c0_i32, %c0_i32_0 : i32, i32, i32
  }
}

</mosaic_0001>

<llo_original>
// kernel: flowformer_layer.3
$region0: #{flowformer_layer.3}
  #allocation0 [shape = 'u32[]', space=smem, size = 0x4, offset = 0x4, fixed_abs, tag = 'smem constant byte address 0x4 - core index']
  #allocation1 [shape = 'u32[144,128]{1,0:T(1,128)}', space=vmem, size = 0x12000, scoped, tag = 'internal scratch']
  %s0 = inlined_call_operand.vmem [shape: f32[32,128], index: 0, kind: input, shape index: {}]
  %s1 = inlined_call_operand.vmem [shape: f32[1,128], index: 1, kind: input, shape index: {}]
  %s2 = inlined_call_operand.vmem [shape: f32[1,128], index: 2, kind: input, shape index: {}]
  %s3 = inlined_call_operand.vmem [shape: f32[128,256], index: 3, kind: input, shape index: {}]
  %s4 = inlined_call_operand.vmem [shape: f32[1,256], index: 4, kind: input, shape index: {}]
  %s5 = inlined_call_operand.vmem [shape: f32[256,128], index: 5, kind: input, shape index: {}]
  %s6 = inlined_call_operand.vmem [shape: f32[1,128], index: 6, kind: input, shape index: {}]
  %s7 = inlined_call_operand.hbm [shape: f32[32,128], index: 7, kind: output, shape index: {}]
  %s8 = sld [smem:[#allocation0]]
  $region38: #{flowformer_layer.3} parent=0
    _
  %s10 = ssub.s32 1, %s8
  %s11 = scalar_select 0, %s10, %s8
  $region1: #{flowformer_layer.3} parent=0
    #allocation2 [shape = 'u8[16384]{0}', space=vmem, size = 0x4000, scoped, tag = 'output window, operand 0, single buffered']
    #allocation3 [shape = 's32[1]{0}', space=sflag, size = 0x4, scoped, tag = 'scoped memory for flowformer_layer.3']
    %12 = vsyncpa [#allocation3], 0
    // Predicated region
    $region2: #{flowformer_layer.3} parent=1 // pred_check
      _
    $region3: #{flowformer_layer.3} parent=1 // pred_check_branch
      %14 = sbr.rel (0) target = $region5
    $region4: #{flowformer_layer.3} parent=1 // pred_region
      _
    $region5: #{flowformer_layer.3} parent=1 // pred_fallthru
      _
    // Predicated region
    $region6: #{flowformer_layer.3} parent=1 // pred_check
      _
    $region7: #{flowformer_layer.3} parent=1 // pred_check_branch
      %16 = sbr.rel (0) target = $region9
    $region8: #{flowformer_layer.3} parent=1 // pred_region
      _
    $region9: #{flowformer_layer.3} parent=1 // pred_fallthru
      _
    // Predicated region
    $region10: #{flowformer_layer.3} parent=1 // pred_check
      _
    $region11: #{flowformer_layer.3} parent=1 // pred_check_branch
      %18 = sbr.rel (0) target = $region13
    $region12: #{flowformer_layer.3} parent=1 // pred_region
      _
    $region13: #{flowformer_layer.3} parent=1 // pred_fallthru
      _
    // Predicated region
    $region14: #{flowformer_layer.3} parent=1 // pred_check
      _
    $region15: #{flowformer_layer.3} parent=1 // pred_check_branch
      %20 = sbr.rel (0) target = $region17
    $region16: #{flowformer_layer.3} parent=1 // pred_region
      _
    $region17: #{flowformer_layer.3} parent=1 // pred_fallthru
      _
    // Predicated region
    $region18: #{flowformer_layer.3} parent=1 // pred_check
      _
    $region19: #{flowformer_layer.3} parent=1 // pred_check_branch
      %22 = sbr.rel (0) target = $region21
    $region20: #{flowformer_layer.3} parent=1 // pred_region
      _
    $region21: #{flowformer_layer.3} parent=1 // pred_fallthru
      _
    // Predicated region
    $region22: #{flowformer_layer.3} parent=1 // pred_check
      _
    $region23: #{flowformer_layer.3} parent=1 // pred_check_branch
      %24 = sbr.rel (0) target = $region25
    $region24: #{flowformer_layer.3} parent=1 // pred_region
      _
    $region25: #{flowformer_layer.3} parent=1 // pred_fallthru
      _
    // Predicated region
    $region26: #{flowformer_layer.3} parent=1 // pred_check
      _
    $region27: #{flowformer_layer.3} parent=1 // pred_check_branch
      %26 = sbr.rel (0) target = $region29
    $region28: #{flowformer_layer.3} parent=1 // pred_region
      _
    $region29: #{flowformer_layer.3} parent=1 // pred_fallthru
      _
    %v27 = vld [vmem:[%s0] sm:$0xff]
    %v28 = vld [vmem:[%s0 + $0x8] sm:$0xff]
    %v29 = vld [vmem:[%s0 + $0x10] sm:$0xff]
    %v30 = vld [vmem:[%s0 + $0x18] sm:$0xff]
    %v31 = vld [vmem:[%s1] sm:$0x1]
    %v32 = vld [vmem:[%s2] sm:$0x1]
    %33 = vadd.xlane.f32.xlu0 %v27
    %v34 = vpop.xlane.xlu0 %33
    %35 = vadd.xlane.f32.xlu0 %v28
    %v36 = vpop.xlane.xlu0 %35
    %37 = vadd.xlane.f32.xlu0 %v29
    %v38 = vpop.xlane.xlu0 %37
    %39 = vadd.xlane.f32.xlu0 %v30
    %v40 = vpop.xlane.xlu0 %39
    %v41 = vrcp.pop 128.0
    %v42 = vmul.f32 %v34, %v41
    %v43 = vmul.f32 %v36, %v41
    %v44 = vmul.f32 %v38, %v41
    %v45 = vmul.f32 %v40, %v41
    %v46 = vsub.f32 %v27, %v42
    %v47 = vsub.f32 %v28, %v43
    %v48 = vsub.f32 %v29, %v44
    %v49 = vsub.f32 %v30, %v45
    %v50 = vmul.f32 %v46, %v46
    %v51 = vmul.f32 %v47, %v47
    %v52 = vmul.f32 %v48, %v48
    %v53 = vmul.f32 %v49, %v49
    %54 = vadd.xlane.f32.xlu0 %v50
    %v55 = vpop.xlane.xlu0 %54
    %56 = vadd.xlane.f32.xlu0 %v51
    %v57 = vpop.xlane.xlu0 %56
    %58 = vadd.xlane.f32.xlu0 %v52
    %v59 = vpop.xlane.xlu0 %58
    %60 = vadd.xlane.f32.xlu0 %v53
    %v61 = vpop.xlane.xlu0 %60
    %v62 = vmul.f32 %v55, %v41
    %v63 = vmul.f32 %v57, %v41
    %v64 = vmul.f32 %v59, %v41
    %v65 = vmul.f32 %v61, %v41
    %v66 = vadd.f32 %v62, 1e-05
    %v67 = vadd.f32 %v63, 1e-05
    %v68 = vadd.f32 %v64, 1e-05
    %v69 = vadd.f32 %v65, 1e-05
    %v70 = vrsqrt.pop %v66
    %v71 = vrsqrt.pop %v67
    %v72 = vrsqrt.pop %v68
    %v73 = vrsqrt.pop %v69
    %v74 = vmul.f32 %v46, %v70
    %v75 = vmul.f32 %v47, %v71
    %v76 = vmul.f32 %v48, %v72
    %v77 = vmul.f32 %v49, %v73
    %v79 = vlaneseq
    %v80 = vshrl.u32 %v79, 7
    %v81 = vsub.s32 0, %v80
    %v82 = vrot.slane %v31, %v81
    %v84 = vmul.f32 %v74, %v82
    %v85 = vmul.f32 %v75, %v82
    %v86 = vmul.f32 %v76, %v82
    %v87 = vmul.f32 %v77, %v82
    %v89 = vlaneseq
    %v90 = vshrl.u32 %v89, 7
    %v91 = vsub.s32 0, %v90
    %v92 = vrot.slane %v32, %v91
    %v94 = vadd.f32 %v84, %v92
    %v95 = vadd.f32 %v85, %v92
    %v96 = vadd.f32 %v86, %v92
    %v97 = vadd.f32 %v87, %v92
    %v98 = vld [vmem:[%s3] sm:$0xff]
    %v99 = vld [vmem:[%s3 + $0x8] sm:$0xff]
    %v100 = vld [vmem:[%s3 + $0x10] sm:$0xff]
    %v101 = vld [vmem:[%s3 + $0x18] sm:$0xff]
    %v102 = vld [vmem:[%s3 + $0x20] sm:$0xff]
    %v103 = vld [vmem:[%s3 + $0x28] sm:$0xff]
    %v104 = vld [vmem:[%s3 + $0x30] sm:$0xff]
    %v105 = vld [vmem:[%s3 + $0x38] sm:$0xff]
    %v106 = vld [vmem:[%s3 + $0x40] sm:$0xff]
    %v107 = vld [vmem:[%s3 + $0x48] sm:$0xff]
    %v108 = vld [vmem:[%s3 + $0x50] sm:$0xff]
    %v109 = vld [vmem:[%s3 + $0x58] sm:$0xff]
    %v110 = vld [vmem:[%s3 + $0x60] sm:$0xff]
    %v111 = vld [vmem:[%s3 + $0x68] sm:$0xff]
    %v112 = vld [vmem:[%s3 + $0x70] sm:$0xff]
    %v113 = vld [vmem:[%s3 + $0x78] sm:$0xff]
    %v114 = vld [vmem:[%s3 + $0x80] sm:$0xff]
    %v115 = vld [vmem:[%s3 + $0x88] sm:$0xff]
    %v116 = vld [vmem:[%s3 + $0x90] sm:$0xff]
    %v117 = vld [vmem:[%s3 + $0x98] sm:$0xff]
    %v118 = vld [vmem:[%s3 + $0xa0] sm:$0xff]
    %v119 = vld [vmem:[%s3 + $0xa8] sm:$0xff]
    %v120 = vld [vmem:[%s3 + $0xb0] sm:$0xff]
    %v121 = vld [vmem:[%s3 + $0xb8] sm:$0xff]
    %v122 = vld [vmem:[%s3 + $0xc0] sm:$0xff]
    %v123 = vld [vmem:[%s3 + $0xc8] sm:$0xff]
    %v124 = vld [vmem:[%s3 + $0xd0] sm:$0xff]
    %v125 = vld [vmem:[%s3 + $0xd8] sm:$0xff]
    %v126 = vld [vmem:[%s3 + $0xe0] sm:$0xff]
    %v127 = vld [vmem:[%s3 + $0xe8] sm:$0xff]
    %v128 = vld [vmem:[%s3 + $0xf0] sm:$0xff]
    %v129 = vld [vmem:[%s3 + $0xf8] sm:$0xff]
    %v130 = vld [vmem:[%s4] sm:$0x3]
    %v132 = vlaneseq
    %v133 = vshrl.u32 %v132, 7
    %v134 = vsub.s32 0, %v133
    %v135 = vrot.slane %v130, %v134
    %v136 = vlaneseq
    %v137 = vshrl.u32 %v136, 7
    %v138 = vsub.s32 1, %v137
    %v139 = vrot.slane %v130, %v138
    %142 = vmatprep.subr.mxu0 %v129
    %143 = vmatpush1.msra.mxu0 %v128
    %144 = vmatprep.subr.mxu0 %v127
    %145 = vmatpush1.msra.mxu0 %v126
    %146 = vmatprep.subr.mxu0 %v125
    %147 = vmatpush1.msra.mxu0 %v124
    %148 = vmatprep.subr.mxu0 %v123
    %149 = vmatpush1.msra.mxu0 %v122
    %150 = vmatprep.subr.mxu0 %v121
    %151 = vmatpush1.msra.mxu0 %v120
    %152 = vmatprep.subr.mxu0 %v119
    %153 = vmatpush1.msra.mxu0 %v118
    %154 = vmatprep.subr.mxu0 %v117
    %155 = vmatpush1.msra.mxu0 %v116
    %156 = vmatprep.subr.mxu0 %v115
    %157 = vmatpush1.msra.mxu0 %v114
    %158 = vmatprep.subr.mxu0 %v113
    %159 = vmatpush1.msra.mxu0 %v112
    %160 = vmatprep.subr.mxu0 %v111
    %161 = vmatpush1.msra.mxu0 %v110
    %162 = vmatprep.subr.mxu0 %v109
    %163 = vmatpush1.msra.mxu0 %v108
    %164 = vmatprep.subr.mxu0 %v107
    %165 = vmatpush1.msra.mxu0 %v106
    %166 = vmatprep.subr.mxu0 %v105
    %167 = vmatpush1.msra.mxu0 %v104
    %168 = vmatprep.subr.mxu0 %v103
    %169 = vmatpush1.msra.mxu0 %v102
    %170 = vmatprep.subr.mxu0 %v101
    %171 = vmatpush1.msra.mxu0 %v100
    %172 = vmatprep.subr.mxu0 %v99
    %173 = vmatpush1.msra.mxu0 %v98
    %174 = vmatprep.subr.mxu0 0.0
    %175 = vmatpush2.msra.mxu0 0.0
    %176 = vmatprep.subr.mxu0 0.0
    %177 = vmatpush2.msra.mxu0 0.0
    %178 = vmatprep.subr.mxu0 0.0
    %179 = vmatpush2.msra.mxu0 0.0
    %180 = vmatprep.subr.mxu0 0.0
    %181 = vmatpush2.msra.mxu0 0.0
    %182 = vmatprep.subr.mxu0 0.0
    %183 = vmatpush2.msra.mxu0 0.0
    %184 = vmatprep.subr.mxu0 0.0
    %185 = vmatpush2.msra.mxu0 0.0
    %186 = vmatprep.subr.mxu0 0.0
    %187 = vmatpush2.msra.mxu0 0.0
    %188 = vmatprep.subr.mxu0 0.0
    %189 = vmatpush2.msra.mxu0 0.0
    %190 = vmatprep.subr.mxu0 0.0
    %191 = vmatpush2.msra.mxu0 0.0
    %192 = vmatprep.subr.mxu0 0.0
    %193 = vmatpush2.msra.mxu0 0.0
    %194 = vmatprep.subr.mxu0 0.0
    %195 = vmatpush2.msra.mxu0 0.0
    %196 = vmatprep.subr.mxu0 0.0
    %197 = vmatpush2.msra.mxu0 0.0
    %198 = vmatprep.subr.mxu0 0.0
    %199 = vmatpush2.msra.mxu0 0.0
    %200 = vmatprep.subr.mxu0 0.0
    %201 = vmatpush2.msra.mxu0 0.0
    %202 = vmatprep.subr.mxu0 0.0
    %203 = vmatpush2.msra.mxu0 0.0
    %204 = vmatprep.subr.mxu0 0.0
    %205 = vmatpush2.msra.mxu0 0.0
    %206 = vmatprep.mubr.f32.mxu0 0.0
    %207 = vmatmul.mubr.f32.gmra.mxu0 %v94
    %v208 = vpop.f32.mrf.mxu0
    %v209 = vadd.f32 %v135, %v208
    %v210 = vpop.f32.mrf.mxu0
    %v211 = vadd.f32 %v139, %v210
    %212 = vmatprep.mubr.f32.mxu0 0.0
    %213 = vmatmul.mubr.f32.gmra.mxu0 %v95
    %v214 = vpop.f32.mrf.mxu0
    %v215 = vadd.f32 %v135, %v214
    %v216 = vpop.f32.mrf.mxu0
    %v217 = vadd.f32 %v139, %v216
    %218 = vmatprep.mubr.f32.mxu0 0.0
    %219 = vmatmul.mubr.f32.gmra.mxu0 %v96
    %v220 = vpop.f32.mrf.mxu0
    %v221 = vadd.f32 %v135, %v220
    %v222 = vpop.f32.mrf.mxu0
    %v223 = vadd.f32 %v139, %v222
    %224 = vmatprep.mubr.f32.mxu0 0.0
    %225 = vmatmul.mubr.f32.gmra.mxu0 %v97
    %v226 = vpop.f32.mrf.mxu0
    %v227 = vadd.f32 %v135, %v226
    %v228 = vpop.f32.mrf.mxu0
    %v229 = vadd.f32 %v139, %v228
    %230 = vdwg.mxu0
    %v231 = vmul.f32 %v209, 0.5
    %v232 = vmul.f32 %v211, 0.5
    %v233 = vmul.f32 %v215, 0.5
    %v234 = vmul.f32 %v217, 0.5
    %v235 = vmul.f32 %v221, 0.5
    %v236 = vmul.f32 %v223, 0.5
    %v237 = vmul.f32 %v227, 0.5
    %v238 = vmul.f32 %v229, 0.5
    %v239 = vmul.f32 %v209, 0.70710677
    %v240 = vmul.f32 %v211, 0.70710677
    %v241 = vmul.f32 %v215, 0.70710677
    %v242 = vmul.f32 %v217, 0.70710677
    %v243 = vmul.f32 %v221, 0.70710677
    %v244 = vmul.f32 %v223, 0.70710677
    %v245 = vmul.f32 %v227, 0.70710677
    %v246 = vmul.f32 %v229, 0.70710677
    %vm247 = vcmp.ge.f32.partialorder %v239, 0.0
    %vm248 = vcmp.ge.f32.partialorder %v240, 0.0
    %vm249 = vcmp.ge.f32.partialorder %v241, 0.0
    %vm250 = vcmp.ge.f32.partialorder %v242, 0.0
    %vm251 = vcmp.ge.f32.partialorder %v243, 0.0
    %vm252 = vcmp.ge.f32.partialorder %v244, 0.0
    %vm253 = vcmp.ge.f32.partialorder %v245, 0.0
    %vm254 = vcmp.ge.f32.partialorder %v246, 0.0
    %v255 = vsel %vm247, 1.0, -1.0
    %v256 = vsel %vm248, 1.0, -1.0
    %v257 = vsel %vm249, 1.0, -1.0
    %v258 = vsel %vm250, 1.0, -1.0
    %v259 = vsel %vm251, 1.0, -1.0
    %v260 = vsel %vm252, 1.0, -1.0
    %v261 = vsel %vm253, 1.0, -1.0
    %v262 = vsel %vm254, 1.0, -1.0
    %v263 = vand.u32 2147483647, %v239
    %v264 = vand.u32 2147483647, %v240
    %v265 = vand.u32 2147483647, %v241
    %v266 = vand.u32 2147483647, %v242
    %v267 = vand.u32 2147483647, %v243
    %v268 = vand.u32 2147483647, %v244
    %v269 = vand.u32 2147483647, %v245
    %v270 = vand.u32 2147483647, %v246
    %v271 = vmul.f32 %v263, 0.3275911
    %v272 = vmul.f32 %v264, 0.3275911
    %v273 = vmul.f32 %v265, 0.3275911
    %v274 = vmul.f32 %v266, 0.3275911
    %v275 = vmul.f32 %v267, 0.3275911
    %v276 = vmul.f32 %v268, 0.3275911
    %v277 = vmul.f32 %v269, 0.3275911
    %v278 = vmul.f32 %v270, 0.3275911
    %v279 = vadd.f32 %v271, 1.0
    %v280 = vadd.f32 %v272, 1.0
    %v281 = vadd.f32 %v273, 1.0
    %v282 = vadd.f32 %v274, 1.0
    %v283 = vadd.f32 %v275, 1.0
    %v284 = vadd.f32 %v276, 1.0
    %v285 = vadd.f32 %v277, 1.0
    %v286 = vadd.f32 %v278, 1.0
    %v287 = vrcp.pop %v279
    %v288 = vmul.f32 1.0, %v287
    %v289 = vrcp.pop %v280
    %v290 = vmul.f32 1.0, %v289
    %v291 = vrcp.pop %v281
    %v292 = vmul.f32 1.0, %v291
    %v293 = vrcp.pop %v282
    %v294 = vmul.f32 1.0, %v293
    %v295 = vrcp.pop %v283
    %v296 = vmul.f32 1.0, %v295
    %v297 = vrcp.pop %v284
    %v298 = vmul.f32 1.0, %v297
    %v299 = vrcp.pop %v285
    %v300 = vmul.f32 1.0, %v299
    %v301 = vrcp.pop %v286
    %v302 = vmul.f32 1.0, %v301
    %v303 = vmul.f32 %v288, 1.0614054
    %v304 = vmul.f32 %v290, 1.0614054
    %v305 = vmul.f32 %v292, 1.0614054
    %v306 = vmul.f32 %v294, 1.0614054
    %v307 = vmul.f32 %v296, 1.0614054
    %v308 = vmul.f32 %v298, 1.0614054
    %v309 = vmul.f32 %v300, 1.0614054
    %v310 = vmul.f32 %v302, 1.0614054
    %v311 = vadd.f32 %v303, -1.4531521
    %v312 = vadd.f32 %v304, -1.4531521
    %v313 = vadd.f32 %v305, -1.4531521
    %v314 = vadd.f32 %v306, -1.4531521
    %v315 = vadd.f32 %v307, -1.4531521
    %v316 = vadd.f32 %v308, -1.4531521
    %v317 = vadd.f32 %v309, -1.4531521
    %v318 = vadd.f32 %v310, -1.4531521
    %v319 = vmul.f32 %v311, %v288
    %v320 = vmul.f32 %v312, %v290
    %v321 = vmul.f32 %v313, %v292
    %v322 = vmul.f32 %v314, %v294
    %v323 = vmul.f32 %v315, %v296
    %v324 = vmul.f32 %v316, %v298
    %v325 = vmul.f32 %v317, %v300
    %v326 = vmul.f32 %v318, %v302
    %v327 = vadd.f32 %v319, 1.4214138
    %v328 = vadd.f32 %v320, 1.4214138
    %v329 = vadd.f32 %v321, 1.4214138
    %v330 = vadd.f32 %v322, 1.4214138
    %v331 = vadd.f32 %v323, 1.4214138
    %v332 = vadd.f32 %v324, 1.4214138
    %v333 = vadd.f32 %v325, 1.4214138
    %v334 = vadd.f32 %v326, 1.4214138
    %v335 = vmul.f32 %v327, %v288
    %v336 = vmul.f32 %v328, %v290
    %v337 = vmul.f32 %v329, %v292
    %v338 = vmul.f32 %v330, %v294
    %v339 = vmul.f32 %v331, %v296
    %v340 = vmul.f32 %v332, %v298
    %v341 = vmul.f32 %v333, %v300
    %v342 = vmul.f32 %v334, %v302
    %v343 = vadd.f32 %v335, -0.28449672
    %v344 = vadd.f32 %v336, -0.28449672
    %v345 = vadd.f32 %v337, -0.28449672
    %v346 = vadd.f32 %v338, -0.28449672
    %v347 = vadd.f32 %v339, -0.28449672
    %v348 = vadd.f32 %v340, -0.28449672
    %v349 = vadd.f32 %v341, -0.28449672
    %v350 = vadd.f32 %v342, -0.28449672
    %v351 = vmul.f32 %v343, %v288
    %v352 = vmul.f32 %v344, %v290
    %v353 = vmul.f32 %v345, %v292
    %v354 = vmul.f32 %v346, %v294
    %v355 = vmul.f32 %v347, %v296
    %v356 = vmul.f32 %v348, %v298
    %v357 = vmul.f32 %v349, %v300
    %v358 = vmul.f32 %v350, %v302
    %v359 = vadd.f32 %v351, 0.2548296
    %v360 = vadd.f32 %v352, 0.2548296
    %v361 = vadd.f32 %v353, 0.2548296
    %v362 = vadd.f32 %v354, 0.2548296
    %v363 = vadd.f32 %v355, 0.2548296
    %v364 = vadd.f32 %v356, 0.2548296
    %v365 = vadd.f32 %v357, 0.2548296
    %v366 = vadd.f32 %v358, 0.2548296
    %v367 = vmul.f32 %v359, %v288
    %v368 = vmul.f32 %v360, %v290
    %v369 = vmul.f32 %v361, %v292
    %v370 = vmul.f32 %v362, %v294
    %v371 = vmul.f32 %v363, %v296
    %v372 = vmul.f32 %v364, %v298
    %v373 = vmul.f32 %v365, %v300
    %v374 = vmul.f32 %v366, %v302
    %v375 = vsub.f32 0.0, %v263
    %v376 = vsub.f32 0.0, %v264
    %v377 = vsub.f32 0.0, %v265
    %v378 = vsub.f32 0.0, %v266
    %v379 = vsub.f32 0.0, %v267
    %v380 = vsub.f32 0.0, %v268
    %v381 = vsub.f32 0.0, %v269
    %v382 = vsub.f32 0.0, %v270
    %v383 = vmul.f32 %v375, %v263
    %v384 = vmul.f32 %v376, %v264
    %v385 = vmul.f32 %v377, %v265
    %v386 = vmul.f32 %v378, %v266
    %v387 = vmul.f32 %v379, %v267
    %v388 = vmul.f32 %v380, %v268
    %v389 = vmul.f32 %v381, %v269
    %v390 = vmul.f32 %v382, %v270
    %v391 = vmul.f32 %v383, 1.442695
    %v392 = vpow.pop %v391
    %v393 = vmul.f32 %v384, 1.442695
    %v394 = vpow.pop %v393
    %v395 = vmul.f32 %v385, 1.442695
    %v396 = vpow.pop %v395
    %v397 = vmul.f32 %v386, 1.442695
    %v398 = vpow.pop %v397
    %v399 = vmul.f32 %v387, 1.442695
    %v400 = vpow.pop %v399
    %v401 = vmul.f32 %v388, 1.442695
    %v402 = vpow.pop %v401
    %v403 = vmul.f32 %v389, 1.442695
    %v404 = vpow.pop %v403
    %v405 = vmul.f32 %v390, 1.442695
    %v406 = vpow.pop %v405
    %v407 = vmul.f32 %v367, %v392
    %v408 = vmul.f32 %v368, %v394
    %v409 = vmul.f32 %v369, %v396
    %v410 = vmul.f32 %v370, %v398
    %v411 = vmul.f32 %v371, %v400
    %v412 = vmul.f32 %v372, %v402
    %v413 = vmul.f32 %v373, %v404
    %v414 = vmul.f32 %v374, %v406
    %v415 = vsub.f32 1.0, %v407
    %v416 = vsub.f32 1.0, %v408
    %v417 = vsub.f32 1.0, %v409
    %v418 = vsub.f32 1.0, %v410
    %v419 = vsub.f32 1.0, %v411
    %v420 = vsub.f32 1.0, %v412
    %v421 = vsub.f32 1.0, %v413
    %v422 = vsub.f32 1.0, %v414
    %v423 = vmul.f32 %v255, %v415
    %v424 = vmul.f32 %v256, %v416
    %v425 = vmul.f32 %v257, %v417
    %v426 = vmul.f32 %v258, %v418
    %v427 = vmul.f32 %v259, %v419
    %v428 = vmul.f32 %v260, %v420
    %v429 = vmul.f32 %v261, %v421
    %v430 = vmul.f32 %v262, %v422
    %v431 = vadd.f32 %v423, 1.0
    %v432 = vadd.f32 %v424, 1.0
    %v433 = vadd.f32 %v425, 1.0
    %v434 = vadd.f32 %v426, 1.0
    %v435 = vadd.f32 %v427, 1.0
    %v436 = vadd.f32 %v428, 1.0
    %v437 = vadd.f32 %v429, 1.0
    %v438 = vadd.f32 %v430, 1.0
    %v439 = vmul.f32 %v231, %v431
    %v440 = vmul.f32 %v232, %v432
    %v441 = vmul.f32 %v233, %v433
    %v442 = vmul.f32 %v234, %v434
    %v443 = vmul.f32 %v235, %v435
    %v444 = vmul.f32 %v236, %v436
    %v445 = vmul.f32 %v237, %v437
    %v446 = vmul.f32 %v238, %v438
    %v447 = vld [vmem:[%s5] sm:$0xff]
    %v448 = vld [vmem:[%s5 + $0x8] sm:$0xff]
    %v449 = vld [vmem:[%s5 + $0x10] sm:$0xff]
    %v450 = vld [vmem:[%s5 + $0x18] sm:$0xff]
    %v451 = vld [vmem:[%s5 + $0x20] sm:$0xff]
    %v452 = vld [vmem:[%s5 + $0x28] sm:$0xff]
    %v453 = vld [vmem:[%s5 + $0x30] sm:$0xff]
    %v454 = vld [vmem:[%s5 + $0x38] sm:$0xff]
    %v455 = vld [vmem:[%s5 + $0x40] sm:$0xff]
    %v456 = vld [vmem:[%s5 + $0x48] sm:$0xff]
    %v457 = vld [vmem:[%s5 + $0x50] sm:$0xff]
    %v458 = vld [vmem:[%s5 + $0x58] sm:$0xff]
    %v459 = vld [vmem:[%s5 + $0x60] sm:$0xff]
    %v460 = vld [vmem:[%s5 + $0x68] sm:$0xff]
    %v461 = vld [vmem:[%s5 + $0x70] sm:$0xff]
    %v462 = vld [vmem:[%s5 + $0x78] sm:$0xff]
    %v463 = vld [vmem:[%s5 + $0x80] sm:$0xff]
    %v464 = vld [vmem:[%s5 + $0x88] sm:$0xff]
    %v465 = vld [vmem:[%s5 + $0x90] sm:$0xff]
    %v466 = vld [vmem:[%s5 + $0x98] sm:$0xff]
    %v467 = vld [vmem:[%s5 + $0xa0] sm:$0xff]
    %v468 = vld [vmem:[%s5 + $0xa8] sm:$0xff]
    %v469 = vld [vmem:[%s5 + $0xb0] sm:$0xff]
    %v470 = vld [vmem:[%s5 + $0xb8] sm:$0xff]
    %v471 = vld [vmem:[%s5 + $0xc0] sm:$0xff]
    %v472 = vld [vmem:[%s5 + $0xc8] sm:$0xff]
    %v473 = vld [vmem:[%s5 + $0xd0] sm:$0xff]
    %v474 = vld [vmem:[%s5 + $0xd8] sm:$0xff]
    %v475 = vld [vmem:[%s5 + $0xe0] sm:$0xff]
    %v476 = vld [vmem:[%s5 + $0xe8] sm:$0xff]
    %v477 = vld [vmem:[%s5 + $0xf0] sm:$0xff]
    %v478 = vld [vmem:[%s5 + $0xf8] sm:$0xff]
    %v479 = vld [vmem:[%s6] sm:$0x1]
    %v481 = vlaneseq
    %v482 = vshrl.u32 %v481, 7
    %v483 = vsub.s32 0, %v482
    %v484 = vrot.slane %v479, %v483
    %486 = vmatprep.subr.mxu0 0.0
    %487 = vmatpush1.msra.mxu0 %v462
    %488 = vmatprep.subr.mxu0 0.0
    %489 = vmatpush1.msra.mxu0 %v461
    %490 = vmatprep.subr.mxu0 0.0
    %491 = vmatpush1.msra.mxu0 %v460
    %492 = vmatprep.subr.mxu0 0.0
    %493 = vmatpush1.msra.mxu0 %v459
    %494 = vmatprep.subr.mxu0 0.0
    %495 = vmatpush1.msra.mxu0 %v458
    %496 = vmatprep.subr.mxu0 0.0
    %497 = vmatpush1.msra.mxu0 %v457
    %498 = vmatprep.subr.mxu0 0.0
    %499 = vmatpush1.msra.mxu0 %v456
    %500 = vmatprep.subr.mxu0 0.0
    %501 = vmatpush1.msra.mxu0 %v455
    %502 = vmatprep.subr.mxu0 0.0
    %503 = vmatpush1.msra.mxu0 %v454
    %504 = vmatprep.subr.mxu0 0.0
    %505 = vmatpush1.msra.mxu0 %v453
    %506 = vmatprep.subr.mxu0 0.0
    %507 = vmatpush1.msra.mxu0 %v452
    %508 = vmatprep.subr.mxu0 0.0
    %509 = vmatpush1.msra.mxu0 %v451
    %510 = vmatprep.subr.mxu0 0.0
    %511 = vmatpush1.msra.mxu0 %v450
    %512 = vmatprep.subr.mxu0 0.0
    %513 = vmatpush1.msra.mxu0 %v449
    %514 = vmatprep.subr.mxu0 0.0
    %515 = vmatpush1.msra.mxu0 %v448
    %516 = vmatprep.subr.mxu0 0.0
    %517 = vmatpush1.msra.mxu0 %v447
    %518 = vmatprep.subr.mxu0 0.0
    %519 = vmatpush2.msra.mxu0 %v478
    %520 = vmatprep.subr.mxu0 0.0
    %521 = vmatpush2.msra.mxu0 %v477
    %522 = vmatprep.subr.mxu0 0.0
    %523 = vmatpush2.msra.mxu0 %v476
    %524 = vmatprep.subr.mxu0 0.0
    %525 = vmatpush2.msra.mxu0 %v475
    %526 = vmatprep.subr.mxu0 0.0
    %527 = vmatpush2.msra.mxu0 %v474
    %528 = vmatprep.subr.mxu0 0.0
    %529 = vmatpush2.msra.mxu0 %v473
    %530 = vmatprep.subr.mxu0 0.0
    %531 = vmatpush2.msra.mxu0 %v472
    %532 = vmatprep.subr.mxu0 0.0
    %533 = vmatpush2.msra.mxu0 %v471
    %534 = vmatprep.subr.mxu0 0.0
    %535 = vmatpush2.msra.mxu0 %v470
    %536 = vmatprep.subr.mxu0 0.0
    %537 = vmatpush2.msra.mxu0 %v469
    %538 = vmatprep.subr.mxu0 0.0
    %539 = vmatpush2.msra.mxu0 %v468
    %540 = vmatprep.subr.mxu0 0.0
    %541 = vmatpush2.msra.mxu0 %v467
    %542 = vmatprep.subr.mxu0 0.0
    %543 = vmatpush2.msra.mxu0 %v466
    %544 = vmatprep.subr.mxu0 0.0
    %545 = vmatpush2.msra.mxu0 %v465
    %546 = vmatprep.subr.mxu0 0.0
    %547 = vmatpush2.msra.mxu0 %v464
    %548 = vmatprep.subr.mxu0 0.0
    %549 = vmatpush2.msra.mxu0 %v463
    %550 = vmatprep.mubr.f32.mxu0 %v440
    %551 = vmatmul.mubr.f32.gmra.mxu0 %v439
    %v552 = vpop.f32.mrf.mxu0
    %v553 = vadd.f32 %v484, %v552
    %v554 = vpop.f32.mrf.mxu0
    %555 = vmatprep.mubr.f32.mxu0 %v442
    %556 = vmatmul.mubr.f32.gmra.mxu0 %v441
    %v557 = vpop.f32.mrf.mxu0
    %v558 = vadd.f32 %v484, %v557
    %v559 = vpop.f32.mrf.mxu0
    %560 = vmatprep.mubr.f32.mxu0 %v444
    %561 = vmatmul.mubr.f32.gmra.mxu0 %v443
    %v562 = vpop.f32.mrf.mxu0
    %v563 = vadd.f32 %v484, %v562
    %v564 = vpop.f32.mrf.mxu0
    %565 = vmatprep.mubr.f32.mxu0 %v446
    %566 = vmatmul.mubr.f32.gmra.mxu0 %v445
    %v567 = vpop.f32.mrf.mxu0
    %v568 = vadd.f32 %v484, %v567
    %v569 = vpop.f32.mrf.mxu0
    %570 = vdwg.mxu0
    %v571 = vadd.f32 %v27, %v553
    %v572 = vadd.f32 %v28, %v558
    %v573 = vadd.f32 %v29, %v563
    %v574 = vadd.f32 %v30, %v568
    %575 = vst [vmem:[#allocation2] sm:$0xff] %v571
    %576 = vst [vmem:[#allocation2 + $0x8] sm:$0xff] %v572
    %577 = vst [vmem:[#allocation2 + $0x10] sm:$0xff] %v573
    %578 = vst [vmem:[#allocation2 + $0x18] sm:$0xff] %v574
    // Predicated region
    $region30: #{flowformer_layer.3} parent=1 // pred_check
      _
    $region31: #{flowformer_layer.3} parent=1 // pred_check_branch
      %580 = sbr.rel (0) target = $region33
    $region32: #{flowformer_layer.3} parent=1 // pred_region
      %s582 = ssub.s32 512, 512
      %583 = vsyncadd [#allocation3], %s582
      %s584 = sshll.u32 [#allocation2], 4
      %s585 = int_to_ptr.vmem [resolvable:$true] %s584
      %590 = dma.vmem_to_hbm [thread:$0]  %s585, 512, %s7, [#allocation3], 128, 128, 8
    $region33: #{flowformer_layer.3} parent=1 // pred_fallthru
      _
    // Predicated region
    $region34: #{flowformer_layer.3} parent=1 // pred_check
      _
    $region35: #{flowformer_layer.3} parent=1 // pred_check_branch
      %592 = sbr.rel (0) target = $region37
    $region36: #{flowformer_layer.3} parent=1 // pred_region
      %593 = dma.done [#allocation3], 512
    $region37: #{flowformer_layer.3} parent=1 // pred_fallthru
      _
    %594 = vsyncpa [#allocation3], 1

// kernel: flowformer_layer.2
$region0: #{flowformer_layer.2}
  #allocation0 [shape = 'u32[]', space=smem, size = 0x4, offset = 0x4, fixed_abs, tag = 'smem constant byte address 0x4 - core index']
  #allocation1 [shape = 'u32[144,128]{1,0:T(1,128)}', space=vmem, size = 0x12000, scoped, tag = 'internal scratch']
  %s0 = inlined_call_operand.hbm [shape: f32[2,16,128], index: 0, kind: input, shape index: {}]
  %s1 = inlined_call_operand.hbm [shape: f32[128,384], index: 1, kind: input, shape index: {}]
  %s2 = inlined_call_operand.vmem [shape: f32[1,384], index: 2, kind: input, shape index: {}]
  %s3 = inlined_call_operand.vmem [shape: f32[128,128], index: 3, kind: input, shape index: {}]
  %s4 = inlined_call_operand.vmem [shape: f32[1,128], index: 4, kind: input, shape index: {}]
  %s5 = inlined_call_operand.vmem [shape: f32[1,128], index: 5, kind: input, shape index: {}]
  %s6 = inlined_call_operand.vmem [shape: f32[1,128], index: 6, kind: input, shape index: {}]
  %s7 = inlined_call_operand.vmem [shape: f32[128,4], index: 7, kind: input, shape index: {}]
  %s8 = inlined_call_operand.hbm [shape: f32[128,128], index: 8, kind: input, shape index: {}]
  %s9 = inlined_call_operand.vmem [shape: f32[2,16,128], index: 9, kind: output, shape index: {}]
  %s10 = sld [smem:[#allocation0]]
  $region58: #{flowformer_layer.2} parent=0
    _
  %s12 = ssub.s32 1, %s10
  %s13 = scalar_select 0, %s12, %s10
  $region1: #{flowformer_layer.2} parent=0
    #allocation2 [shape = 'u8[16384]{0}', space=vmem, size = 0x4000, scoped, tag = 'input window, operand 0, single buffered']
    #allocation3 [shape = 's32[1]{0}', space=sflag, size = 0x4, scoped, tag = 'scoped memory for flowformer_layer.2']
    #allocation4 [shape = 'u8[196608]{0}', space=vmem, size = 0x30000, scoped, tag = 'input window, operand 1, single buffered']
    #allocation5 [shape = 's32[1]{0}', space=sflag, size = 0x4, scoped, tag = 'scoped memory for flowformer_layer.2']
    #allocation6 [shape = 'u8[65536]{0}', space=vmem, size = 0x10000, scoped, tag = 'input window, operand 8, single buffered']
    %14 = vsyncpa [#allocation3], 0
    %15 = vsyncpa [#allocation5], 0
    // Predicated region
    $region2: #{flowformer_layer.2} parent=1 // pred_check
      _
    $region3: #{flowformer_layer.2} parent=1 // pred_check_branch
      %17 = sbr.rel (0) target = $region5
    $region4: #{flowformer_layer.2} parent=1 // pred_region
      %s19 = ssub.s32 512, 512
      %20 = vsyncadd [#allocation3], %s19
      %s21 = sshll.u32 [#allocation2], 4
      %s22 = int_to_ptr.vmem [resolvable:$true] %s21
      %27 = dma.hbm_to_vmem [thread:$0]  %s0, 512, %s22, [#allocation3], 128, 128, 8
    $region5: #{flowformer_layer.2} parent=1 // pred_fallthru
      _
    // Predicated region
    $region6: #{flowformer_layer.2} parent=1 // pred_check
      _
    $region7: #{flowformer_layer.2} parent=1 // pred_check_branch
      %29 = sbr.rel (0) target = $region9
    $region8: #{flowformer_layer.2} parent=1 // pred_region
      %s31 = ssub.s32 6144, 6144
      %32 = vsyncadd [#allocation5], %s31
      %s33 = sshll.u32 [#allocation4], 4
      %s34 = int_to_ptr.vmem [resolvable:$true] %s33
      %39 = dma.hbm_to_vmem [thread:$0]  %s1, 6144, %s34, [#allocation5], 384, 384, 24
    $region9: #{flowformer_layer.2} parent=1 // pred_fallthru
      _
    // Predicated region
    $region10: #{flowformer_layer.2} parent=1 // pred_check
      _
    $region11: #{flowformer_layer.2} parent=1 // pred_check_branch
      %41 = sbr.rel (0) target = $region13
    $region12: #{flowformer_layer.2} parent=1 // pred_region
      _
    $region13: #{flowformer_layer.2} parent=1 // pred_fallthru
      _
    // Predicated region
    $region14: #{flowformer_layer.2} parent=1 // pred_check
      _
    $region15: #{flowformer_layer.2} parent=1 // pred_check_branch
      %43 = sbr.rel (0) target = $region17
    $region16: #{flowformer_layer.2} parent=1 // pred_region
      _
    $region17: #{flowformer_layer.2} parent=1 // pred_fallthru
      _
    // Predicated region
    $region18: #{flowformer_layer.2} parent=1 // pred_check
      _
    $region19: #{flowformer_layer.2} parent=1 // pred_check_branch
      %45 = sbr.rel (0) target = $region21
    $region20: #{flowformer_layer.2} parent=1 // pred_region
      _
    $region21: #{flowformer_layer.2} parent=1 // pred_fallthru
      _
    // Predicated region
    $region22: #{flowformer_layer.2} parent=1 // pred_check
      _
    $region23: #{flowformer_layer.2} parent=1 // pred_check_branch
      %47 = sbr.rel (0) target = $region25
    $region24: #{flowformer_layer.2} parent=1 // pred_region
      _
    $region25: #{flowformer_layer.2} parent=1 // pred_fallthru
      _
    // Predicated region
    $region26: #{flowformer_layer.2} parent=1 // pred_check
      _
    $region27: #{flowformer_layer.2} parent=1 // pred_check_branch
      %49 = sbr.rel (0) target = $region29
    $region28: #{flowformer_layer.2} parent=1 // pred_region
      _
    $region29: #{flowformer_layer.2} parent=1 // pred_fallthru
      _
    // Predicated region
    $region30: #{flowformer_layer.2} parent=1 // pred_check
      _
    $region31: #{flowformer_layer.2} parent=1 // pred_check_branch
      %51 = sbr.rel (0) target = $region33
    $region32: #{flowformer_layer.2} parent=1 // pred_region
      _
    $region33: #{flowformer_layer.2} parent=1 // pred_fallthru
      _
    // Predicated region
    $region34: #{flowformer_layer.2} parent=1 // pred_check
      _
    $region35: #{flowformer_layer.2} parent=1 // pred_check_branch
      %53 = sbr.rel (0) target = $region37
    $region36: #{flowformer_layer.2} parent=1 // pred_region
      %s55 = ssub.s32 2048, 2048
      %56 = vsyncadd [#allocation5], %s55
      %s57 = sshll.u32 [#allocation6], 4
      %s58 = int_to_ptr.vmem [resolvable:$true] %s57
      %63 = dma.hbm_to_vmem [thread:$0]  %s8, 2048, %s58, [#allocation5], 128, 128, 8
    $region37: #{flowformer_layer.2} parent=1 // pred_fallthru
      _
    // Predicated region
    $region38: #{flowformer_layer.2} parent=1 // pred_check
      _
    $region39: #{flowformer_layer.2} parent=1 // pred_check_branch
      %65 = sbr.rel (0) target = $region41
    $region40: #{flowformer_layer.2} parent=1 // pred_region
      %66 = dma.done [#allocation3], 512
    $region41: #{flowformer_layer.2} parent=1 // pred_fallthru
      _
    // Predicated region
    $region42: #{flowformer_layer.2} parent=1 // pred_check
      _
    $region43: #{flowformer_layer.2} parent=1 // pred_check_branch
      %68 = sbr.rel (0) target = $region45
    $region44: #{flowformer_layer.2} parent=1 // pred_region
      %69 = dma.done [#allocation5], 6144
    $region45: #{flowformer_layer.2} parent=1 // pred_fallthru
      _
    // Predicated region
    $region46: #{flowformer_layer.2} parent=1 // pred_check
      _
    $region47: #{flowformer_layer.2} parent=1 // pred_check_branch
      %71 = sbr.rel (0) target = $region49
    $region48: #{flowformer_layer.2} parent=1 // pred_region
      %72 = dma.done [#allocation5], 2048
    $region49: #{flowformer_layer.2} parent=1 // pred_fallthru
      _
    %v73 = vld [vmem:[#allocation2] sm:$0xff]
    %v74 = vld [vmem:[#allocation2 + $0x8] sm:$0xff]
    %v75 = vld [vmem:[#allocation2 + $0x10] sm:$0xff]
    %v76 = vld [vmem:[#allocation2 + $0x18] sm:$0xff]
    %v77 = vld [vmem:[%s5] sm:$0x1]
    %v78 = vld [vmem:[%s6] sm:$0x1]
    %79 = vadd.xlane.f32.xlu0 %v73
    %v80 = vpop.xlane.xlu0 %79
    %81 = vadd.xlane.f32.xlu0 %v74
    %v82 = vpop.xlane.xlu0 %81
    %83 = vadd.xlane.f32.xlu0 %v75
    %v84 = vpop.xlane.xlu0 %83
    %85 = vadd.xlane.f32.xlu0 %v76
    %v86 = vpop.xlane.xlu0 %85
    %v87 = vrcp.pop 128.0
    %v88 = vmul.f32 %v80, %v87
    %v89 = vmul.f32 %v82, %v87
    %v90 = vmul.f32 %v84, %v87
    %v91 = vmul.f32 %v86, %v87
    %v92 = vsub.f32 %v73, %v88
    %v93 = vsub.f32 %v74, %v89
    %v94 = vsub.f32 %v75, %v90
    %v95 = vsub.f32 %v76, %v91
    %v96 = vmul.f32 %v92, %v92
    %v97 = vmul.f32 %v93, %v93
    %v98 = vmul.f32 %v94, %v94
    %v99 = vmul.f32 %v95, %v95
    %100 = vadd.xlane.f32.xlu0 %v96
    %v101 = vpop.xlane.xlu0 %100
    %102 = vadd.xlane.f32.xlu0 %v97
    %v103 = vpop.xlane.xlu0 %102
    %104 = vadd.xlane.f32.xlu0 %v98
    %v105 = vpop.xlane.xlu0 %104
    %106 = vadd.xlane.f32.xlu0 %v99
    %v107 = vpop.xlane.xlu0 %106
    %v108 = vmul.f32 %v101, %v87
    %v109 = vmul.f32 %v103, %v87
    %v110 = vmul.f32 %v105, %v87
    %v111 = vmul.f32 %v107, %v87
    %v112 = vadd.f32 %v108, 1e-05
    %v113 = vadd.f32 %v109, 1e-05
    %v114 = vadd.f32 %v110, 1e-05
    %v115 = vadd.f32 %v111, 1e-05
    %v116 = vrsqrt.pop %v112
    %v117 = vrsqrt.pop %v113
    %v118 = vrsqrt.pop %v114
    %v119 = vrsqrt.pop %v115
    %v120 = vmul.f32 %v92, %v116
    %v121 = vmul.f32 %v93, %v117
    %v122 = vmul.f32 %v94, %v118
    %v123 = vmul.f32 %v95, %v119
    %v125 = vlaneseq
    %v126 = vshrl.u32 %v125, 7
    %v127 = vsub.s32 0, %v126
    %v128 = vrot.slane %v77, %v127
    %v130 = vmul.f32 %v120, %v128
    %v131 = vmul.f32 %v121, %v128
    %v132 = vmul.f32 %v122, %v128
    %v133 = vmul.f32 %v123, %v128
    %v135 = vlaneseq
    %v136 = vshrl.u32 %v135, 7
    %v137 = vsub.s32 0, %v136
    %v138 = vrot.slane %v78, %v137
    %v140 = vadd.f32 %v130, %v138
    %v141 = vadd.f32 %v131, %v138
    %v142 = vadd.f32 %v132, %v138
    %v143 = vadd.f32 %v133, %v138
    %v144 = vld [vmem:[#allocation4] sm:$0xff]
    %v145 = vld [vmem:[#allocation4 + $0x8] sm:$0xff]
    %v146 = vld [vmem:[#allocation4 + $0x10] sm:$0xff]
    %v147 = vld [vmem:[#allocation4 + $0x18] sm:$0xff]
    %v148 = vld [vmem:[#allocation4 + $0x20] sm:$0xff]
    %v149 = vld [vmem:[#allocation4 + $0x28] sm:$0xff]
    %v150 = vld [vmem:[#allocation4 + $0x30] sm:$0xff]
    %v151 = vld [vmem:[#allocation4 + $0x38] sm:$0xff]
    %v152 = vld [vmem:[#allocation4 + $0x40] sm:$0xff]
    %v153 = vld [vmem:[#allocation4 + $0x48] sm:$0xff]
    %v154 = vld [vmem:[#allocation4 + $0x50] sm:$0xff]
    %v155 = vld [vmem:[#allocation4 + $0x58] sm:$0xff]
    %v156 = vld [vmem:[#allocation4 + $0x60] sm:$0xff]
    %v157 = vld [vmem:[#allocation4 + $0x68] sm:$0xff]
    %v158 = vld [vmem:[#allocation4 + $0x70] sm:$0xff]
    %v159 = vld [vmem:[#allocation4 + $0x78] sm:$0xff]
    %v160 = vld [vmem:[#allocation4 + $0x80] sm:$0xff]
    %v161 = vld [vmem:[#allocation4 + $0x88] sm:$0xff]
    %v162 = vld [vmem:[#allocation4 + $0x90] sm:$0xff]
    %v163 = vld [vmem:[#allocation4 + $0x98] sm:$0xff]
    %v164 = vld [vmem:[#allocation4 + $0xa0] sm:$0xff]
    %v165 = vld [vmem:[#allocation4 + $0xa8] sm:$0xff]
    %v166 = vld [vmem:[#allocation4 + $0xb0] sm:$0xff]
    %v167 = vld [vmem:[#allocation4 + $0xb8] sm:$0xff]
    %v168 = vld [vmem:[#allocation4 + $0xc0] sm:$0xff]
    %v169 = vld [vmem:[#allocation4 + $0xc8] sm:$0xff]
    %v170 = vld [vmem:[#allocation4 + $0xd0] sm:$0xff]
    %v171 = vld [vmem:[#allocation4 + $0xd8] sm:$0xff]
    %v172 = vld [vmem:[#allocation4 + $0xe0] sm:$0xff]
    %v173 = vld [vmem:[#allocation4 + $0xe8] sm:$0xff]
    %v174 = vld [vmem:[#allocation4 + $0xf0] sm:$0xff]
    %v175 = vld [vmem:[#allocation4 + $0xf8] sm:$0xff]
    %v176 = vld [vmem:[#allocation4 + $0x100] sm:$0xff]
    %v177 = vld [vmem:[#allocation4 + $0x108] sm:$0xff]
    %v178 = vld [vmem:[#allocation4 + $0x110] sm:$0xff]
    %v179 = vld [vmem:[#allocation4 + $0x118] sm:$0xff]
    %v180 = vld [vmem:[#allocation4 + $0x120] sm:$0xff]
    %v181 = vld [vmem:[#allocation4 + $0x128] sm:$0xff]
    %v182 = vld [vmem:[#allocation4 + $0x130] sm:$0xff]
    %v183 = vld [vmem:[#allocation4 + $0x138] sm:$0xff]
    %v184 = vld [vmem:[#allocation4 + $0x140] sm:$0xff]
    %v185 = vld [vmem:[#allocation4 + $0x148] sm:$0xff]
    %v186 = vld [vmem:[#allocation4 + $0x150] sm:$0xff]
    %v187 = vld [vmem:[#allocation4 + $0x158] sm:$0xff]
    %v188 = vld [vmem:[#allocation4 + $0x160] sm:$0xff]
    %v189 = vld [vmem:[#allocation4 + $0x168] sm:$0xff]
    %v190 = vld [vmem:[#allocation4 + $0x170] sm:$0xff]
    %v191 = vld [vmem:[#allocation4 + $0x178] sm:$0xff]
    %v192 = vld [vmem:[%s2] sm:$0x7]
    %v194 = vlaneseq
    %v195 = vshrl.u32 %v194, 7
    %v196 = vsub.s32 0, %v195
    %v197 = vrot.slane %v192, %v196
    %v198 = vlaneseq
    %v199 = vshrl.u32 %v198, 7
    %v200 = vsub.s32 1, %v199
    %v201 = vrot.slane %v192, %v200
    %v202 = vlaneseq
    %v203 = vshrl.u32 %v202, 7
    %v204 = vsub.s32 2, %v203
    %v205 = vrot.slane %v192, %v204
    %209 = vmatprep.subr.mxu0 %v190
    %210 = vmatpush1.msra.mxu0 %v189
    %211 = vmatprep.subr.mxu0 %v187
    %212 = vmatpush1.msra.mxu0 %v186
    %213 = vmatprep.subr.mxu0 %v184
    %214 = vmatpush1.msra.mxu0 %v183
    %215 = vmatprep.subr.mxu0 %v181
    %216 = vmatpush1.msra.mxu0 %v180
    %217 = vmatprep.subr.mxu0 %v178
    %218 = vmatpush1.msra.mxu0 %v177
    %219 = vmatprep.subr.mxu0 %v175
    %220 = vmatpush1.msra.mxu0 %v174
    %221 = vmatprep.subr.mxu0 %v172
    %222 = vmatpush1.msra.mxu0 %v171
    %223 = vmatprep.subr.mxu0 %v169
    %224 = vmatpush1.msra.mxu0 %v168
    %225 = vmatprep.subr.mxu0 %v166
    %226 = vmatpush1.msra.mxu0 %v165
    %227 = vmatprep.subr.mxu0 %v163
    %228 = vmatpush1.msra.mxu0 %v162
    %229 = vmatprep.subr.mxu0 %v160
    %230 = vmatpush1.msra.mxu0 %v159
    %231 = vmatprep.subr.mxu0 %v157
    %232 = vmatpush1.msra.mxu0 %v156
    %233 = vmatprep.subr.mxu0 %v154
    %234 = vmatpush1.msra.mxu0 %v153
    %235 = vmatprep.subr.mxu0 %v151
    %236 = vmatpush1.msra.mxu0 %v150
    %237 = vmatprep.subr.mxu0 %v148
    %238 = vmatpush1.msra.mxu0 %v147
    %239 = vmatprep.subr.mxu0 %v145
    %240 = vmatpush1.msra.mxu0 %v144
    %241 = vmatprep.subr.mxu0 0.0
    %242 = vmatpush2.msra.mxu0 0.0
    %243 = vmatprep.subr.mxu0 0.0
    %244 = vmatpush2.msra.mxu0 0.0
    %245 = vmatprep.subr.mxu0 0.0
    %246 = vmatpush2.msra.mxu0 0.0
    %247 = vmatprep.subr.mxu0 0.0
    %248 = vmatpush2.msra.mxu0 0.0
    %249 = vmatprep.subr.mxu0 0.0
    %250 = vmatpush2.msra.mxu0 0.0
    %251 = vmatprep.subr.mxu0 0.0
    %252 = vmatpush2.msra.mxu0 0.0
    %253 = vmatprep.subr.mxu0 0.0
    %254 = vmatpush2.msra.mxu0 0.0
    %255 = vmatprep.subr.mxu0 0.0
    %256 = vmatpush2.msra.mxu0 0.0
    %257 = vmatprep.subr.mxu0 0.0
    %258 = vmatpush2.msra.mxu0 0.0
    %259 = vmatprep.subr.mxu0 0.0
    %260 = vmatpush2.msra.mxu0 0.0
    %261 = vmatprep.subr.mxu0 0.0
    %262 = vmatpush2.msra.mxu0 0.0
    %263 = vmatprep.subr.mxu0 0.0
    %264 = vmatpush2.msra.mxu0 0.0
    %265 = vmatprep.subr.mxu0 0.0
    %266 = vmatpush2.msra.mxu0 0.0
    %267 = vmatprep.subr.mxu0 0.0
    %268 = vmatpush2.msra.mxu0 0.0
    %269 = vmatprep.subr.mxu0 0.0
    %270 = vmatpush2.msra.mxu0 0.0
    %271 = vmatprep.subr.mxu0 0.0
    %272 = vmatpush2.msra.mxu0 0.0
    %273 = vmatprep.mubr.f32.mxu0 0.0
    %274 = vmatmul.mubr.f32.gmra.mxu0 %v140
    %v275 = vpop.f32.mrf.mxu0
    %v276 = vadd.f32 %v197, %v275
    %v277 = vpop.f32.mrf.mxu0
    %v278 = vadd.f32 %v201, %v277
    %279 = vmatprep.mubr.f32.mxu0 0.0
    %280 = vmatmul.mubr.f32.gmra.mxu0 %v141
    %v281 = vpop.f32.mrf.mxu0
    %v282 = vadd.f32 %v197, %v281
    %v283 = vpop.f32.mrf.mxu0
    %v284 = vadd.f32 %v201, %v283
    %285 = vmatprep.mubr.f32.mxu0 0.0
    %286 = vmatmul.mubr.f32.gmra.mxu0 %v142
    %v287 = vpop.f32.mrf.mxu0
    %v288 = vadd.f32 %v197, %v287
    %v289 = vpop.f32.mrf.mxu0
    %v290 = vadd.f32 %v201, %v289
    %291 = vmatprep.mubr.f32.mxu0 0.0
    %292 = vmatmul.mubr.f32.gmra.mxu0 %v143
    %v293 = vpop.f32.mrf.mxu0
    %v294 = vadd.f32 %v197, %v293
    %v295 = vpop.f32.mrf.mxu0
    %v296 = vadd.f32 %v201, %v295
    %297 = vdwg.mxu0
    %298 = vmatprep.subr.mxu0 0.0
    %299 = vmatpush1.msra.mxu0 %v191
    %300 = vmatprep.subr.mxu0 0.0
    %301 = vmatpush1.msra.mxu0 %v188
    %302 = vmatprep.subr.mxu0 0.0
    %303 = vmatpush1.msra.mxu0 %v185
    %304 = vmatprep.subr.mxu0 0.0
    %305 = vmatpush1.msra.mxu0 %v182
    %306 = vmatprep.subr.mxu0 0.0
    %307 = vmatpush1.msra.mxu0 %v179
    %308 = vmatprep.subr.mxu0 0.0
    %309 = vmatpush1.msra.mxu0 %v176
    %310 = vmatprep.subr.mxu0 0.0
    %311 = vmatpush1.msra.mxu0 %v173
    %312 = vmatprep.subr.mxu0 0.0
    %313 = vmatpush1.msra.mxu0 %v170
    %314 = vmatprep.subr.mxu0 0.0
    %315 = vmatpush1.msra.mxu0 %v167
    %316 = vmatprep.subr.mxu0 0.0
    %317 = vmatpush1.msra.mxu0 %v164
    %318 = vmatprep.subr.mxu0 0.0
    %319 = vmatpush1.msra.mxu0 %v161
    %320 = vmatprep.subr.mxu0 0.0
    %321 = vmatpush1.msra.mxu0 %v158
    %322 = vmatprep.subr.mxu0 0.0
    %323 = vmatpush1.msra.mxu0 %v155
    %324 = vmatprep.subr.mxu0 0.0
    %325 = vmatpush1.msra.mxu0 %v152
    %326 = vmatprep.subr.mxu0 0.0
    %327 = vmatpush1.msra.mxu0 %v149
    %328 = vmatprep.subr.mxu0 0.0
    %329 = vmatpush1.msra.mxu0 %v146
    %330 = vmatprep.subr.mxu0 0.0
    %331 = vmatpush2.msra.mxu0 0.0
    %332 = vmatprep.subr.mxu0 0.0
    %333 = vmatpush2.msra.mxu0 0.0
    %334 = vmatprep.subr.mxu0 0.0
    %335 = vmatpush2.msra.mxu0 0.0
    %336 = vmatprep.subr.mxu0 0.0
    %337 = vmatpush2.msra.mxu0 0.0
    %338 = vmatprep.subr.mxu0 0.0
    %339 = vmatpush2.msra.mxu0 0.0
    %340 = vmatprep.subr.mxu0 0.0
    %341 = vmatpush2.msra.mxu0 0.0
    %342 = vmatprep.subr.mxu0 0.0
    %343 = vmatpush2.msra.mxu0 0.0
    %344 = vmatprep.subr.mxu0 0.0
    %345 = vmatpush2.msra.mxu0 0.0
    %346 = vmatprep.subr.mxu0 0.0
    %347 = vmatpush2.msra.mxu0 0.0
    %348 = vmatprep.subr.mxu0 0.0
    %349 = vmatpush2.msra.mxu0 0.0
    %350 = vmatprep.subr.mxu0 0.0
    %351 = vmatpush2.msra.mxu0 0.0
    %352 = vmatprep.subr.mxu0 0.0
    %353 = vmatpush2.msra.mxu0 0.0
    %354 = vmatprep.subr.mxu0 0.0
    %355 = vmatpush2.msra.mxu0 0.0
    %356 = vmatprep.subr.mxu0 0.0
    %357 = vmatpush2.msra.mxu0 0.0
    %358 = vmatprep.subr.mxu0 0.0
    %359 = vmatpush2.msra.mxu0 0.0
    %360 = vmatprep.subr.mxu0 0.0
    %361 = vmatpush2.msra.mxu0 0.0
    %362 = vmatprep.mubr.f32.mxu0 0.0
    %363 = vmatmul.mubr.f32.gmra.mxu0 %v140
    %v364 = vpop.f32.mrf.mxu0
    %v365 = vadd.f32 %v205, %v364
    %v366 = vpop.f32.mrf.mxu0
    %367 = vmatprep.mubr.f32.mxu0 0.0
    %368 = vmatmul.mubr.f32.gmra.mxu0 %v141
    %v369 = vpop.f32.mrf.mxu0
    %v370 = vadd.f32 %v205, %v369
    %v371 = vpop.f32.mrf.mxu0
    %372 = vmatprep.mubr.f32.mxu0 0.0
    %373 = vmatmul.mubr.f32.gmra.mxu0 %v142
    %v374 = vpop.f32.mrf.mxu0
    %v375 = vadd.f32 %v205, %v374
    %v376 = vpop.f32.mrf.mxu0
    %377 = vmatprep.mubr.f32.mxu0 0.0
    %378 = vmatmul.mubr.f32.gmra.mxu0 %v143
    %v379 = vpop.f32.mrf.mxu0
    %v380 = vadd.f32 %v205, %v379
    %v381 = vpop.f32.mrf.mxu0
    %382 = vdwg.mxu0
    %v383 = vxor.u32 %v276, 2147483648
    %v384 = vxor.u32 %v282, 2147483648
    %v385 = vxor.u32 %v288, 2147483648
    %v386 = vxor.u32 %v294, 2147483648
    %v387 = vmul.f32 %v383, 1.442695
    %v388 = vpow.pop %v387
    %v389 = vmul.f32 %v384, 1.442695
    %v390 = vpow.pop %v389
    %v391 = vmul.f32 %v385, 1.442695
    %v392 = vpow.pop %v391
    %v393 = vmul.f32 %v386, 1.442695
    %v394 = vpow.pop %v393
    %v395 = vadd.f32 %v388, 1.0
    %v396 = vadd.f32 %v390, 1.0
    %v397 = vadd.f32 %v392, 1.0
    %v398 = vadd.f32 %v394, 1.0
    %v399 = vrcp.pop %v395
    %v400 = vmul.f32 1.0, %v399
    %v401 = vrcp.pop %v396
    %v402 = vmul.f32 1.0, %v401
    %v403 = vrcp.pop %v397
    %v404 = vmul.f32 1.0, %v403
    %v405 = vrcp.pop %v398
    %v406 = vmul.f32 1.0, %v405
    %v407 = vxor.u32 %v278, 2147483648
    %v408 = vxor.u32 %v284, 2147483648
    %v409 = vxor.u32 %v290, 2147483648
    %v410 = vxor.u32 %v296, 2147483648
    %v411 = vmul.f32 %v407, 1.442695
    %v412 = vpow.pop %v411
    %v413 = vmul.f32 %v408, 1.442695
    %v414 = vpow.pop %v413
    %v415 = vmul.f32 %v409, 1.442695
    %v416 = vpow.pop %v415
    %v417 = vmul.f32 %v410, 1.442695
    %v418 = vpow.pop %v417
    %v419 = vadd.f32 %v412, 1.0
    %v420 = vadd.f32 %v414, 1.0
    %v421 = vadd.f32 %v416, 1.0
    %v422 = vadd.f32 %v418, 1.0
    %v423 = vrcp.pop %v419
    %v424 = vmul.f32 1.0, %v423
    %v425 = vrcp.pop %v420
    %v426 = vmul.f32 1.0, %v425
    %v427 = vrcp.pop %v421
    %v428 = vmul.f32 1.0, %v427
    %v429 = vrcp.pop %v422
    %v430 = vmul.f32 1.0, %v429
    %v431 = vld [vmem:[%s7] sm:$0xff]
    %v432 = vld [vmem:[%s7 + $0x8] sm:$0xff]
    %v433 = vld [vmem:[%s7 + $0x10] sm:$0xff]
    %v434 = vld [vmem:[%s7 + $0x18] sm:$0xff]
    %v435 = vld [vmem:[%s7 + $0x20] sm:$0xff]
    %v436 = vld [vmem:[%s7 + $0x28] sm:$0xff]
    %v437 = vld [vmem:[%s7 + $0x30] sm:$0xff]
    %v438 = vld [vmem:[%s7 + $0x38] sm:$0xff]
    %v439 = vld [vmem:[%s7 + $0x40] sm:$0xff]
    %v440 = vld [vmem:[%s7 + $0x48] sm:$0xff]
    %v441 = vld [vmem:[%s7 + $0x50] sm:$0xff]
    %v442 = vld [vmem:[%s7 + $0x58] sm:$0xff]
    %v443 = vld [vmem:[%s7 + $0x60] sm:$0xff]
    %v444 = vld [vmem:[%s7 + $0x68] sm:$0xff]
    %v445 = vld [vmem:[%s7 + $0x70] sm:$0xff]
    %v446 = vld [vmem:[%s7 + $0x78] sm:$0xff]
    %v447 = vadd.f32 %v400, 1e-06
    %v448 = vadd.f32 %v402, 1e-06
    %v449 = vadd.f32 %v404, 1e-06
    %v450 = vadd.f32 %v406, 1e-06
    %v451 = vadd.f32 %v424, 1e-06
    %v452 = vadd.f32 %v426, 1e-06
    %v453 = vadd.f32 %v428, 1e-06
    %v454 = vadd.f32 %v430, 1e-06
    %v455 = vadd.f32 %v424, %v426
    %v456 = vrot.slane %v455, 4
    %v457 = vadd.f32 %v455, %v456
    %v458 = vrot.slane %v457, 2
    %v459 = vadd.f32 %v457, %v458
    %v460 = vrot.slane %v459, 1
    %v461 = vadd.f32 %v459, %v460
    %v462 = vadd.f32 %v428, %v430
    %v463 = vrot.slane %v462, 4
    %v464 = vadd.f32 %v462, %v463
    %v465 = vrot.slane %v464, 2
    %v466 = vadd.f32 %v464, %v465
    %v467 = vrot.slane %v466, 1
    %v468 = vadd.f32 %v466, %v467
    %v469 = vadd.f32 %v461, 1e-06
    %v470 = vadd.f32 %v468, 1e-06
    %v471 = vadd.f32 %v400, %v402
    %v472 = vrot.slane %v471, 4
    %v473 = vadd.f32 %v471, %v472
    %v474 = vrot.slane %v473, 2
    %v475 = vadd.f32 %v473, %v474
    %v476 = vrot.slane %v475, 1
    %v477 = vadd.f32 %v475, %v476
    %v478 = vadd.f32 %v404, %v406
    %v479 = vrot.slane %v478, 4
    %v480 = vadd.f32 %v478, %v479
    %v481 = vrot.slane %v480, 2
    %v482 = vadd.f32 %v480, %v481
    %v483 = vrot.slane %v482, 1
    %v484 = vadd.f32 %v482, %v483
    %v485 = vadd.f32 %v477, 1e-06
    %v486 = vadd.f32 %v484, 1e-06
    %v487 = vmul.f32 %v447, %v469
    %v488 = vmul.f32 %v448, %v469
    %v489 = vmul.f32 %v449, %v470
    %v490 = vmul.f32 %v450, %v470
    %v491 = vmul.f32 %v451, %v485
    %v492 = vmul.f32 %v452, %v485
    %v493 = vmul.f32 %v453, %v486
    %v494 = vmul.f32 %v454, %v486
    %495 = vmatprep.subr.mxu0 0.0
    %496 = vmatpush1.msra.mxu0 %v446
    %497 = vmatprep.subr.mxu0 0.0
    %498 = vmatpush1.msra.mxu0 %v445
    %499 = vmatprep.subr.mxu0 0.0
    %500 = vmatpush1.msra.mxu0 %v444
    %501 = vmatprep.subr.mxu0 0.0
    %502 = vmatpush1.msra.mxu0 %v443
    %503 = vmatprep.subr.mxu0 0.0
    %504 = vmatpush1.msra.mxu0 %v442
    %505 = vmatprep.subr.mxu0 0.0
    %506 = vmatpush1.msra.mxu0 %v441
    %507 = vmatprep.subr.mxu0 0.0
    %508 = vmatpush1.msra.mxu0 %v440
    %509 = vmatprep.subr.mxu0 0.0
    %510 = vmatpush1.msra.mxu0 %v439
    %511 = vmatprep.subr.mxu0 0.0
    %512 = vmatpush1.msra.mxu0 %v438
    %513 = vmatprep.subr.mxu0 0.0
    %514 = vmatpush1.msra.mxu0 %v437
    %515 = vmatprep.subr.mxu0 0.0
    %516 = vmatpush1.msra.mxu0 %v436
    %517 = vmatprep.subr.mxu0 0.0
    %518 = vmatpush1.msra.mxu0 %v435
    %519 = vmatprep.subr.mxu0 0.0
    %520 = vmatpush1.msra.mxu0 %v434
    %521 = vmatprep.subr.mxu0 0.0
    %522 = vmatpush1.msra.mxu0 %v433
    %523 = vmatprep.subr.mxu0 0.0
    %524 = vmatpush1.msra.mxu0 %v432
    %525 = vmatprep.subr.mxu0 0.0
    %526 = vmatpush1.msra.mxu0 %v431
    %527 = vmatprep.subr.mxu0 0.0
    %528 = vmatpush2.msra.mxu0 0.0
    %529 = vmatprep.subr.mxu0 0.0
    %530 = vmatpush2.msra.mxu0 0.0
    %531 = vmatprep.subr.mxu0 0.0
    %532 = vmatpush2.msra.mxu0 0.0
    %533 = vmatprep.subr.mxu0 0.0
    %534 = vmatpush2.msra.mxu0 0.0
    %535 = vmatprep.subr.mxu0 0.0
    %536 = vmatpush2.msra.mxu0 0.0
    %537 = vmatprep.subr.mxu0 0.0
    %538 = vmatpush2.msra.mxu0 0.0
    %539 = vmatprep.subr.mxu0 0.0
    %540 = vmatpush2.msra.mxu0 0.0
    %541 = vmatprep.subr.mxu0 0.0
    %542 = vmatpush2.msra.mxu0 0.0
    %543 = vmatprep.subr.mxu0 0.0
    %544 = vmatpush2.msra.mxu0 0.0
    %545 = vmatprep.subr.mxu0 0.0
    %546 = vmatpush2.msra.mxu0 0.0
    %547 = vmatprep.subr.mxu0 0.0
    %548 = vmatpush2.msra.mxu0 0.0
    %549 = vmatprep.subr.mxu0 0.0
    %550 = vmatpush2.msra.mxu0 0.0
    %551 = vmatprep.subr.mxu0 0.0
    %552 = vmatpush2.msra.mxu0 0.0
    %553 = vmatprep.subr.mxu0 0.0
    %554 = vmatpush2.msra.mxu0 0.0
    %555 = vmatprep.subr.mxu0 0.0
    %556 = vmatpush2.msra.mxu0 0.0
    %557 = vmatprep.subr.mxu0 0.0
    %558 = vmatpush2.msra.mxu0 0.0
    %559 = vmatprep.mubr.f32.mxu0 0.0
    %560 = vmatmul.mubr.f32.gmra.mxu0 %v487
    %v561 = vpop.f32.mrf.mxu0
    %v562 = vadd.f32 0.0, %v561
    %v563 = vpop.f32.mrf.mxu0
    %564 = vmatprep.mubr.f32.mxu0 0.0
    %565 = vmatmul.mubr.f32.gmra.mxu0 %v488
    %v566 = vpop.f32.mrf.mxu0
    %v567 = vadd.f32 0.0, %v566
    %v568 = vpop.f32.mrf.mxu0
    %569 = vmatprep.mubr.f32.mxu0 0.0
    %570 = vmatmul.mubr.f32.gmra.mxu0 %v489
    %v571 = vpop.f32.mrf.mxu0
    %v572 = vadd.f32 0.0, %v571
    %v573 = vpop.f32.mrf.mxu0
    %574 = vmatprep.mubr.f32.mxu0 0.0
    %575 = vmatmul.mubr.f32.gmra.mxu0 %v490
    %v576 = vpop.f32.mrf.mxu0
    %v577 = vadd.f32 0.0, %v576
    %v578 = vpop.f32.mrf.mxu0
    %579 = vmatprep.mubr.f32.mxu0 0.0
    %580 = vmatmul.mubr.f32.gmra.mxu0 %v491
    %v581 = vpop.f32.mrf.mxu0
    %v582 = vadd.f32 0.0, %v581
    %v583 = vpop.f32.mrf.mxu0
    %584 = vmatprep.mubr.f32.mxu0 0.0
    %585 = vmatmul.mubr.f32.gmra.mxu0 %v492
    %v586 = vpop.f32.mrf.mxu0
    %v587 = vadd.f32 0.0, %v586
    %v588 = vpop.f32.mrf.mxu0
    %589 = vmatprep.mubr.f32.mxu0 0.0
    %590 = vmatmul.mubr.f32.gmra.mxu0 %v493
    %v591 = vpop.f32.mrf.mxu0
    %v592 = vadd.f32 0.0, %v591
    %v593 = vpop.f32.mrf.mxu0
    %594 = vmatprep.mubr.f32.mxu0 0.0
    %595 = vmatmul.mubr.f32.gmra.mxu0 %v494
    %v596 = vpop.f32.mrf.mxu0
    %v597 = vadd.f32 0.0, %v596
    %v598 = vpop.f32.mrf.mxu0
    %599 = vdwg.mxu0
    %v600 = vrcp.pop %v562
    %v601 = vmul.f32 1.0, %v600
    %v602 = vrcp.pop %v567
    %v603 = vmul.f32 1.0, %v602
    %v604 = vrcp.pop %v572
    %v605 = vmul.f32 1.0, %v604
    %v606 = vrcp.pop %v577
    %v607 = vmul.f32 1.0, %v606
    %v608 = vrcp.pop %v582
    %v609 = vmul.f32 1.0, %v608
    %v610 = vrcp.pop %v587
    %v611 = vmul.f32 1.0, %v610
    %v612 = vrcp.pop %v592
    %v613 = vmul.f32 1.0, %v612
    %v614 = vrcp.pop %v597
    %v615 = vmul.f32 1.0, %v614
    %vm616 = vcmask 31744
    %v618 = vsel %vm616, %v601, 0
    %v621 = vsel %vm616, %v603, 0
    %v624 = vsel %vm616, %v605, 0
    %v627 = vsel %vm616, %v607, 0
    %v630 = vsel %vm616, %v609, 0
    %v633 = vsel %vm616, %v611, 0
    %v636 = vsel %vm616, %v613, 0
    %v639 = vsel %vm616, %v615, 0
    %v642 = vsel %vm616, %v431, 0
    %v645 = vsel %vm616, %v432, 0
    %v648 = vsel %vm616, %v433, 0
    %v651 = vsel %vm616, %v434, 0
    %v654 = vsel %vm616, %v435, 0
    %v657 = vsel %vm616, %v436, 0
    %v660 = vsel %vm616, %v437, 0
    %v663 = vsel %vm616, %v438, 0
    %v666 = vsel %vm616, %v439, 0
    %v669 = vsel %vm616, %v440, 0
    %v672 = vsel %vm616, %v441, 0
    %v675 = vsel %vm616, %v442, 0
    %v678 = vsel %vm616, %v443, 0
    %v681 = vsel %vm616, %v444, 0
    %v684 = vsel %vm616, %v445, 0
    %v687 = vsel %vm616, %v446, 0
    %689 = vmatprep.subr.mxu0 0.0
    %690 = vmatpush1.xpose.msra.mxu0 %v687
    %691 = vmatprep.subr.mxu0 0.0
    %692 = vmatpush1.xpose.msra.mxu0 %v684
    %693 = vmatprep.subr.mxu0 0.0
    %694 = vmatpush1.xpose.msra.mxu0 %v681
    %695 = vmatprep.subr.mxu0 0.0
    %696 = vmatpush1.xpose.msra.mxu0 %v678
    %697 = vmatprep.subr.mxu0 0.0
    %698 = vmatpush1.xpose.msra.mxu0 %v675
    %699 = vmatprep.subr.mxu0 0.0
    %700 = vmatpush1.xpose.msra.mxu0 %v672
    %701 = vmatprep.subr.mxu0 0.0
    %702 = vmatpush1.xpose.msra.mxu0 %v669
    %703 = vmatprep.subr.mxu0 0.0
    %704 = vmatpush1.xpose.msra.mxu0 %v666
    %705 = vmatprep.subr.mxu0 0.0
    %706 = vmatpush1.xpose.msra.mxu0 %v663
    %707 = vmatprep.subr.mxu0 0.0
    %708 = vmatpush1.xpose.msra.mxu0 %v660
    %709 = vmatprep.subr.mxu0 0.0
    %710 = vmatpush1.xpose.msra.mxu0 %v657
    %711 = vmatprep.subr.mxu0 0.0
    %712 = vmatpush1.xpose.msra.mxu0 %v654
    %713 = vmatprep.subr.mxu0 0.0
    %714 = vmatpush1.xpose.msra.mxu0 %v651
    %715 = vmatprep.subr.mxu0 0.0
    %716 = vmatpush1.xpose.msra.mxu0 %v648
    %717 = vmatprep.subr.mxu0 0.0
    %718 = vmatpush1.xpose.msra.mxu0 %v645
    %719 = vmatprep.subr.mxu0 0.0
    %720 = vmatpush1.xpose.msra.mxu0 %v642
    %721 = vmatprep.subr.mxu0 0.0
    %722 = vmatpush2.xpose.msra.mxu0 0.0
    %723 = vmatprep.subr.mxu0 0.0
    %724 = vmatpush2.xpose.msra.mxu0 0.0
    %725 = vmatprep.subr.mxu0 0.0
    %726 = vmatpush2.xpose.msra.mxu0 0.0
    %727 = vmatprep.subr.mxu0 0.0
    %728 = vmatpush2.xpose.msra.mxu0 0.0
    %729 = vmatprep.subr.mxu0 0.0
    %730 = vmatpush2.xpose.msra.mxu0 0.0
    %731 = vmatprep.subr.mxu0 0.0
    %732 = vmatpush2.xpose.msra.mxu0 0.0
    %733 = vmatprep.subr.mxu0 0.0
    %734 = vmatpush2.xpose.msra.mxu0 0.0
    %735 = vmatprep.subr.mxu0 0.0
    %736 = vmatpush2.xpose.msra.mxu0 0.0
    %737 = vmatprep.subr.mxu0 0.0
    %738 = vmatpush2.xpose.msra.mxu0 0.0
    %739 = vmatprep.subr.mxu0 0.0
    %740 = vmatpush2.xpose.msra.mxu0 0.0
    %741 = vmatprep.subr.mxu0 0.0
    %742 = vmatpush2.xpose.msra.mxu0 0.0
    %743 = vmatprep.subr.mxu0 0.0
    %744 = vmatpush2.xpose.msra.mxu0 0.0
    %745 = vmatprep.subr.mxu0 0.0
    %746 = vmatpush2.xpose.msra.mxu0 0.0
    %747 = vmatprep.subr.mxu0 0.0
    %748 = vmatpush2.xpose.msra.mxu0 0.0
    %749 = vmatprep.subr.mxu0 0.0
    %750 = vmatpush2.xpose.msra.mxu0 0.0
    %751 = vmatprep.subr.mxu0 0.0
    %752 = vmatpush2.xpose.msra.mxu0 0.0
    %753 = vmatprep.mubr.f32.mxu0 0.0
    %754 = vmatmul.mubr.f32.gmra.mxu0 %v618
    %v755 = vpop.f32.mrf.mxu0
    %v756 = vadd.f32 0.0, %v755
    %v757 = vpop.f32.mrf.mxu0
    %758 = vmatprep.mubr.f32.mxu0 0.0
    %759 = vmatmul.mubr.f32.gmra.mxu0 %v621
    %v760 = vpop.f32.mrf.mxu0
    %v761 = vadd.f32 0.0, %v760
    %v762 = vpop.f32.mrf.mxu0
    %763 = vmatprep.mubr.f32.mxu0 0.0
    %764 = vmatmul.mubr.f32.gmra.mxu0 %v624
    %v765 = vpop.f32.mrf.mxu0
    %v766 = vadd.f32 0.0, %v765
    %v767 = vpop.f32.mrf.mxu0
    %768 = vmatprep.mubr.f32.mxu0 0.0
    %769 = vmatmul.mubr.f32.gmra.mxu0 %v627
    %v770 = vpop.f32.mrf.mxu0
    %v771 = vadd.f32 0.0, %v770
    %v772 = vpop.f32.mrf.mxu0
    %773 = vmatprep.mubr.f32.mxu0 0.0
    %774 = vmatmul.mubr.f32.gmra.mxu0 %v630
    %v775 = vpop.f32.mrf.mxu0
    %v776 = vadd.f32 0.0, %v775
    %v777 = vpop.f32.mrf.mxu0
    %778 = vmatprep.mubr.f32.mxu0 0.0
    %779 = vmatmul.mubr.f32.gmra.mxu0 %v633
    %v780 = vpop.f32.mrf.mxu0
    %v781 = vadd.f32 0.0, %v780
    %v782 = vpop.f32.mrf.mxu0
    %783 = vmatprep.mubr.f32.mxu0 0.0
    %784 = vmatmul.mubr.f32.gmra.mxu0 %v636
    %v785 = vpop.f32.mrf.mxu0
    %v786 = vadd.f32 0.0, %v785
    %v787 = vpop.f32.mrf.mxu0
    %788 = vmatprep.mubr.f32.mxu0 0.0
    %789 = vmatmul.mubr.f32.gmra.mxu0 %v639
    %v790 = vpop.f32.mrf.mxu0
    %v791 = vadd.f32 0.0, %v790
    %v792 = vpop.f32.mrf.mxu0
    %793 = vdwg.mxu0
    %v794 = vmul.f32 %v424, %v776
    %v795 = vmul.f32 %v426, %v781
    %v796 = vmul.f32 %v428, %v786
    %v797 = vmul.f32 %v430, %v791
    %v798 = vadd.f32 %v794, %v795
    %v799 = vrot.slane %v798, 4
    %v800 = vadd.f32 %v798, %v799
    %v801 = vrot.slane %v800, 2
    %v802 = vadd.f32 %v800, %v801
    %v803 = vrot.slane %v802, 1
    %v804 = vadd.f32 %v802, %v803
    %v805 = vadd.f32 %v796, %v797
    %v806 = vrot.slane %v805, 4
    %v807 = vadd.f32 %v805, %v806
    %v808 = vrot.slane %v807, 2
    %v809 = vadd.f32 %v807, %v808
    %v810 = vrot.slane %v809, 1
    %v811 = vadd.f32 %v809, %v810
    %v812 = vadd.f32 %v804, 1e-06
    %v813 = vadd.f32 %v811, 1e-06
    %v814 = vmul.f32 %v400, %v756
    %v815 = vmul.f32 %v402, %v761
    %v816 = vmul.f32 %v404, %v766
    %v817 = vmul.f32 %v406, %v771
    %v818 = vadd.f32 %v814, %v815
    %v819 = vrot.slane %v818, 4
    %v820 = vadd.f32 %v818, %v819
    %v821 = vrot.slane %v820, 2
    %v822 = vadd.f32 %v820, %v821
    %v823 = vrot.slane %v822, 1
    %v824 = vadd.f32 %v822, %v823
    %v825 = vadd.f32 %v816, %v817
    %v826 = vrot.slane %v825, 4
    %v827 = vadd.f32 %v825, %v826
    %v828 = vrot.slane %v827, 2
    %v829 = vadd.f32 %v827, %v828
    %v830 = vrot.slane %v829, 1
    %v831 = vadd.f32 %v829, %v830
    %v832 = vadd.f32 %v824, 1e-06
    %v833 = vadd.f32 %v831, 1e-06
    %v834 = vmul.f32 %v447, %v812
    %v835 = vmul.f32 %v448, %v812
    %v836 = vmul.f32 %v449, %v813
    %v837 = vmul.f32 %v450, %v813
    %v838 = vmul.f32 %v451, %v832
    %v839 = vmul.f32 %v452, %v832
    %v840 = vmul.f32 %v453, %v833
    %v841 = vmul.f32 %v454, %v833
    %842 = vmatprep.subr.mxu0 0.0
    %843 = vmatpush1.msra.mxu0 %v446
    %844 = vmatprep.subr.mxu0 0.0
    %845 = vmatpush1.msra.mxu0 %v445
    %846 = vmatprep.subr.mxu0 0.0
    %847 = vmatpush1.msra.mxu0 %v444
    %848 = vmatprep.subr.mxu0 0.0
    %849 = vmatpush1.msra.mxu0 %v443
    %850 = vmatprep.subr.mxu0 0.0
    %851 = vmatpush1.msra.mxu0 %v442
    %852 = vmatprep.subr.mxu0 0.0
    %853 = vmatpush1.msra.mxu0 %v441
    %854 = vmatprep.subr.mxu0 0.0
    %855 = vmatpush1.msra.mxu0 %v440
    %856 = vmatprep.subr.mxu0 0.0
    %857 = vmatpush1.msra.mxu0 %v439
    %858 = vmatprep.subr.mxu0 0.0
    %859 = vmatpush1.msra.mxu0 %v438
    %860 = vmatprep.subr.mxu0 0.0
    %861 = vmatpush1.msra.mxu0 %v437
    %862 = vmatprep.subr.mxu0 0.0
    %863 = vmatpush1.msra.mxu0 %v436
    %864 = vmatprep.subr.mxu0 0.0
    %865 = vmatpush1.msra.mxu0 %v435
    %866 = vmatprep.subr.mxu0 0.0
    %867 = vmatpush1.msra.mxu0 %v434
    %868 = vmatprep.subr.mxu0 0.0
    %869 = vmatpush1.msra.mxu0 %v433
    %870 = vmatprep.subr.mxu0 0.0
    %871 = vmatpush1.msra.mxu0 %v432
    %872 = vmatprep.subr.mxu0 0.0
    %873 = vmatpush1.msra.mxu0 %v431
    %874 = vmatprep.subr.mxu0 0.0
    %875 = vmatpush2.msra.mxu0 0.0
    %876 = vmatprep.subr.mxu0 0.0
    %877 = vmatpush2.msra.mxu0 0.0
    %878 = vmatprep.subr.mxu0 0.0
    %879 = vmatpush2.msra.mxu0 0.0
    %880 = vmatprep.subr.mxu0 0.0
    %881 = vmatpush2.msra.mxu0 0.0
    %882 = vmatprep.subr.mxu0 0.0
    %883 = vmatpush2.msra.mxu0 0.0
    %884 = vmatprep.subr.mxu0 0.0
    %885 = vmatpush2.msra.mxu0 0.0
    %886 = vmatprep.subr.mxu0 0.0
    %887 = vmatpush2.msra.mxu0 0.0
    %888 = vmatprep.subr.mxu0 0.0
    %889 = vmatpush2.msra.mxu0 0.0
    %890 = vmatprep.subr.mxu0 0.0
    %891 = vmatpush2.msra.mxu0 0.0
    %892 = vmatprep.subr.mxu0 0.0
    %893 = vmatpush2.msra.mxu0 0.0
    %894 = vmatprep.subr.mxu0 0.0
    %895 = vmatpush2.msra.mxu0 0.0
    %896 = vmatprep.subr.mxu0 0.0
    %897 = vmatpush2.msra.mxu0 0.0
    %898 = vmatprep.subr.mxu0 0.0
    %899 = vmatpush2.msra.mxu0 0.0
    %900 = vmatprep.subr.mxu0 0.0
    %901 = vmatpush2.msra.mxu0 0.0
    %902 = vmatprep.subr.mxu0 0.0
    %903 = vmatpush2.msra.mxu0 0.0
    %904 = vmatprep.subr.mxu0 0.0
    %905 = vmatpush2.msra.mxu0 0.0
    %906 = vmatprep.mubr.f32.mxu0 0.0
    %907 = vmatmul.mubr.f32.gmra.mxu0 %v834
    %v908 = vpop.f32.mrf.mxu0
    %v909 = vadd.f32 0.0, %v908
    %v910 = vpop.f32.mrf.mxu0
    %911 = vmatprep.mubr.f32.mxu0 0.0
    %912 = vmatmul.mubr.f32.gmra.mxu0 %v835
    %v913 = vpop.f32.mrf.mxu0
    %v914 = vadd.f32 0.0, %v913
    %v915 = vpop.f32.mrf.mxu0
    %916 = vmatprep.mubr.f32.mxu0 0.0
    %917 = vmatmul.mubr.f32.gmra.mxu0 %v836
    %v918 = vpop.f32.mrf.mxu0
    %v919 = vadd.f32 0.0, %v918
    %v920 = vpop.f32.mrf.mxu0
    %921 = vmatprep.mubr.f32.mxu0 0.0
    %922 = vmatmul.mubr.f32.gmra.mxu0 %v837
    %v923 = vpop.f32.mrf.mxu0
    %v924 = vadd.f32 0.0, %v923
    %v925 = vpop.f32.mrf.mxu0
    %926 = vmatprep.mubr.f32.mxu0 0.0
    %927 = vmatmul.mubr.f32.gmra.mxu0 %v838
    %v928 = vpop.f32.mrf.mxu0
    %v929 = vadd.f32 0.0, %v928
    %v930 = vpop.f32.mrf.mxu0
    %931 = vmatprep.mubr.f32.mxu0 0.0
    %932 = vmatmul.mubr.f32.gmra.mxu0 %v839
    %v933 = vpop.f32.mrf.mxu0
    %v934 = vadd.f32 0.0, %v933
    %v935 = vpop.f32.mrf.mxu0
    %936 = vmatprep.mubr.f32.mxu0 0.0
    %937 = vmatmul.mubr.f32.gmra.mxu0 %v840
    %v938 = vpop.f32.mrf.mxu0
    %v939 = vadd.f32 0.0, %v938
    %v940 = vpop.f32.mrf.mxu0
    %941 = vmatprep.mubr.f32.mxu0 0.0
    %942 = vmatmul.mubr.f32.gmra.mxu0 %v841
    %v943 = vpop.f32.mrf.mxu0
    %v944 = vadd.f32 0.0, %v943
    %v945 = vpop.f32.mrf.mxu0
    %946 = vdwg.mxu0
    %v947 = vmax.f32 %v929, -1.0
    %v948 = vmax.f32 %v934, -1.0
    %v949 = vmax.f32 %v939, -1.0
    %v950 = vmax.f32 %v944, -1.0
    %v951 = vmin.f32 %v947, 1.0
    %v952 = vmin.f32 %v948, 1.0
    %v953 = vmin.f32 %v949, 1.0
    %v954 = vmin.f32 %v950, 1.0
    %v955 = vxor.u32 %v909, 2147483648
    %v956 = vxor.u32 %v914, 2147483648
    %v957 = vxor.u32 %v919, 2147483648
    %v958 = vxor.u32 %v924, 2147483648
    %v959 = vmul.f32 %v955, 1.442695
    %v960 = vpow.pop %v959
    %v961 = vmul.f32 %v956, 1.442695
    %v962 = vpow.pop %v961
    %v963 = vmul.f32 %v957, 1.442695
    %v964 = vpow.pop %v963
    %v965 = vmul.f32 %v958, 1.442695
    %v966 = vpow.pop %v965
    %v967 = vadd.f32 %v960, 1.0
    %v968 = vadd.f32 %v962, 1.0
    %v969 = vadd.f32 %v964, 1.0
    %v970 = vadd.f32 %v966, 1.0
    %v971 = vrcp.pop %v967
    %v972 = vmul.f32 1.0, %v971
    %v973 = vrcp.pop %v968
    %v974 = vmul.f32 1.0, %v973
    %v975 = vrcp.pop %v969
    %v976 = vmul.f32 1.0, %v975
    %v977 = vrcp.pop %v970
    %v978 = vmul.f32 1.0, %v977
    %v979 = vsel %vm616, %v951, -inf
    %v980 = vsel %vm616, %v952, -inf
    %v981 = vmax.f32 %v979, %v980
    %v982 = vrot.slane %v981, 4
    %v983 = vmax.f32 %v981, %v982
    %v984 = vrot.slane %v983, 2
    %v985 = vmax.f32 %v983, %v984
    %v986 = vrot.slane %v985, 1
    %v987 = vmax.f32 %v985, %v986
    %v988 = vsel %vm616, %v953, -inf
    %v989 = vsel %vm616, %v954, -inf
    %v990 = vmax.f32 %v988, %v989
    %v991 = vrot.slane %v990, 4
    %v992 = vmax.f32 %v990, %v991
    %v993 = vrot.slane %v992, 2
    %v994 = vmax.f32 %v992, %v993
    %v995 = vrot.slane %v994, 1
    %v996 = vmax.f32 %v994, %v995
    %v997 = vsub.f32 %v951, %v987
    %v998 = vsub.f32 %v952, %v987
    %v999 = vsub.f32 %v953, %v996
    %v1000 = vsub.f32 %v954, %v996
    %v1001 = vmul.f32 %v997, 1.442695
    %v1002 = vpow.pop %v1001
    %v1003 = vmul.f32 %v998, 1.442695
    %v1004 = vpow.pop %v1003
    %v1005 = vmul.f32 %v999, 1.442695
    %v1006 = vpow.pop %v1005
    %v1007 = vmul.f32 %v1000, 1.442695
    %v1008 = vpow.pop %v1007
    %v1009 = vsel %vm616, %v1002, 0.0
    %v1010 = vsel %vm616, %v1004, 0.0
    %v1011 = vadd.f32 %v1009, %v1010
    %v1012 = vrot.slane %v1011, 4
    %v1013 = vadd.f32 %v1011, %v1012
    %v1014 = vrot.slane %v1013, 2
    %v1015 = vadd.f32 %v1013, %v1014
    %v1016 = vrot.slane %v1015, 1
    %v1017 = vadd.f32 %v1015, %v1016
    %v1018 = vsel %vm616, %v1006, 0.0
    %v1019 = vsel %vm616, %v1008, 0.0
    %v1020 = vadd.f32 %v1018, %v1019
    %v1021 = vrot.slane %v1020, 4
    %v1022 = vadd.f32 %v1020, %v1021
    %v1023 = vrot.slane %v1022, 2
    %v1024 = vadd.f32 %v1022, %v1023
    %v1025 = vrot.slane %v1024, 1
    %v1026 = vadd.f32 %v1024, %v1025
    %v1027 = vrcp.pop %v1017
    %v1028 = vmul.f32 %v1002, %v1027
    %v1029 = vmul.f32 %v1004, %v1027
    %v1030 = vrcp.pop %v1026
    %v1031 = vmul.f32 %v1006, %v1030
    %v1032 = vmul.f32 %v1008, %v1030
    %v1033 = vmul.f32 %v1028, 16.0
    %v1034 = vmul.f32 %v1029, 16.0
    %v1035 = vmul.f32 %v1031, 16.0
    %v1036 = vmul.f32 %v1032, 16.0
    %v1037 = vmul.f32 %v601, %v972
    %v1038 = vmul.f32 %v603, %v974
    %v1039 = vmul.f32 %v605, %v976
    %v1040 = vmul.f32 %v607, %v978
    %v1042 = vsel %vm616, %v1037, 0
    %v1045 = vsel %vm616, %v1038, 0
    %v1048 = vsel %vm616, %v1039, 0
    %v1051 = vsel %vm616, %v1040, 0
    %v1054 = vsel %vm616, %v1033, 0
    %v1057 = vsel %vm616, %v1034, 0
    %v1060 = vsel %vm616, %v1035, 0
    %v1063 = vsel %vm616, %v1036, 0
    %1065 = vmatprep.subr.mxu0 0.0
    %1066 = vmatpush1.xpose.msra.mxu0 %v687
    %1067 = vmatprep.subr.mxu0 0.0
    %1068 = vmatpush1.xpose.msra.mxu0 %v684
    %1069 = vmatprep.subr.mxu0 0.0
    %1070 = vmatpush1.xpose.msra.mxu0 %v681
    %1071 = vmatprep.subr.mxu0 0.0
    %1072 = vmatpush1.xpose.msra.mxu0 %v678
    %1073 = vmatprep.subr.mxu0 0.0
    %1074 = vmatpush1.xpose.msra.mxu0 %v675
    %1075 = vmatprep.subr.mxu0 0.0
    %1076 = vmatpush1.xpose.msra.mxu0 %v672
    %1077 = vmatprep.subr.mxu0 0.0
    %1078 = vmatpush1.xpose.msra.mxu0 %v669
    %1079 = vmatprep.subr.mxu0 0.0
    %1080 = vmatpush1.xpose.msra.mxu0 %v666
    %1081 = vmatprep.subr.mxu0 0.0
    %1082 = vmatpush1.xpose.msra.mxu0 %v663
    %1083 = vmatprep.subr.mxu0 0.0
    %1084 = vmatpush1.xpose.msra.mxu0 %v660
    %1085 = vmatprep.subr.mxu0 0.0
    %1086 = vmatpush1.xpose.msra.mxu0 %v657
    %1087 = vmatprep.subr.mxu0 0.0
    %1088 = vmatpush1.xpose.msra.mxu0 %v654
    %1089 = vmatprep.subr.mxu0 0.0
    %1090 = vmatpush1.xpose.msra.mxu0 %v651
    %1091 = vmatprep.subr.mxu0 0.0
    %1092 = vmatpush1.xpose.msra.mxu0 %v648
    %1093 = vmatprep.subr.mxu0 0.0
    %1094 = vmatpush1.xpose.msra.mxu0 %v645
    %1095 = vmatprep.subr.mxu0 0.0
    %1096 = vmatpush1.xpose.msra.mxu0 %v642
    %1097 = vmatprep.subr.mxu0 0.0
    %1098 = vmatpush2.xpose.msra.mxu0 0.0
    %1099 = vmatprep.subr.mxu0 0.0
    %1100 = vmatpush2.xpose.msra.mxu0 0.0
    %1101 = vmatprep.subr.mxu0 0.0
    %1102 = vmatpush2.xpose.msra.mxu0 0.0
    %1103 = vmatprep.subr.mxu0 0.0
    %1104 = vmatpush2.xpose.msra.mxu0 0.0
    %1105 = vmatprep.subr.mxu0 0.0
    %1106 = vmatpush2.xpose.msra.mxu0 0.0
    %1107 = vmatprep.subr.mxu0 0.0
    %1108 = vmatpush2.xpose.msra.mxu0 0.0
    %1109 = vmatprep.subr.mxu0 0.0
    %1110 = vmatpush2.xpose.msra.mxu0 0.0
    %1111 = vmatprep.subr.mxu0 0.0
    %1112 = vmatpush2.xpose.msra.mxu0 0.0
    %1113 = vmatprep.subr.mxu0 0.0
    %1114 = vmatpush2.xpose.msra.mxu0 0.0
    %1115 = vmatprep.subr.mxu0 0.0
    %1116 = vmatpush2.xpose.msra.mxu0 0.0
    %1117 = vmatprep.subr.mxu0 0.0
    %1118 = vmatpush2.xpose.msra.mxu0 0.0
    %1119 = vmatprep.subr.mxu0 0.0
    %1120 = vmatpush2.xpose.msra.mxu0 0.0
    %1121 = vmatprep.subr.mxu0 0.0
    %1122 = vmatpush2.xpose.msra.mxu0 0.0
    %1123 = vmatprep.subr.mxu0 0.0
    %1124 = vmatpush2.xpose.msra.mxu0 0.0
    %1125 = vmatprep.subr.mxu0 0.0
    %1126 = vmatpush2.xpose.msra.mxu0 0.0
    %1127 = vmatprep.subr.mxu0 0.0
    %1128 = vmatpush2.xpose.msra.mxu0 0.0
    %1129 = vmatprep.mubr.f32.mxu0 0.0
    %1130 = vmatmul.mubr.f32.gmra.mxu0 %v1042
    %v1131 = vpop.f32.mrf.mxu0
    %v1132 = vadd.f32 0.0, %v1131
    %v1133 = vpop.f32.mrf.mxu0
    %1134 = vmatprep.mubr.f32.mxu0 0.0
    %1135 = vmatmul.mubr.f32.gmra.mxu0 %v1045
    %v1136 = vpop.f32.mrf.mxu0
    %v1137 = vadd.f32 0.0, %v1136
    %v1138 = vpop.f32.mrf.mxu0
    %1139 = vmatprep.mubr.f32.mxu0 0.0
    %1140 = vmatmul.mubr.f32.gmra.mxu0 %v1048
    %v1141 = vpop.f32.mrf.mxu0
    %v1142 = vadd.f32 0.0, %v1141
    %v1143 = vpop.f32.mrf.mxu0
    %1144 = vmatprep.mubr.f32.mxu0 0.0
    %1145 = vmatmul.mubr.f32.gmra.mxu0 %v1051
    %v1146 = vpop.f32.mrf.mxu0
    %v1147 = vadd.f32 0.0, %v1146
    %v1148 = vpop.f32.mrf.mxu0
    %1149 = vmatprep.mubr.f32.mxu0 0.0
    %1150 = vmatmul.mubr.f32.gmra.mxu0 %v1054
    %v1151 = vpop.f32.mrf.mxu0
    %v1152 = vadd.f32 0.0, %v1151
    %v1153 = vpop.f32.mrf.mxu0
    %1154 = vmatprep.mubr.f32.mxu0 0.0
    %1155 = vmatmul.mubr.f32.gmra.mxu0 %v1057
    %v1156 = vpop.f32.mrf.mxu0
    %v1157 = vadd.f32 0.0, %v1156
    %v1158 = vpop.f32.mrf.mxu0
    %1159 = vmatprep.mubr.f32.mxu0 0.0
    %1160 = vmatmul.mubr.f32.gmra.mxu0 %v1060
    %v1161 = vpop.f32.mrf.mxu0
    %v1162 = vadd.f32 0.0, %v1161
    %v1163 = vpop.f32.mrf.mxu0
    %1164 = vmatprep.mubr.f32.mxu0 0.0
    %1165 = vmatmul.mubr.f32.gmra.mxu0 %v1063
    %v1166 = vpop.f32.mrf.mxu0
    %v1167 = vadd.f32 0.0, %v1166
    %v1168 = vpop.f32.mrf.mxu0
    %1169 = vdwg.mxu0
    %v1170 = vmul.f32 %v400, %v1132
    %v1171 = vmul.f32 %v402, %v1137
    %v1172 = vmul.f32 %v404, %v1142
    %v1173 = vmul.f32 %v406, %v1147
    %v1174 = vmul.f32 %v365, %v1152
    %v1175 = vmul.f32 %v370, %v1157
    %v1176 = vmul.f32 %v375, %v1162
    %v1177 = vmul.f32 %v380, %v1167
    %1178 = vxpose.xlu0.b32.start [1/16] %v424, 128
    %1179 = vxpose.xlu0.b32.cont [2/16] %v426, 128
    %1180 = vxpose.xlu0.b32.cont [3/16] 0.0, 128
    %1181 = vxpose.xlu0.b32.cont [4/16] 0.0, 128
    %1182 = vxpose.xlu0.b32.cont [5/16] 0.0, 128
    %1183 = vxpose.xlu0.b32.cont [6/16] 0.0, 128
    %1184 = vxpose.xlu0.b32.cont [7/16] 0.0, 128
    %1185 = vxpose.xlu0.b32.cont [8/16] 0.0, 128
    %1186 = vxpose.xlu0.b32.cont [9/16] 0.0, 128
    %1187 = vxpose.xlu0.b32.cont [10/16] 0.0, 128
    %1188 = vxpose.xlu0.b32.cont [11/16] 0.0, 128
    %1189 = vxpose.xlu0.b32.cont [12/16] 0.0, 128
    %1190 = vxpose.xlu0.b32.cont [13/16] 0.0, 128
    %1191 = vxpose.xlu0.b32.cont [14/16] 0.0, 128
    %1192 = vxpose.xlu0.b32.cont [15/16] 0.0, 128
    %1193 = vxpose.xlu0.b32.end [16/16] 0.0, 128
    %v1194 = vpop.trf.xlu0
    %v1195 = vpop.trf.xlu0
    %v1196 = vpop.trf.xlu0
    %v1197 = vpop.trf.xlu0
    %v1198 = vpop.trf.xlu0
    %v1199 = vpop.trf.xlu0
    %v1200 = vpop.trf.xlu0
    %v1201 = vpop.trf.xlu0
    %v1202 = vpop.trf.xlu0
    %v1203 = vpop.trf.xlu0
    %v1204 = vpop.trf.xlu0
    %v1205 = vpop.trf.xlu0
    %v1206 = vpop.trf.xlu0
    %v1207 = vpop.trf.xlu0
    %v1208 = vpop.trf.xlu0
    %v1209 = vpop.trf.xlu0
    %vm1210 = vcmask 130048
    %v1212 = vsel %vm1210, %v1194, 0
    %v1215 = vsel %vm1210, %v1195, 0
    %v1218 = vsel %vm1210, %v1196, 0
    %v1221 = vsel %vm1210, %v1197, 0
    %v1224 = vsel %vm1210, %v1198, 0
    %v1227 = vsel %vm1210, %v1199, 0
    %v1230 = vsel %vm1210, %v1200, 0
    %v1233 = vsel %vm1210, %v1201, 0
    %v1236 = vsel %vm1210, %v1202, 0
    %v1239 = vsel %vm1210, %v1203, 0
    %v1242 = vsel %vm1210, %v1204, 0
    %v1245 = vsel %vm1210, %v1205, 0
    %v1248 = vsel %vm1210, %v1206, 0
    %v1251 = vsel %vm1210, %v1207, 0
    %v1254 = vsel %vm1210, %v1208, 0
    %v1257 = vsel %vm1210, %v1209, 0
    %1259 = vmatprep.subr.mxu0 0.0
    %1260 = vmatpush1.msra.mxu0 0.0
    %1261 = vmatprep.subr.mxu0 0.0
    %1262 = vmatpush1.msra.mxu0 0.0
    %1263 = vmatprep.subr.mxu0 0.0
    %1264 = vmatpush1.msra.mxu0 0.0
    %1265 = vmatprep.subr.mxu0 0.0
    %1266 = vmatpush1.msra.mxu0 0.0
    %1267 = vmatprep.subr.mxu0 0.0
    %1268 = vmatpush1.msra.mxu0 0.0
    %1269 = vmatprep.subr.mxu0 0.0
    %1270 = vmatpush1.msra.mxu0 0.0
    %1271 = vmatprep.subr.mxu0 0.0
    %1272 = vmatpush1.msra.mxu0 0.0
    %1273 = vmatprep.subr.mxu0 0.0
    %1274 = vmatpush1.msra.mxu0 0.0
    %1275 = vmatprep.subr.mxu0 0.0
    %1276 = vmatpush1.msra.mxu0 0.0
    %1277 = vmatprep.subr.mxu0 0.0
    %1278 = vmatpush1.msra.mxu0 0.0
    %1279 = vmatprep.subr.mxu0 0.0
    %1280 = vmatpush1.msra.mxu0 0.0
    %1281 = vmatprep.subr.mxu0 0.0
    %1282 = vmatpush1.msra.mxu0 0.0
    %1283 = vmatprep.subr.mxu0 0.0
    %1284 = vmatpush1.msra.mxu0 0.0
    %1285 = vmatprep.subr.mxu0 0.0
    %1286 = vmatpush1.msra.mxu0 0.0
    %1287 = vmatprep.subr.mxu0 0.0
    %1288 = vmatpush1.msra.mxu0 %v1175
    %1289 = vmatprep.subr.mxu0 0.0
    %1290 = vmatpush1.msra.mxu0 %v1174
    %1291 = vmatprep.subr.mxu0 0.0
    %1292 = vmatpush2.msra.mxu0 0.0
    %1293 = vmatprep.subr.mxu0 0.0
    %1294 = vmatpush2.msra.mxu0 0.0
    %1295 = vmatprep.subr.mxu0 0.0
    %1296 = vmatpush2.msra.mxu0 0.0
    %1297 = vmatprep.subr.mxu0 0.0
    %1298 = vmatpush2.msra.mxu0 0.0
    %1299 = vmatprep.subr.mxu0 0.0
    %1300 = vmatpush2.msra.mxu0 0.0
    %1301 = vmatprep.subr.mxu0 0.0
    %1302 = vmatpush2.msra.mxu0 0.0
    %1303 = vmatprep.subr.mxu0 0.0
    %1304 = vmatpush2.msra.mxu0 0.0
    %1305 = vmatprep.subr.mxu0 0.0
    %1306 = vmatpush2.msra.mxu0 0.0
    %1307 = vmatprep.subr.mxu0 0.0
    %1308 = vmatpush2.msra.mxu0 0.0
    %1309 = vmatprep.subr.mxu0 0.0
    %1310 = vmatpush2.msra.mxu0 0.0
    %1311 = vmatprep.subr.mxu0 0.0
    %1312 = vmatpush2.msra.mxu0 0.0
    %1313 = vmatprep.subr.mxu0 0.0
    %1314 = vmatpush2.msra.mxu0 0.0
    %1315 = vmatprep.subr.mxu0 0.0
    %1316 = vmatpush2.msra.mxu0 0.0
    %1317 = vmatprep.subr.mxu0 0.0
    %1318 = vmatpush2.msra.mxu0 0.0
    %1319 = vmatprep.subr.mxu0 0.0
    %1320 = vmatpush2.msra.mxu0 0.0
    %1321 = vmatprep.subr.mxu0 0.0
    %1322 = vmatpush2.msra.mxu0 0.0
    %1323 = vmatprep.mubr.f32.mxu0 0.0
    %1324 = vmatmul.mubr.f32.gmra.mxu0 %v1212
    %v1325 = vpop.f32.mrf.mxu0
    %v1326 = vadd.f32 0.0, %v1325
    %v1327 = vpop.f32.mrf.mxu0
    %1328 = vmatprep.mubr.f32.mxu0 0.0
    %1329 = vmatmul.mubr.f32.gmra.mxu0 %v1215
    %v1330 = vpop.f32.mrf.mxu0
    %v1331 = vadd.f32 0.0, %v1330
    %v1332 = vpop.f32.mrf.mxu0
    %1333 = vmatprep.mubr.f32.mxu0 0.0
    %1334 = vmatmul.mubr.f32.gmra.mxu0 %v1218
    %v1335 = vpop.f32.mrf.mxu0
    %v1336 = vadd.f32 0.0, %v1335
    %v1337 = vpop.f32.mrf.mxu0
    %1338 = vmatprep.mubr.f32.mxu0 0.0
    %1339 = vmatmul.mubr.f32.gmra.mxu0 %v1221
    %v1340 = vpop.f32.mrf.mxu0
    %v1341 = vadd.f32 0.0, %v1340
    %v1342 = vpop.f32.mrf.mxu0
    %1343 = vmatprep.mubr.f32.mxu0 0.0
    %1344 = vmatmul.mubr.f32.gmra.mxu0 %v1224
    %v1345 = vpop.f32.mrf.mxu0
    %v1346 = vadd.f32 0.0, %v1345
    %v1347 = vpop.f32.mrf.mxu0
    %1348 = vmatprep.mubr.f32.mxu0 0.0
    %1349 = vmatmul.mubr.f32.gmra.mxu0 %v1227
    %v1350 = vpop.f32.mrf.mxu0
    %v1351 = vadd.f32 0.0, %v1350
    %v1352 = vpop.f32.mrf.mxu0
    %1353 = vmatprep.mubr.f32.mxu0 0.0
    %1354 = vmatmul.mubr.f32.gmra.mxu0 %v1230
    %v1355 = vpop.f32.mrf.mxu0
    %v1356 = vadd.f32 0.0, %v1355
    %v1357 = vpop.f32.mrf.mxu0
    %1358 = vmatprep.mubr.f32.mxu0 0.0
    %1359 = vmatmul.mubr.f32.gmra.mxu0 %v1233
    %v1360 = vpop.f32.mrf.mxu0
    %v1361 = vadd.f32 0.0, %v1360
    %v1362 = vpop.f32.mrf.mxu0
    %1363 = vmatprep.mubr.f32.mxu0 0.0
    %1364 = vmatmul.mubr.f32.gmra.mxu0 %v1236
    %v1365 = vpop.f32.mrf.mxu0
    %v1366 = vadd.f32 0.0, %v1365
    %v1367 = vpop.f32.mrf.mxu0
    %1368 = vmatprep.mubr.f32.mxu0 0.0
    %1369 = vmatmul.mubr.f32.gmra.mxu0 %v1239
    %v1370 = vpop.f32.mrf.mxu0
    %v1371 = vadd.f32 0.0, %v1370
    %v1372 = vpop.f32.mrf.mxu0
    %1373 = vmatprep.mubr.f32.mxu0 0.0
    %1374 = vmatmul.mubr.f32.gmra.mxu0 %v1242
    %v1375 = vpop.f32.mrf.mxu0
    %v1376 = vadd.f32 0.0, %v1375
    %v1377 = vpop.f32.mrf.mxu0
    %1378 = vmatprep.mubr.f32.mxu0 0.0
    %1379 = vmatmul.mubr.f32.gmra.mxu0 %v1245
    %v1380 = vpop.f32.mrf.mxu0
    %v1381 = vadd.f32 0.0, %v1380
    %v1382 = vpop.f32.mrf.mxu0
    %1383 = vmatprep.mubr.f32.mxu0 0.0
    %1384 = vmatmul.mubr.f32.gmra.mxu0 %v1248
    %v1385 = vpop.f32.mrf.mxu0
    %v1386 = vadd.f32 0.0, %v1385
    %v1387 = vpop.f32.mrf.mxu0
    %1388 = vmatprep.mubr.f32.mxu0 0.0
    %1389 = vmatmul.mubr.f32.gmra.mxu0 %v1251
    %v1390 = vpop.f32.mrf.mxu0
    %v1391 = vadd.f32 0.0, %v1390
    %v1392 = vpop.f32.mrf.mxu0
    %1393 = vmatprep.mubr.f32.mxu0 0.0
    %1394 = vmatmul.mubr.f32.gmra.mxu0 %v1254
    %v1395 = vpop.f32.mrf.mxu0
    %v1396 = vadd.f32 0.0, %v1395
    %v1397 = vpop.f32.mrf.mxu0
    %1398 = vmatprep.mubr.f32.mxu0 0.0
    %1399 = vmatmul.mubr.f32.gmra.mxu0 %v1257
    %v1400 = vpop.f32.mrf.mxu0
    %v1401 = vadd.f32 0.0, %v1400
    %v1402 = vpop.f32.mrf.mxu0
    %1403 = vdwg.mxu0
    %1404 = vxpose.xlu0.b32.start [1/16] %v428, 128
    %1405 = vxpose.xlu0.b32.cont [2/16] %v430, 128
    %1406 = vxpose.xlu0.b32.cont [3/16] 0.0, 128
    %1407 = vxpose.xlu0.b32.cont [4/16] 0.0, 128
    %1408 = vxpose.xlu0.b32.cont [5/16] 0.0, 128
    %1409 = vxpose.xlu0.b32.cont [6/16] 0.0, 128
    %1410 = vxpose.xlu0.b32.cont [7/16] 0.0, 128
    %1411 = vxpose.xlu0.b32.cont [8/16] 0.0, 128
    %1412 = vxpose.xlu0.b32.cont [9/16] 0.0, 128
    %1413 = vxpose.xlu0.b32.cont [10/16] 0.0, 128
    %1414 = vxpose.xlu0.b32.cont [11/16] 0.0, 128
    %1415 = vxpose.xlu0.b32.cont [12/16] 0.0, 128
    %1416 = vxpose.xlu0.b32.cont [13/16] 0.0, 128
    %1417 = vxpose.xlu0.b32.cont [14/16] 0.0, 128
    %1418 = vxpose.xlu0.b32.cont [15/16] 0.0, 128
    %1419 = vxpose.xlu0.b32.end [16/16] 0.0, 128
    %v1420 = vpop.trf.xlu0
    %v1421 = vpop.trf.xlu0
    %v1422 = vpop.trf.xlu0
    %v1423 = vpop.trf.xlu0
    %v1424 = vpop.trf.xlu0
    %v1425 = vpop.trf.xlu0
    %v1426 = vpop.trf.xlu0
    %v1427 = vpop.trf.xlu0
    %v1428 = vpop.trf.xlu0
    %v1429 = vpop.trf.xlu0
    %v1430 = vpop.trf.xlu0
    %v1431 = vpop.trf.xlu0
    %v1432 = vpop.trf.xlu0
    %v1433 = vpop.trf.xlu0
    %v1434 = vpop.trf.xlu0
    %v1435 = vpop.trf.xlu0
    %v1437 = vsel %vm1210, %v1420, 0
    %v1440 = vsel %vm1210, %v1421, 0
    %v1443 = vsel %vm1210, %v1422, 0
    %v1446 = vsel %vm1210, %v1423, 0
    %v1449 = vsel %vm1210, %v1424, 0
    %v1452 = vsel %vm1210, %v1425, 0
    %v1455 = vsel %vm1210, %v1426, 0
    %v1458 = vsel %vm1210, %v1427, 0
    %v1461 = vsel %vm1210, %v1428, 0
    %v1464 = vsel %vm1210, %v1429, 0
    %v1467 = vsel %vm1210, %v1430, 0
    %v1470 = vsel %vm1210, %v1431, 0
    %v1473 = vsel %vm1210, %v1432, 0
    %v1476 = vsel %vm1210, %v1433, 0
    %v1479 = vsel %vm1210, %v1434, 0
    %v1482 = vsel %vm1210, %v1435, 0
    %1484 = vmatprep.subr.mxu0 0.0
    %1485 = vmatpush1.msra.mxu0 0.0
    %1486 = vmatprep.subr.mxu0 0.0
    %1487 = vmatpush1.msra.mxu0 0.0
    %1488 = vmatprep.subr.mxu0 0.0
    %1489 = vmatpush1.msra.mxu0 0.0
    %1490 = vmatprep.subr.mxu0 0.0
    %1491 = vmatpush1.msra.mxu0 0.0
    %1492 = vmatprep.subr.mxu0 0.0
    %1493 = vmatpush1.msra.mxu0 0.0
    %1494 = vmatprep.subr.mxu0 0.0
    %1495 = vmatpush1.msra.mxu0 0.0
    %1496 = vmatprep.subr.mxu0 0.0
    %1497 = vmatpush1.msra.mxu0 0.0
    %1498 = vmatprep.subr.mxu0 0.0
    %1499 = vmatpush1.msra.mxu0 0.0
    %1500 = vmatprep.subr.mxu0 0.0
    %1501 = vmatpush1.msra.mxu0 0.0
    %1502 = vmatprep.subr.mxu0 0.0
    %1503 = vmatpush1.msra.mxu0 0.0
    %1504 = vmatprep.subr.mxu0 0.0
    %1505 = vmatpush1.msra.mxu0 0.0
    %1506 = vmatprep.subr.mxu0 0.0
    %1507 = vmatpush1.msra.mxu0 0.0
    %1508 = vmatprep.subr.mxu0 0.0
    %1509 = vmatpush1.msra.mxu0 0.0
    %1510 = vmatprep.subr.mxu0 0.0
    %1511 = vmatpush1.msra.mxu0 0.0
    %1512 = vmatprep.subr.mxu0 0.0
    %1513 = vmatpush1.msra.mxu0 %v1177
    %1514 = vmatprep.subr.mxu0 0.0
    %1515 = vmatpush1.msra.mxu0 %v1176
    %1516 = vmatprep.subr.mxu0 0.0
    %1517 = vmatpush2.msra.mxu0 0.0
    %1518 = vmatprep.subr.mxu0 0.0
    %1519 = vmatpush2.msra.mxu0 0.0
    %1520 = vmatprep.subr.mxu0 0.0
    %1521 = vmatpush2.msra.mxu0 0.0
    %1522 = vmatprep.subr.mxu0 0.0
    %1523 = vmatpush2.msra.mxu0 0.0
    %1524 = vmatprep.subr.mxu0 0.0
    %1525 = vmatpush2.msra.mxu0 0.0
    %1526 = vmatprep.subr.mxu0 0.0
    %1527 = vmatpush2.msra.mxu0 0.0
    %1528 = vmatprep.subr.mxu0 0.0
    %1529 = vmatpush2.msra.mxu0 0.0
    %1530 = vmatprep.subr.mxu0 0.0
    %1531 = vmatpush2.msra.mxu0 0.0
    %1532 = vmatprep.subr.mxu0 0.0
    %1533 = vmatpush2.msra.mxu0 0.0
    %1534 = vmatprep.subr.mxu0 0.0
    %1535 = vmatpush2.msra.mxu0 0.0
    %1536 = vmatprep.subr.mxu0 0.0
    %1537 = vmatpush2.msra.mxu0 0.0
    %1538 = vmatprep.subr.mxu0 0.0
    %1539 = vmatpush2.msra.mxu0 0.0
    %1540 = vmatprep.subr.mxu0 0.0
    %1541 = vmatpush2.msra.mxu0 0.0
    %1542 = vmatprep.subr.mxu0 0.0
    %1543 = vmatpush2.msra.mxu0 0.0
    %1544 = vmatprep.subr.mxu0 0.0
    %1545 = vmatpush2.msra.mxu0 0.0
    %1546 = vmatprep.subr.mxu0 0.0
    %1547 = vmatpush2.msra.mxu0 0.0
    %1548 = vmatprep.mubr.f32.mxu0 0.0
    %1549 = vmatmul.mubr.f32.gmra.mxu0 %v1437
    %v1550 = vpop.f32.mrf.mxu0
    %v1551 = vadd.f32 0.0, %v1550
    %v1552 = vpop.f32.mrf.mxu0
    %1553 = vmatprep.mubr.f32.mxu0 0.0
    %1554 = vmatmul.mubr.f32.gmra.mxu0 %v1440
    %v1555 = vpop.f32.mrf.mxu0
    %v1556 = vadd.f32 0.0, %v1555
    %v1557 = vpop.f32.mrf.mxu0
    %1558 = vmatprep.mubr.f32.mxu0 0.0
    %1559 = vmatmul.mubr.f32.gmra.mxu0 %v1443
    %v1560 = vpop.f32.mrf.mxu0
    %v1561 = vadd.f32 0.0, %v1560
    %v1562 = vpop.f32.mrf.mxu0
    %1563 = vmatprep.mubr.f32.mxu0 0.0
    %1564 = vmatmul.mubr.f32.gmra.mxu0 %v1446
    %v1565 = vpop.f32.mrf.mxu0
    %v1566 = vadd.f32 0.0, %v1565
    %v1567 = vpop.f32.mrf.mxu0
    %1568 = vmatprep.mubr.f32.mxu0 0.0
    %1569 = vmatmul.mubr.f32.gmra.mxu0 %v1449
    %v1570 = vpop.f32.mrf.mxu0
    %v1571 = vadd.f32 0.0, %v1570
    %v1572 = vpop.f32.mrf.mxu0
    %1573 = vmatprep.mubr.f32.mxu0 0.0
    %1574 = vmatmul.mubr.f32.gmra.mxu0 %v1452
    %v1575 = vpop.f32.mrf.mxu0
    %v1576 = vadd.f32 0.0, %v1575
    %v1577 = vpop.f32.mrf.mxu0
    %1578 = vmatprep.mubr.f32.mxu0 0.0
    %1579 = vmatmul.mubr.f32.gmra.mxu0 %v1455
    %v1580 = vpop.f32.mrf.mxu0
    %v1581 = vadd.f32 0.0, %v1580
    %v1582 = vpop.f32.mrf.mxu0
    %1583 = vmatprep.mubr.f32.mxu0 0.0
    %1584 = vmatmul.mubr.f32.gmra.mxu0 %v1458
    %v1585 = vpop.f32.mrf.mxu0
    %v1586 = vadd.f32 0.0, %v1585
    %v1587 = vpop.f32.mrf.mxu0
    %1588 = vmatprep.mubr.f32.mxu0 0.0
    %1589 = vmatmul.mubr.f32.gmra.mxu0 %v1461
    %v1590 = vpop.f32.mrf.mxu0
    %v1591 = vadd.f32 0.0, %v1590
    %v1592 = vpop.f32.mrf.mxu0
    %1593 = vmatprep.mubr.f32.mxu0 0.0
    %1594 = vmatmul.mubr.f32.gmra.mxu0 %v1464
    %v1595 = vpop.f32.mrf.mxu0
    %v1596 = vadd.f32 0.0, %v1595
    %v1597 = vpop.f32.mrf.mxu0
    %1598 = vmatprep.mubr.f32.mxu0 0.0
    %1599 = vmatmul.mubr.f32.gmra.mxu0 %v1467
    %v1600 = vpop.f32.mrf.mxu0
    %v1601 = vadd.f32 0.0, %v1600
    %v1602 = vpop.f32.mrf.mxu0
    %1603 = vmatprep.mubr.f32.mxu0 0.0
    %1604 = vmatmul.mubr.f32.gmra.mxu0 %v1470
    %v1605 = vpop.f32.mrf.mxu0
    %v1606 = vadd.f32 0.0, %v1605
    %v1607 = vpop.f32.mrf.mxu0
    %1608 = vmatprep.mubr.f32.mxu0 0.0
    %1609 = vmatmul.mubr.f32.gmra.mxu0 %v1473
    %v1610 = vpop.f32.mrf.mxu0
    %v1611 = vadd.f32 0.0, %v1610
    %v1612 = vpop.f32.mrf.mxu0
    %1613 = vmatprep.mubr.f32.mxu0 0.0
    %1614 = vmatmul.mubr.f32.gmra.mxu0 %v1476
    %v1615 = vpop.f32.mrf.mxu0
    %v1616 = vadd.f32 0.0, %v1615
    %v1617 = vpop.f32.mrf.mxu0
    %1618 = vmatprep.mubr.f32.mxu0 0.0
    %1619 = vmatmul.mubr.f32.gmra.mxu0 %v1479
    %v1620 = vpop.f32.mrf.mxu0
    %v1621 = vadd.f32 0.0, %v1620
    %v1622 = vpop.f32.mrf.mxu0
    %1623 = vmatprep.mubr.f32.mxu0 0.0
    %1624 = vmatmul.mubr.f32.gmra.mxu0 %v1482
    %v1625 = vpop.f32.mrf.mxu0
    %v1626 = vadd.f32 0.0, %v1625
    %v1627 = vpop.f32.mrf.mxu0
    %1628 = vdwg.mxu0
    %v1629 = vld [vmem:[#allocation6] sm:$0xff]
    %v1630 = vld [vmem:[#allocation6 + $0x8] sm:$0xff]
    %v1631 = vld [vmem:[#allocation6 + $0x10] sm:$0xff]
    %v1632 = vld [vmem:[#allocation6 + $0x18] sm:$0xff]
    %v1633 = vld [vmem:[#allocation6 + $0x20] sm:$0xff]
    %v1634 = vld [vmem:[#allocation6 + $0x28] sm:$0xff]
    %v1635 = vld [vmem:[#allocation6 + $0x30] sm:$0xff]
    %v1636 = vld [vmem:[#allocation6 + $0x38] sm:$0xff]
    %v1637 = vld [vmem:[#allocation6 + $0x40] sm:$0xff]
    %v1638 = vld [vmem:[#allocation6 + $0x48] sm:$0xff]
    %v1639 = vld [vmem:[#allocation6 + $0x50] sm:$0xff]
    %v1640 = vld [vmem:[#allocation6 + $0x58] sm:$0xff]
    %v1641 = vld [vmem:[#allocation6 + $0x60] sm:$0xff]
    %v1642 = vld [vmem:[#allocation6 + $0x68] sm:$0xff]
    %v1643 = vld [vmem:[#allocation6 + $0x70] sm:$0xff]
    %v1644 = vld [vmem:[#allocation6 + $0x78] sm:$0xff]
    %v1645 = vmul.f32 %v1326, %v1629
    %v1646 = vmul.f32 %v1331, %v1630
    %v1647 = vmul.f32 %v1336, %v1631
    %v1648 = vmul.f32 %v1341, %v1632
    %v1649 = vmul.f32 %v1346, %v1633
    %v1650 = vmul.f32 %v1351, %v1634
    %v1651 = vmul.f32 %v1356, %v1635
    %v1652 = vmul.f32 %v1361, %v1636
    %v1653 = vmul.f32 %v1366, %v1637
    %v1654 = vmul.f32 %v1371, %v1638
    %v1655 = vmul.f32 %v1376, %v1639
    %v1656 = vmul.f32 %v1381, %v1640
    %v1657 = vmul.f32 %v1386, %v1641
    %v1658 = vmul.f32 %v1391, %v1642
    %v1659 = vmul.f32 %v1396, %v1643
    %v1660 = vmul.f32 %v1401, %v1644
    %v1661 = vmul.f32 %v1551, %v1629
    %v1662 = vmul.f32 %v1556, %v1630
    %v1663 = vmul.f32 %v1561, %v1631
    %v1664 = vmul.f32 %v1566, %v1632
    %v1665 = vmul.f32 %v1571, %v1633
    %v1666 = vmul.f32 %v1576, %v1634
    %v1667 = vmul.f32 %v1581, %v1635
    %v1668 = vmul.f32 %v1586, %v1636
    %v1669 = vmul.f32 %v1591, %v1637
    %v1670 = vmul.f32 %v1596, %v1638
    %v1671 = vmul.f32 %v1601, %v1639
    %v1672 = vmul.f32 %v1606, %v1640
    %v1673 = vmul.f32 %v1611, %v1641
    %v1674 = vmul.f32 %v1616, %v1642
    %v1675 = vmul.f32 %v1621, %v1643
    %v1676 = vmul.f32 %v1626, %v1644
    %1677 = vmatprep.subr.mxu0 0.0
    %1678 = vmatpush1.msra.mxu0 %v1660
    %1679 = vmatprep.subr.mxu0 0.0
    %1680 = vmatpush1.msra.mxu0 %v1659
    %1681 = vmatprep.subr.mxu0 0.0
    %1682 = vmatpush1.msra.mxu0 %v1658
    %1683 = vmatprep.subr.mxu0 0.0
    %1684 = vmatpush1.msra.mxu0 %v1657
    %1685 = vmatprep.subr.mxu0 0.0
    %1686 = vmatpush1.msra.mxu0 %v1656
    %1687 = vmatprep.subr.mxu0 0.0
    %1688 = vmatpush1.msra.mxu0 %v1655
    %1689 = vmatprep.subr.mxu0 0.0
    %1690 = vmatpush1.msra.mxu0 %v1654
    %1691 = vmatprep.subr.mxu0 0.0
    %1692 = vmatpush1.msra.mxu0 %v1653
    %1693 = vmatprep.subr.mxu0 0.0
    %1694 = vmatpush1.msra.mxu0 %v1652
    %1695 = vmatprep.subr.mxu0 0.0
    %1696 = vmatpush1.msra.mxu0 %v1651
    %1697 = vmatprep.subr.mxu0 0.0
    %1698 = vmatpush1.msra.mxu0 %v1650
    %1699 = vmatprep.subr.mxu0 0.0
    %1700 = vmatpush1.msra.mxu0 %v1649
    %1701 = vmatprep.subr.mxu0 0.0
    %1702 = vmatpush1.msra.mxu0 %v1648
    %1703 = vmatprep.subr.mxu0 0.0
    %1704 = vmatpush1.msra.mxu0 %v1647
    %1705 = vmatprep.subr.mxu0 0.0
    %1706 = vmatpush1.msra.mxu0 %v1646
    %1707 = vmatprep.subr.mxu0 0.0
    %1708 = vmatpush1.msra.mxu0 %v1645
    %1709 = vmatprep.subr.mxu0 0.0
    %1710 = vmatpush2.msra.mxu0 0.0
    %1711 = vmatprep.subr.mxu0 0.0
    %1712 = vmatpush2.msra.mxu0 0.0
    %1713 = vmatprep.subr.mxu0 0.0
    %1714 = vmatpush2.msra.mxu0 0.0
    %1715 = vmatprep.subr.mxu0 0.0
    %1716 = vmatpush2.msra.mxu0 0.0
    %1717 = vmatprep.subr.mxu0 0.0
    %1718 = vmatpush2.msra.mxu0 0.0
    %1719 = vmatprep.subr.mxu0 0.0
    %1720 = vmatpush2.msra.mxu0 0.0
    %1721 = vmatprep.subr.mxu0 0.0
    %1722 = vmatpush2.msra.mxu0 0.0
    %1723 = vmatprep.subr.mxu0 0.0
    %1724 = vmatpush2.msra.mxu0 0.0
    %1725 = vmatprep.subr.mxu0 0.0
    %1726 = vmatpush2.msra.mxu0 0.0
    %1727 = vmatprep.subr.mxu0 0.0
    %1728 = vmatpush2.msra.mxu0 0.0
    %1729 = vmatprep.subr.mxu0 0.0
    %1730 = vmatpush2.msra.mxu0 0.0
    %1731 = vmatprep.subr.mxu0 0.0
    %1732 = vmatpush2.msra.mxu0 0.0
    %1733 = vmatprep.subr.mxu0 0.0
    %1734 = vmatpush2.msra.mxu0 0.0
    %1735 = vmatprep.subr.mxu0 0.0
    %1736 = vmatpush2.msra.mxu0 0.0
    %1737 = vmatprep.subr.mxu0 0.0
    %1738 = vmatpush2.msra.mxu0 0.0
    %1739 = vmatprep.subr.mxu0 0.0
    %1740 = vmatpush2.msra.mxu0 0.0
    %1741 = vmatprep.mubr.f32.mxu0 0.0
    %1742 = vmatmul.mubr.f32.gmra.mxu0 %v1170
    %v1743 = vpop.f32.mrf.mxu0
    %v1744 = vadd.f32 0.0, %v1743
    %v1745 = vpop.f32.mrf.mxu0
    %1746 = vmatprep.mubr.f32.mxu0 0.0
    %1747 = vmatmul.mubr.f32.gmra.mxu0 %v1171
    %v1748 = vpop.f32.mrf.mxu0
    %v1749 = vadd.f32 0.0, %v1748
    %v1750 = vpop.f32.mrf.mxu0
    %1751 = vdwg.mxu0
    %1752 = vmatprep.subr.mxu0 0.0
    %1753 = vmatpush1.msra.mxu0 %v1676
    %1754 = vmatprep.subr.mxu0 0.0
    %1755 = vmatpush1.msra.mxu0 %v1675
    %1756 = vmatprep.subr.mxu0 0.0
    %1757 = vmatpush1.msra.mxu0 %v1674
    %1758 = vmatprep.subr.mxu0 0.0
    %1759 = vmatpush1.msra.mxu0 %v1673
    %1760 = vmatprep.subr.mxu0 0.0
    %1761 = vmatpush1.msra.mxu0 %v1672
    %1762 = vmatprep.subr.mxu0 0.0
    %1763 = vmatpush1.msra.mxu0 %v1671
    %1764 = vmatprep.subr.mxu0 0.0
    %1765 = vmatpush1.msra.mxu0 %v1670
    %1766 = vmatprep.subr.mxu0 0.0
    %1767 = vmatpush1.msra.mxu0 %v1669
    %1768 = vmatprep.subr.mxu0 0.0
    %1769 = vmatpush1.msra.mxu0 %v1668
    %1770 = vmatprep.subr.mxu0 0.0
    %1771 = vmatpush1.msra.mxu0 %v1667
    %1772 = vmatprep.subr.mxu0 0.0
    %1773 = vmatpush1.msra.mxu0 %v1666
    %1774 = vmatprep.subr.mxu0 0.0
    %1775 = vmatpush1.msra.mxu0 %v1665
    %1776 = vmatprep.subr.mxu0 0.0
    %1777 = vmatpush1.msra.mxu0 %v1664
    %1778 = vmatprep.subr.mxu0 0.0
    %1779 = vmatpush1.msra.mxu0 %v1663
    %1780 = vmatprep.subr.mxu0 0.0
    %1781 = vmatpush1.msra.mxu0 %v1662
    %1782 = vmatprep.subr.mxu0 0.0
    %1783 = vmatpush1.msra.mxu0 %v1661
    %1784 = vmatprep.subr.mxu0 0.0
    %1785 = vmatpush2.msra.mxu0 0.0
    %1786 = vmatprep.subr.mxu0 0.0
    %1787 = vmatpush2.msra.mxu0 0.0
    %1788 = vmatprep.subr.mxu0 0.0
    %1789 = vmatpush2.msra.mxu0 0.0
    %1790 = vmatprep.subr.mxu0 0.0
    %1791 = vmatpush2.msra.mxu0 0.0
    %1792 = vmatprep.subr.mxu0 0.0
    %1793 = vmatpush2.msra.mxu0 0.0
    %1794 = vmatprep.subr.mxu0 0.0
    %1795 = vmatpush2.msra.mxu0 0.0
    %1796 = vmatprep.subr.mxu0 0.0
    %1797 = vmatpush2.msra.mxu0 0.0
    %1798 = vmatprep.subr.mxu0 0.0
    %1799 = vmatpush2.msra.mxu0 0.0
    %1800 = vmatprep.subr.mxu0 0.0
    %1801 = vmatpush2.msra.mxu0 0.0
    %1802 = vmatprep.subr.mxu0 0.0
    %1803 = vmatpush2.msra.mxu0 0.0
    %1804 = vmatprep.subr.mxu0 0.0
    %1805 = vmatpush2.msra.mxu0 0.0
    %1806 = vmatprep.subr.mxu0 0.0
    %1807 = vmatpush2.msra.mxu0 0.0
    %1808 = vmatprep.subr.mxu0 0.0
    %1809 = vmatpush2.msra.mxu0 0.0
    %1810 = vmatprep.subr.mxu0 0.0
    %1811 = vmatpush2.msra.mxu0 0.0
    %1812 = vmatprep.subr.mxu0 0.0
    %1813 = vmatpush2.msra.mxu0 0.0
    %1814 = vmatprep.subr.mxu0 0.0
    %1815 = vmatpush2.msra.mxu0 0.0
    %1816 = vmatprep.mubr.f32.mxu0 0.0
    %1817 = vmatmul.mubr.f32.gmra.mxu0 %v1172
    %v1818 = vpop.f32.mrf.mxu0
    %v1819 = vadd.f32 0.0, %v1818
    %v1820 = vpop.f32.mrf.mxu0
    %1821 = vmatprep.mubr.f32.mxu0 0.0
    %1822 = vmatmul.mubr.f32.gmra.mxu0 %v1173
    %v1823 = vpop.f32.mrf.mxu0
    %v1824 = vadd.f32 0.0, %v1823
    %v1825 = vpop.f32.mrf.mxu0
    %1826 = vdwg.mxu0
    %v1827 = vld [vmem:[%s3] sm:$0xff]
    %v1828 = vld [vmem:[%s3 + $0x8] sm:$0xff]
    %v1829 = vld [vmem:[%s3 + $0x10] sm:$0xff]
    %v1830 = vld [vmem:[%s3 + $0x18] sm:$0xff]
    %v1831 = vld [vmem:[%s3 + $0x20] sm:$0xff]
    %v1832 = vld [vmem:[%s3 + $0x28] sm:$0xff]
    %v1833 = vld [vmem:[%s3 + $0x30] sm:$0xff]
    %v1834 = vld [vmem:[%s3 + $0x38] sm:$0xff]
    %v1835 = vld [vmem:[%s3 + $0x40] sm:$0xff]
    %v1836 = vld [vmem:[%s3 + $0x48] sm:$0xff]
    %v1837 = vld [vmem:[%s3 + $0x50] sm:$0xff]
    %v1838 = vld [vmem:[%s3 + $0x58] sm:$0xff]
    %v1839 = vld [vmem:[%s3 + $0x60] sm:$0xff]
    %v1840 = vld [vmem:[%s3 + $0x68] sm:$0xff]
    %v1841 = vld [vmem:[%s3 + $0x70] sm:$0xff]
    %v1842 = vld [vmem:[%s3 + $0x78] sm:$0xff]
    %v1843 = vld [vmem:[%s4] sm:$0x1]
    %v1845 = vlaneseq
    %v1846 = vshrl.u32 %v1845, 7
    %v1847 = vsub.s32 0, %v1846
    %v1848 = vrot.slane %v1843, %v1847
    %1850 = vmatprep.subr.mxu0 0.0
    %1851 = vmatpush1.msra.mxu0 %v1842
    %1852 = vmatprep.subr.mxu0 0.0
    %1853 = vmatpush1.msra.mxu0 %v1841
    %1854 = vmatprep.subr.mxu0 0.0
    %1855 = vmatpush1.msra.mxu0 %v1840
    %1856 = vmatprep.subr.mxu0 0.0
    %1857 = vmatpush1.msra.mxu0 %v1839
    %1858 = vmatprep.subr.mxu0 0.0
    %1859 = vmatpush1.msra.mxu0 %v1838
    %1860 = vmatprep.subr.mxu0 0.0
    %1861 = vmatpush1.msra.mxu0 %v1837
    %1862 = vmatprep.subr.mxu0 0.0
    %1863 = vmatpush1.msra.mxu0 %v1836
    %1864 = vmatprep.subr.mxu0 0.0
    %1865 = vmatpush1.msra.mxu0 %v1835
    %1866 = vmatprep.subr.mxu0 0.0
    %1867 = vmatpush1.msra.mxu0 %v1834
    %1868 = vmatprep.subr.mxu0 0.0
    %1869 = vmatpush1.msra.mxu0 %v1833
    %1870 = vmatprep.subr.mxu0 0.0
    %1871 = vmatpush1.msra.mxu0 %v1832
    %1872 = vmatprep.subr.mxu0 0.0
    %1873 = vmatpush1.msra.mxu0 %v1831
    %1874 = vmatprep.subr.mxu0 0.0
    %1875 = vmatpush1.msra.mxu0 %v1830
    %1876 = vmatprep.subr.mxu0 0.0
    %1877 = vmatpush1.msra.mxu0 %v1829
    %1878 = vmatprep.subr.mxu0 0.0
    %1879 = vmatpush1.msra.mxu0 %v1828
    %1880 = vmatprep.subr.mxu0 0.0
    %1881 = vmatpush1.msra.mxu0 %v1827
    %1882 = vmatprep.subr.mxu0 0.0
    %1883 = vmatpush2.msra.mxu0 0.0
    %1884 = vmatprep.subr.mxu0 0.0
    %1885 = vmatpush2.msra.mxu0 0.0
    %1886 = vmatprep.subr.mxu0 0.0
    %1887 = vmatpush2.msra.mxu0 0.0
    %1888 = vmatprep.subr.mxu0 0.0
    %1889 = vmatpush2.msra.mxu0 0.0
    %1890 = vmatprep.subr.mxu0 0.0
    %1891 = vmatpush2.msra.mxu0 0.0
    %1892 = vmatprep.subr.mxu0 0.0
    %1893 = vmatpush2.msra.mxu0 0.0
    %1894 = vmatprep.subr.mxu0 0.0
    %1895 = vmatpush2.msra.mxu0 0.0
    %1896 = vmatprep.subr.mxu0 0.0
    %1897 = vmatpush2.msra.mxu0 0.0
    %1898 = vmatprep.subr.mxu0 0.0
    %1899 = vmatpush2.msra.mxu0 0.0
    %1900 = vmatprep.subr.mxu0 0.0
    %1901 = vmatpush2.msra.mxu0 0.0
    %1902 = vmatprep.subr.mxu0 0.0
    %1903 = vmatpush2.msra.mxu0 0.0
    %1904 = vmatprep.subr.mxu0 0.0
    %1905 = vmatpush2.msra.mxu0 0.0
    %1906 = vmatprep.subr.mxu0 0.0
    %1907 = vmatpush2.msra.mxu0 0.0
    %1908 = vmatprep.subr.mxu0 0.0
    %1909 = vmatpush2.msra.mxu0 0.0
    %1910 = vmatprep.subr.mxu0 0.0
    %1911 = vmatpush2.msra.mxu0 0.0
    %1912 = vmatprep.subr.mxu0 0.0
    %1913 = vmatpush2.msra.mxu0 0.0
    %1914 = vmatprep.mubr.f32.mxu0 0.0
    %1915 = vmatmul.mubr.f32.gmra.mxu0 %v1744
    %v1916 = vpop.f32.mrf.mxu0
    %v1917 = vadd.f32 %v1848, %v1916
    %v1918 = vpop.f32.mrf.mxu0
    %1919 = vmatprep.mubr.f32.mxu0 0.0
    %1920 = vmatmul.mubr.f32.gmra.mxu0 %v1749
    %v1921 = vpop.f32.mrf.mxu0
    %v1922 = vadd.f32 %v1848, %v1921
    %v1923 = vpop.f32.mrf.mxu0
    %1924 = vmatprep.mubr.f32.mxu0 0.0
    %1925 = vmatmul.mubr.f32.gmra.mxu0 %v1819
    %v1926 = vpop.f32.mrf.mxu0
    %v1927 = vadd.f32 %v1848, %v1926
    %v1928 = vpop.f32.mrf.mxu0
    %1929 = vmatprep.mubr.f32.mxu0 0.0
    %1930 = vmatmul.mubr.f32.gmra.mxu0 %v1824
    %v1931 = vpop.f32.mrf.mxu0
    %v1932 = vadd.f32 %v1848, %v1931
    %v1933 = vpop.f32.mrf.mxu0
    %1934 = vdwg.mxu0
    %v1935 = vadd.f32 %v73, %v1917
    %v1936 = vadd.f32 %v74, %v1922
    %v1937 = vadd.f32 %v75, %v1927
    %v1938 = vadd.f32 %v76, %v1932
    %1939 = vst [vmem:[%s9] sm:$0xff] %v1935
    %1940 = vst [vmem:[%s9 + $0x8] sm:$0xff] %v1936
    %1941 = vst [vmem:[%s9 + $0x10] sm:$0xff] %v1937
    %1942 = vst [vmem:[%s9 + $0x18] sm:$0xff] %v1938
    // Predicated region
    $region50: #{flowformer_layer.2} parent=1 // pred_check
      _
    $region51: #{flowformer_layer.2} parent=1 // pred_check_branch
      %1944 = sbr.rel (0) target = $region53
    $region52: #{flowformer_layer.2} parent=1 // pred_region
      _
    $region53: #{flowformer_layer.2} parent=1 // pred_fallthru
      _
    // Predicated region
    $region54: #{flowformer_layer.2} parent=1 // pred_check
      _
    $region55: #{flowformer_layer.2} parent=1 // pred_check_branch
      %1946 = sbr.rel (0) target = $region57
    $region56: #{flowformer_layer.2} parent=1 // pred_region
      _
    $region57: #{flowformer_layer.2} parent=1 // pred_fallthru
      _
    %1947 = vsyncpa [#allocation3], 1
    %1948 = vsyncpa [#allocation5], 1

</llo_original>
